<compile_context>
chip_gen: v6e
topology: v6e:2x2x1
jax: 0.10.0
libtpu: 0.0.40
codegen_flags: <defaults>
</compile_context>

<pallas_src>
import functools

import jax
import jax.numpy as jnp
from jax.experimental import pallas as pl
from jax.experimental.pallas import tpu as pltpu

_EPS = 1e-5      # PyTorch BatchNorm default eps
_NB = 2          # n_bars (module default; kernel specialised for it)
_NSTEPS = 16     # n_steps_per_bar implied by the three stride-(2,1) ConvTranspose
_NPITCH = 84     # n_pitches implied by the (1,7) and (1,12) ConvTranspose layers
_LANES = 128     # lane width of all packed slabs / kernel output


# ---------------------------------------------------------------------------
# Slab layouts (shared between pack_params and the kernel; all Python ints).
# ---------------------------------------------------------------------------
def _round_up(x, m):
    return -(-x // m) * m


def _make_layout(entries):
    layout = {}
    off = 0
    for name, rows, cols in entries:
        layout[name] = (off, rows, cols)
        off += _round_up(rows, 16)          # bf16 sublane-pair aligned offsets
    return layout, off


def _track_weight_layout(Z, H, C):
    Cq = C // 2
    return _make_layout([
        ("tw1_0", Z, H), ("tw1_1", Z, H), ("tw2", H, Z),        # melody TemporalNet
        ("lw_0", 4 * Z, C), ("lw_1", 4 * Z, C),                 # Linear (per s0 slot)
        ("cw1_0", C, C), ("cw1_1", C, C),                       # ConvT1 (per k)
        ("cw2_0", C, Cq), ("cw2_1", C, Cq),                     # ConvT2 (per k)
        ("cw3_0", Cq, Cq), ("cw3_1", Cq, Cq),                   # ConvT3 (per k)
        ("cw4", Cq, 7 * Cq),                                    # ConvT4, cols (k4, c)
        ("cw5", 7 * Cq, _LANES),                                # ConvT5 block-diag, padded
    ])


def _shared_weight_layout(Z, H):
    return _make_layout([("tw1_0", Z, H), ("tw1_1", Z, H), ("tw2", H, Z)])


def _track_bias_rows(Z, H, C):
    Cq = C // 2
    rows = {
        "tb1": (0, H), "tb2": (1, Z),
        "lb_0": (2, C), "lb_1": (3, C),
        "cb1": (4, C), "cb2": (5, Cq), "cb3": (6, Cq),
        "cb4": (7, 7 * Cq), "cb5": (8, _LANES),
    }
    return rows, 16


def _shared_bias_rows(Z, H):
    return {"tb1": (0, H), "tb2": (1, Z)}, 8


# ---------------------------------------------------------------------------
# Fused kernel: one grid step == one group of `tpg` tracks (both bars), all
# weights in two slabs per track, everything resident in VMEM.
# ---------------------------------------------------------------------------
def _muse_generator_kernel(chords_ref, style_ref, sw_ref, sb_ref,
                           melody_ref, groove_ref, tw_ref, tb_ref, out_ref,
                           *, Z, C, tpg, wlay, slay, tbrows, sbrows):
    bf16 = jnp.bfloat16
    f32 = jnp.float32

    def mm(a, w, b, relu=True, out_dtype=bf16):
        # bf16 MXU operands, f32 accumulation, f32 bias/ReLU epilogue.
        y = jnp.dot(a.astype(bf16), w, preferred_element_type=f32) + b
        if relu:
            y = jnp.maximum(y, 0.0)
        return y.astype(out_dtype)

    # Static slab views (all slices start at lane 0 and at 16-aligned rows).
    def sw(name):
        off, r, c = slay[name]
        return sw_ref[off:off + r, 0:c]

    def sb(name):
        row, c = sbrows[name]
        return sb_ref[row:row + 1, 0:c]

    def tw(ti, name):
        off, r, c = wlay[name]
        return tw_ref[ti, off:off + r, 0:c]

    def tb(ti, name):
        row, c = tbrows[name]
        return tb_ref[ti, row:row + 1, 0:c]

    chords = chords_ref[...]                                    # (B, Z) bf16
    style = style_ref[...]                                      # (B, Z) bf16

    # Chords TemporalNetwork (shared by every track in this grid step):
    # ConvT(Z->H, k=(2,1)) on a 1x1 map == one GEMM per bar, then pointwise
    # ConvT(H->Z, k=(1,1)) on the row-stacked (bar, b) activations.
    ct = jnp.concatenate([mm(chords, sw("tw1_0"), sb("tb1")),
                          mm(chords, sw("tw1_1"), sb("tb1"))], axis=0)   # (2B, H)
    chord_out = mm(ct, sw("tw2"), sb("tb2"))                             # (2B, Z)
    style2 = jnp.concatenate([style, style], axis=0)                     # (2B, Z)

    for ti in range(tpg):         # static unroll over the tracks of this group
        mel = melody_ref[ti]                                             # (B, Z)
        gro = groove_ref[ti]
        gro2 = jnp.concatenate([gro, gro], axis=0)                       # (2B, Z)

        mt = jnp.concatenate([mm(mel, tw(ti, "tw1_0"), tb(ti, "tb1")),
                              mm(mel, tw(ti, "tw1_1"), tb(ti, "tb1"))], axis=0)
        mel_out = mm(mt, tw(ti, "tw2"), tb(ti, "tb2"))                   # (2B, Z)

        # Linear + BN1d + ReLU.  z = cat([chord, style, melody, groove]) is
        # never built: four K=Z partial GEMMs per spatial slot s0, summed in
        # f32 (no 128-lane concat, no lane-crossing slices).
        halves = []
        for s in range(2):
            off, _, _ = wlay[f"lw_{s}"]
            acc = jnp.dot(chord_out, tw_ref[ti, off:off + Z, 0:C],
                          preferred_element_type=f32)
            acc = acc + jnp.dot(style2, tw_ref[ti, off + Z:off + 2 * Z, 0:C],
                                preferred_element_type=f32)
            acc = acc + jnp.dot(mel_out, tw_ref[ti, off + 2 * Z:off + 3 * Z, 0:C],
                                preferred_element_type=f32)
            acc = acc + jnp.dot(gro2, tw_ref[ti, off + 3 * Z:off + 4 * Z, 0:C],
                                preferred_element_type=f32)
            acc = acc + tb(ti, f"lb_{s}")
            halves.append(jnp.maximum(acc, 0.0).astype(bf16))
        a = jnp.concatenate(halves, axis=0)             # (4B, C) rows (s0, bar, b)

        # ConvT 1..3 (kernel == stride (2,1)): one GEMM per kernel position,
        # new spatial position folded into rows (sublane-only concat).
        a = jnp.concatenate([mm(a, tw(ti, "cw1_0"), tb(ti, "cb1")),
                             mm(a, tw(ti, "cw1_1"), tb(ti, "cb1"))], axis=0)   # (8B, C)
        a = jnp.concatenate([mm(a, tw(ti, "cw2_0"), tb(ti, "cb2")),
                             mm(a, tw(ti, "cw2_1"), tb(ti, "cb2"))], axis=0)   # (16B, C//2)
        a = jnp.concatenate([mm(a, tw(ti, "cw3_0"), tb(ti, "cb3")),
                             mm(a, tw(ti, "cw3_1"), tb(ti, "cb3"))], axis=0)   # (32B, C//2)

        # ConvT 4 (kernel (1,7)): the 7 width positions stay in lanes (k4, c).
        m4 = mm(a, tw(ti, "cw4"), tb(ti, "cb4"))                         # (32B, 7*C//2)
        # ConvT 5 (C//2 -> 1, kernel (1,12)), no BN / no ReLU: block-diagonal
        # weight over k4; output padded to 128 lanes for lane-dense stores.
        out_ref[ti] = mm(m4, tw(ti, "cw5"), tb(ti, "cb5"),
                         relu=False, out_dtype=f32)                      # (32B, 128)


# ---------------------------------------------------------------------------
# Parameter packing (plain JAX, runs once): fold eval-mode BN, split weights
# per kernel position / spatial slot, pack into per-track slabs.
# ---------------------------------------------------------------------------
def _fold_bn(bn):
    s = bn["gamma"] / jnp.sqrt(bn["var"] + _EPS)
    return s, bn["beta"] - bn["mean"] * s


def pack_params(params):
    chords_net = params["chords_net"]
    melody_nets = params["melody_nets"]
    bar_gens = params["bar_gens"]

    Z = int(chords_net["conv1_w"].shape[0])
    H = int(chords_net["conv1_w"].shape[1])
    C = int(bar_gens[0]["lin_w"].shape[0]) // 2
    Cq = C // 2
    T = len(bar_gens)
    assert len(melody_nets) == T
    assert H <= _LANES and C <= _LANES and Z <= _LANES and 7 * Cq <= _LANES
    assert int(bar_gens[0]["conv5_w"].shape[1]) == 1, "kernel assumes out_channels == 1"

    wlay, wrows = _track_weight_layout(Z, H, C)
    slay, srows = _shared_weight_layout(Z, H)
    tbrows, n_tb_rows = _track_bias_rows(Z, H, C)
    sbrows, n_sb_rows = _shared_bias_rows(Z, H)

    def temporal_blocks(net):
        s1, t1 = _fold_bn(net["bn1"])
        w1 = net["conv1_w"][:, :, :, 0]                          # (Z, H, 2)
        s2, t2 = _fold_bn(net["bn2"])
        wb = {"tw1_0": w1[:, :, 0] * s1[None, :],
              "tw1_1": w1[:, :, 1] * s1[None, :],
              "tw2": net["conv2_w"][:, :, 0, 0] * s2[None, :]}
        bb = {"tb1": net["conv1_b"] * s1 + t1,
              "tb2": net["conv2_b"] * s2 + t2}
        return wb, bb

    def bar_blocks(bg):
        wb, bb = {}, {}
        s0, t0 = _fold_bn(bg["bn0"])
        # Linear feature f maps to (channel c, spatial s0) with f = 2*c + s0.
        wl = (bg["lin_w"] * s0[:, None]).reshape(C, 2, 4 * Z)
        bl = (bg["lin_b"] * s0 + t0).reshape(C, 2)
        for s in range(2):
            wb[f"lw_{s}"] = wl[:, s, :].T                        # (4Z, C)
            bb[f"lb_{s}"] = bl[:, s]                             # (C,)
        for li in range(1, 4):                                   # ConvT 1..3 (+BN+ReLU)
            w, b = bg[f"conv{li}_w"], bg[f"conv{li}_b"]
            sc, sh = _fold_bn(bg[f"bn{li}"])
            for k in range(2):
                wb[f"cw{li}_{k}"] = w[:, :, k, 0] * sc[None, :]
            bb[f"cb{li}"] = b * sc + sh
        s4, t4 = _fold_bn(bg["bn4"])
        w4 = bg["conv4_w"][:, :, 0, :] * s4[None, :, None]       # (Cq, Cq, 7)
        wb["cw4"] = w4.transpose(0, 2, 1).reshape(Cq, 7 * Cq)    # cols (k4, c)
        bb["cb4"] = jnp.tile(bg["conv4_b"] * s4 + t4, 7)
        # ConvT5: block-diagonal over the 7 width positions; pad to 128 lanes.
        w5 = bg["conv5_w"][:, 0, 0, :]                           # (Cq, 12)
        blk = (jnp.eye(7, dtype=w5.dtype)[:, None, :, None] *
               w5[None, :, None, :]).reshape(7 * Cq, 7 * 12)     # (7Cq, 84)
        wb["cw5"] = jnp.pad(blk, ((0, 0), (0, _LANES - 7 * 12)))
        bb["cb5"] = jnp.zeros((_LANES,), jnp.float32).at[:7 * 12].set(bg["conv5_b"][0])
        return wb, bb

    def build_wslab(blocks, layout, total_rows):
        parts = []
        for name, (off, r, c) in layout.items():
            blk = jnp.asarray(blocks[name], jnp.float32)
            assert blk.shape == (r, c), (name, blk.shape, (r, c))
            parts.append(jnp.pad(blk, ((0, _round_up(r, 16) - r), (0, _LANES - c))))
        slab = jnp.concatenate(parts, axis=0)
        assert slab.shape == (total_rows, _LANES), slab.shape
        return slab.astype(jnp.bfloat16)

    def build_bslab(bdict, row_map, nrows):
        slab = jnp.zeros((nrows, _LANES), jnp.float32)
        for name, (row, width) in row_map.items():
            v = jnp.asarray(bdict[name], jnp.float32)
            assert v.shape == (width,), (name, v.shape, width)
            slab = slab.at[row, :width].set(v)
        return slab

    swb, sbb = temporal_blocks(chords_net)
    sw_slab = build_wslab(swb, slay, srows)
    sb_slab = build_bslab(sbb, sbrows, n_sb_rows)

    tw_slabs, tb_slabs = [], []
    for t in range(T):
        mwb, mbb = temporal_blocks(melody_nets[t])
        bwb, bbb = bar_blocks(bar_gens[t])
        tw_slabs.append(build_wslab({**mwb, **bwb}, wlay, wrows))
        tb_slabs.append(build_bslab({**mbb, **bbb}, tbrows, n_tb_rows))

    tpg = 2 if T % 2 == 0 else 1          # tracks per grid step
    meta = (Z, H, C, T, tpg)
    packed = {"sw": sw_slab, "sb": sb_slab,
              "tw": jnp.stack(tw_slabs), "tb": jnp.stack(tb_slabs)}
    return meta, packed


# ---------------------------------------------------------------------------
# Forward
# ---------------------------------------------------------------------------
def muse_generator_forward(meta, packed, chords, style, melody, groove):
    """chords/style: (B, Z); melody/groove: (B, T, Z) -> (B, T, n_bars, 16, 84)."""
    Z, H, C, T, tpg = meta
    B = chords.shape[0]
    n_groups = T // tpg
    out_rows = _NSTEPS * _NB * B                      # == 32 * B

    wlay, _ = _track_weight_layout(Z, H, C)
    slay, _ = _shared_weight_layout(Z, H)
    tbrows, _ = _track_bias_rows(Z, H, C)
    sbrows, _ = _shared_bias_rows(Z, H)

    bf = jnp.bfloat16
    chords = chords.astype(bf)
    style = style.astype(bf)
    melody_t = jnp.transpose(melody, (1, 0, 2)).astype(bf)     # (T, B, Z)
    groove_t = jnp.transpose(groove, (1, 0, 2)).astype(bf)     # (T, B, Z)

    def shared_spec(shape):
        zeros = (0,) * len(shape)
        return pl.BlockSpec(tuple(shape), lambda g: zeros)

    def group_spec(shape):
        rest = (0,) * (len(shape) - 1)
        return pl.BlockSpec((tpg,) + tuple(shape[1:]), lambda g: (g,) + rest)

    kernel = functools.partial(
        _muse_generator_kernel, Z=Z, C=C, tpg=tpg,
        wlay=wlay, slay=slay, tbrows=tbrows, sbrows=sbrows)

    raw = pl.pallas_call(
        kernel,
        out_shape=jax.ShapeDtypeStruct((T, out_rows, _LANES), jnp.float32),
        grid=(n_groups,),
        in_specs=[shared_spec(chords.shape), shared_spec(style.shape),
                  shared_spec(packed["sw"].shape), shared_spec(packed["sb"].shape),
                  group_spec(melody_t.shape), group_spec(groove_t.shape),
                  group_spec(packed["tw"].shape), group_spec(packed["tb"].shape)],
        out_specs=group_spec((T, out_rows, _LANES)),
        compiler_params=pltpu.CompilerParams(dimension_semantics=("parallel",)),
    )(chords, style, packed["sw"], packed["sb"],
      melody_t, groove_t, packed["tw"], packed["tb"])

    # Kernel rows are (k3, k2, k1, s0, bar, b) with step h = 8*s0+4*k1+2*k2+k3;
    # lanes are 12*k4 + k5 padded to 128.  One tiny XLA slice + transpose
    # restores (B, T, n_bars, n_steps, n_pitches).
    out = raw[..., :_NPITCH].reshape(T, 2, 2, 2, 2, _NB, B, _NPITCH)
    out = out.transpose(6, 0, 5, 4, 3, 2, 1, 7)
    return out.reshape(B, T, _NB, _NSTEPS, _NPITCH)


# ---------------------------------------------------------------------------
# Parameters in the original PyTorch layouts:
#   ConvTranspose2d weight: (in_ch, out_ch, kH, kW); Linear weight: (out, in).
# ---------------------------------------------------------------------------
def init_params(key, *, z_dim=32, hid_channels=64, hid_features=64,
                n_tracks=4, n_bars=2):
    assert n_bars == _NB, "kernel is specialised for the module default n_bars=2"
    assert hid_features == 2 * (hid_channels // 2), \
        "BarGenerator's Reshape requires hid_features == 2 * (hid_channels // 2)"
    Z, H = z_dim, hid_channels
    C, F = hid_channels // 2, hid_features

    def nrm(k, shape, scale=0.05):
        return scale * jax.random.normal(k, shape, jnp.float32)

    def bn(k, n):
        k1, k2, k3, k4 = jax.random.split(k, 4)
        return {"gamma": 1.0 + 0.1 * jax.random.normal(k1, (n,), jnp.float32),
                "beta": 0.1 * jax.random.normal(k2, (n,), jnp.float32),
                "mean": 0.1 * jax.random.normal(k3, (n,), jnp.float32),
                "var": jax.random.uniform(k4, (n,), jnp.float32,
                                          minval=0.5, maxval=1.5)}

    def temporal_net(k):
        ks = jax.random.split(k, 6)
        return {"conv1_w": nrm(ks[0], (Z, H, 2, 1)),
                "conv1_b": nrm(ks[1], (H,)),
                "bn1": bn(ks[2], H),
                "conv2_w": nrm(ks[3], (H, Z, n_bars - 1, 1)),
                "conv2_b": nrm(ks[4], (Z,)),
                "bn2": bn(ks[5], Z)}

    def bar_gen(k):
        ks = jax.random.split(k, 17)
        p = {"lin_w": nrm(ks[0], (F, 4 * Z)),
             "lin_b": nrm(ks[1], (F,)),
             "bn0": bn(ks[2], F)}
        convs = [(C, C, (2, 1)), (C, C // 2, (2, 1)), (C // 2, C // 2, (2, 1)),
                 (C // 2, C // 2, (1, 7)), (C // 2, 1, (1, 12))]
        j = 3
        for i, (ci, co, kk) in enumerate(convs, start=1):
            p[f"conv{i}_w"] = nrm(ks[j], (ci, co) + kk); j += 1
            p[f"conv{i}_b"] = nrm(ks[j], (co,)); j += 1
            if i < 5:
                p[f"bn{i}"] = bn(ks[j], co); j += 1
        return p

    keys = jax.random.split(key, 1 + 2 * n_tracks)
    return {
        "chords_net": temporal_net(keys[0]),
        "melody_nets": [temporal_net(keys[1 + i]) for i in range(n_tracks)],
        "bar_gens": [bar_gen(keys[1 + n_tracks + i]) for i in range(n_tracks)],
    }


# ---------------------------------------------------------------------------
if __name__ == "__main__":
    # Small, shape-consistent config (n_steps_per_bar=16 and n_pitches=84 are
    # fixed by the ConvTranspose kernel sizes; channel widths are shrunk).
    z_dim, hid_channels, hid_features = 32, 64, 64
    n_tracks, n_bars, batch = 4, 2, 2

    key = jax.random.PRNGKey(0)
    kp, kc, ks, km, kg = jax.random.split(key, 5)
    params = init_params(kp, z_dim=z_dim, hid_channels=hid_channels,
                         hid_features=hid_features, n_tracks=n_tracks,
                         n_bars=n_bars)
    chords = jax.random.normal(kc, (batch, z_dim), jnp.float32)
    style = jax.random.normal(ks, (batch, z_dim), jnp.float32)
    melody = jax.random.normal(km, (batch, n_tracks, z_dim), jnp.float32)
    groove = jax.random.normal(kg, (batch, n_tracks, z_dim), jnp.float32)

    meta, packed = pack_params(params)        # one-time fold / split / slab-pack
    fwd = jax.jit(functools.partial(muse_generator_forward, meta))
    out = fwd(packed, chords, style, melody, groove)
    jax.block_until_ready(out)

    assert out.shape == (batch, n_tracks, n_bars, _NSTEPS, _NPITCH), out.shape
    assert out.dtype == jnp.float32
    assert bool(jnp.all(jnp.isfinite(out)))
    print("KERNEL_OK")
</pallas_src>

<mosaic_0001>
module attributes {stable_mosaic.version = 11 : i64} {
  func.func @_muse_generator_kernel(%arg0: i32, %arg1: memref<2x32xbf16, #tpu.memory_space<vmem>>, %arg2: memref<2x32xbf16, #tpu.memory_space<vmem>>, %arg3: memref<128x128xbf16, #tpu.memory_space<vmem>>, %arg4: memref<8x128xf32, #tpu.memory_space<vmem>>, %arg5: memref<2x2x32xbf16, #tpu.memory_space<vmem>>, %arg6: memref<2x2x32xbf16, #tpu.memory_space<vmem>>, %arg7: memref<2x672x128xbf16, #tpu.memory_space<vmem>>, %arg8: memref<2x16x128xf32, #tpu.memory_space<vmem>>, %arg9: memref<2x64x128xf32, #tpu.memory_space<vmem>>) attributes {dimension_semantics = [#tpu.dimension_semantics<parallel>], iteration_bounds = array<i64: 2>, scalar_prefetch = 0 : i64, scratch_operands = 0 : i64, tpu.core_type = #tpu.core_type<tc>, window_params = [{pipeline_mode = #tpu.pipeline_mode<synchronous>, transform_indices = @transform_0, window_bounds = array<i64: 2, 32>}, {pipeline_mode = #tpu.pipeline_mode<synchronous>, transform_indices = @transform_1, window_bounds = array<i64: 2, 32>}, {pipeline_mode = #tpu.pipeline_mode<synchronous>, transform_indices = @transform_2, window_bounds = array<i64: 128, 128>}, {pipeline_mode = #tpu.pipeline_mode<synchronous>, transform_indices = @transform_3, window_bounds = array<i64: 8, 128>}, {transform_indices = @transform_4, window_bounds = array<i64: 2, 2, 32>}, {transform_indices = @transform_5, window_bounds = array<i64: 2, 2, 32>}, {transform_indices = @transform_6, window_bounds = array<i64: 2, 672, 128>}, {transform_indices = @transform_7, window_bounds = array<i64: 2, 16, 128>}, {transform_indices = @transform_8, window_bounds = array<i64: 2, 64, 128>}]} {
    %c0 = arith.constant 0 : index
    %c0_0 = arith.constant 0 : index
    %0 = vector.load %arg1[%c0, %c0_0] : memref<2x32xbf16, #tpu.memory_space<vmem>>, vector<2x32xbf16>
    %c0_1 = arith.constant 0 : index
    %c0_2 = arith.constant 0 : index
    %1 = vector.load %arg2[%c0_1, %c0_2] : memref<2x32xbf16, #tpu.memory_space<vmem>>, vector<2x32xbf16>
    %c0_3 = arith.constant 0 : index
    %c0_4 = arith.constant 0 : index
    %2 = vector.load %arg3[%c0_3, %c0_4] : memref<128x128xbf16, #tpu.memory_space<vmem>>, vector<32x64xbf16>
    %c0_5 = arith.constant 0 : index
    %c0_6 = arith.constant 0 : index
    %3 = vector.load %arg4[%c0_5, %c0_6] : memref<8x128xf32, #tpu.memory_space<vmem>>, vector<1x64xf32>
    %cst = arith.constant dense<0.000000e+00> : vector<2x64xf32>
    %4 = tpu.matmul %0, %2, %cst {dimension_numbers = #tpu.dot_dimension_numbers<[1], [0], [0], [1], [0, 0, 1, 1], [], []>} : vector<2x32xbf16>, vector<32x64xbf16>, vector<2x64xf32> -> vector<2x64xf32>
    %5 = vector.broadcast %3 : vector<1x64xf32> to vector<2x64xf32>
    %6 = arith.addf %4, %5 : vector<2x64xf32>
    %cst_7 = arith.constant 0.000000e+00 : f32
    %7 = vector.broadcast %cst_7 : f32 to vector<2x64xf32>
    %8 = arith.maximumf %6, %7 : vector<2x64xf32>
    %9 = arith.truncf %8 : vector<2x64xf32> to vector<2x64xbf16>
    %c32 = arith.constant 32 : index
    %c0_8 = arith.constant 0 : index
    %10 = vector.load %arg3[%c32, %c0_8] : memref<128x128xbf16, #tpu.memory_space<vmem>>, vector<32x64xbf16>
    %c0_9 = arith.constant 0 : index
    %c0_10 = arith.constant 0 : index
    %11 = vector.load %arg4[%c0_9, %c0_10] : memref<8x128xf32, #tpu.memory_space<vmem>>, vector<1x64xf32>
    %cst_11 = arith.constant dense<0.000000e+00> : vector<2x64xf32>
    %12 = tpu.matmul %0, %10, %cst_11 {dimension_numbers = #tpu.dot_dimension_numbers<[1], [0], [0], [1], [0, 0, 1, 1], [], []>} : vector<2x32xbf16>, vector<32x64xbf16>, vector<2x64xf32> -> vector<2x64xf32>
    %13 = vector.broadcast %11 : vector<1x64xf32> to vector<2x64xf32>
    %14 = arith.addf %12, %13 : vector<2x64xf32>
    %cst_12 = arith.constant 0.000000e+00 : f32
    %15 = vector.broadcast %cst_12 : f32 to vector<2x64xf32>
    %16 = arith.maximumf %14, %15 : vector<2x64xf32>
    %17 = arith.truncf %16 : vector<2x64xf32> to vector<2x64xbf16>
    %18 = tpu.concatenate %9, %17 in 0 : vector<2x64xbf16>, vector<2x64xbf16> -> vector<4x64xbf16>
    %c64 = arith.constant 64 : index
    %c0_13 = arith.constant 0 : index
    %19 = vector.load %arg3[%c64, %c0_13] : memref<128x128xbf16, #tpu.memory_space<vmem>>, vector<64x32xbf16>
    %c1 = arith.constant 1 : index
    %c0_14 = arith.constant 0 : index
    %20 = vector.load %arg4[%c1, %c0_14] : memref<8x128xf32, #tpu.memory_space<vmem>>, vector<1x32xf32>
    %cst_15 = arith.constant dense<0.000000e+00> : vector<4x32xf32>
    %21 = tpu.matmul %18, %19, %cst_15 {dimension_numbers = #tpu.dot_dimension_numbers<[1], [0], [0], [1], [0, 0, 1, 1], [], []>} : vector<4x64xbf16>, vector<64x32xbf16>, vector<4x32xf32> -> vector<4x32xf32>
    %22 = vector.broadcast %20 : vector<1x32xf32> to vector<4x32xf32>
    %23 = arith.addf %21, %22 : vector<4x32xf32>
    %cst_16 = arith.constant 0.000000e+00 : f32
    %24 = vector.broadcast %cst_16 : f32 to vector<4x32xf32>
    %25 = arith.maximumf %23, %24 : vector<4x32xf32>
    %26 = arith.truncf %25 : vector<4x32xf32> to vector<4x32xbf16>
    %27 = tpu.concatenate %1, %1 in 0 : vector<2x32xbf16>, vector<2x32xbf16> -> vector<4x32xbf16>
    %c0_17 = arith.constant 0 : index
    %c0_18 = arith.constant 0 : index
    %c0_19 = arith.constant 0 : index
    %28 = vector.load %arg5[%c0_17, %c0_18, %c0_19] : memref<2x2x32xbf16, #tpu.memory_space<vmem>>, vector<1x2x32xbf16>
    %29 = vector.shape_cast %28 : vector<1x2x32xbf16> to vector<2x32xbf16>
    %c0_20 = arith.constant 0 : index
    %c0_21 = arith.constant 0 : index
    %c0_22 = arith.constant 0 : index
    %30 = vector.load %arg6[%c0_20, %c0_21, %c0_22] : memref<2x2x32xbf16, #tpu.memory_space<vmem>>, vector<1x2x32xbf16>
    %31 = vector.shape_cast %30 : vector<1x2x32xbf16> to vector<2x32xbf16>
    %32 = tpu.concatenate %31, %31 in 0 : vector<2x32xbf16>, vector<2x32xbf16> -> vector<4x32xbf16>
    %c0_23 = arith.constant 0 : index
    %c0_24 = arith.constant 0 : index
    %c0_25 = arith.constant 0 : index
    %33 = vector.load %arg7[%c0_23, %c0_24, %c0_25] : memref<2x672x128xbf16, #tpu.memory_space<vmem>>, vector<1x32x64xbf16>
    %34 = vector.shape_cast %33 : vector<1x32x64xbf16> to vector<32x64xbf16>
    %c0_26 = arith.constant 0 : index
    %c0_27 = arith.constant 0 : index
    %c0_28 = arith.constant 0 : index
    %35 = vector.load %arg8[%c0_26, %c0_27, %c0_28] : memref<2x16x128xf32, #tpu.memory_space<vmem>>, vector<1x1x64xf32>
    %36 = vector.shape_cast %35 : vector<1x1x64xf32> to vector<1x64xf32>
    %cst_29 = arith.constant dense<0.000000e+00> : vector<2x64xf32>
    %37 = tpu.matmul %29, %34, %cst_29 {dimension_numbers = #tpu.dot_dimension_numbers<[1], [0], [0], [1], [0, 0, 1, 1], [], []>} : vector<2x32xbf16>, vector<32x64xbf16>, vector<2x64xf32> -> vector<2x64xf32>
    %38 = vector.broadcast %36 : vector<1x64xf32> to vector<2x64xf32>
    %39 = arith.addf %37, %38 : vector<2x64xf32>
    %cst_30 = arith.constant 0.000000e+00 : f32
    %40 = vector.broadcast %cst_30 : f32 to vector<2x64xf32>
    %41 = arith.maximumf %39, %40 : vector<2x64xf32>
    %42 = arith.truncf %41 : vector<2x64xf32> to vector<2x64xbf16>
    %c0_31 = arith.constant 0 : index
    %c32_32 = arith.constant 32 : index
    %c0_33 = arith.constant 0 : index
    %43 = vector.load %arg7[%c0_31, %c32_32, %c0_33] : memref<2x672x128xbf16, #tpu.memory_space<vmem>>, vector<1x32x64xbf16>
    %44 = vector.shape_cast %43 : vector<1x32x64xbf16> to vector<32x64xbf16>
    %c0_34 = arith.constant 0 : index
    %c0_35 = arith.constant 0 : index
    %c0_36 = arith.constant 0 : index
    %45 = vector.load %arg8[%c0_34, %c0_35, %c0_36] : memref<2x16x128xf32, #tpu.memory_space<vmem>>, vector<1x1x64xf32>
    %46 = vector.shape_cast %45 : vector<1x1x64xf32> to vector<1x64xf32>
    %cst_37 = arith.constant dense<0.000000e+00> : vector<2x64xf32>
    %47 = tpu.matmul %29, %44, %cst_37 {dimension_numbers = #tpu.dot_dimension_numbers<[1], [0], [0], [1], [0, 0, 1, 1], [], []>} : vector<2x32xbf16>, vector<32x64xbf16>, vector<2x64xf32> -> vector<2x64xf32>
    %48 = vector.broadcast %46 : vector<1x64xf32> to vector<2x64xf32>
    %49 = arith.addf %47, %48 : vector<2x64xf32>
    %cst_38 = arith.constant 0.000000e+00 : f32
    %50 = vector.broadcast %cst_38 : f32 to vector<2x64xf32>
    %51 = arith.maximumf %49, %50 : vector<2x64xf32>
    %52 = arith.truncf %51 : vector<2x64xf32> to vector<2x64xbf16>
    %53 = tpu.concatenate %42, %52 in 0 : vector<2x64xbf16>, vector<2x64xbf16> -> vector<4x64xbf16>
    %c0_39 = arith.constant 0 : index
    %c64_40 = arith.constant 64 : index
    %c0_41 = arith.constant 0 : index
    %54 = vector.load %arg7[%c0_39, %c64_40, %c0_41] : memref<2x672x128xbf16, #tpu.memory_space<vmem>>, vector<1x64x32xbf16>
    %55 = vector.shape_cast %54 : vector<1x64x32xbf16> to vector<64x32xbf16>
    %c0_42 = arith.constant 0 : index
    %c1_43 = arith.constant 1 : index
    %c0_44 = arith.constant 0 : index
    %56 = vector.load %arg8[%c0_42, %c1_43, %c0_44] : memref<2x16x128xf32, #tpu.memory_space<vmem>>, vector<1x1x32xf32>
    %57 = vector.shape_cast %56 : vector<1x1x32xf32> to vector<1x32xf32>
    %cst_45 = arith.constant dense<0.000000e+00> : vector<4x32xf32>
    %58 = tpu.matmul %53, %55, %cst_45 {dimension_numbers = #tpu.dot_dimension_numbers<[1], [0], [0], [1], [0, 0, 1, 1], [], []>} : vector<4x64xbf16>, vector<64x32xbf16>, vector<4x32xf32> -> vector<4x32xf32>
    %59 = vector.broadcast %57 : vector<1x32xf32> to vector<4x32xf32>
    %60 = arith.addf %58, %59 : vector<4x32xf32>
    %cst_46 = arith.constant 0.000000e+00 : f32
    %61 = vector.broadcast %cst_46 : f32 to vector<4x32xf32>
    %62 = arith.maximumf %60, %61 : vector<4x32xf32>
    %63 = arith.truncf %62 : vector<4x32xf32> to vector<4x32xbf16>
    %c0_47 = arith.constant 0 : index
    %c128 = arith.constant 128 : index
    %c0_48 = arith.constant 0 : index
    %64 = vector.load %arg7[%c0_47, %c128, %c0_48] : memref<2x672x128xbf16, #tpu.memory_space<vmem>>, vector<1x32x32xbf16>
    %65 = vector.shape_cast %64 : vector<1x32x32xbf16> to vector<32x32xbf16>
    %cst_49 = arith.constant dense<0.000000e+00> : vector<4x32xf32>
    %66 = tpu.matmul %26, %65, %cst_49 {dimension_numbers = #tpu.dot_dimension_numbers<[1], [0], [0], [1], [0, 0, 1, 1], [], []>} : vector<4x32xbf16>, vector<32x32xbf16>, vector<4x32xf32> -> vector<4x32xf32>
    %c0_50 = arith.constant 0 : index
    %c160 = arith.constant 160 : index
    %c0_51 = arith.constant 0 : index
    %67 = vector.load %arg7[%c0_50, %c160, %c0_51] : memref<2x672x128xbf16, #tpu.memory_space<vmem>>, vector<1x32x32xbf16>
    %68 = vector.shape_cast %67 : vector<1x32x32xbf16> to vector<32x32xbf16>
    %cst_52 = arith.constant dense<0.000000e+00> : vector<4x32xf32>
    %69 = tpu.matmul %27, %68, %cst_52 {dimension_numbers = #tpu.dot_dimension_numbers<[1], [0], [0], [1], [0, 0, 1, 1], [], []>} : vector<4x32xbf16>, vector<32x32xbf16>, vector<4x32xf32> -> vector<4x32xf32>
    %70 = arith.addf %66, %69 : vector<4x32xf32>
    %c0_53 = arith.constant 0 : index
    %c192 = arith.constant 192 : index
    %c0_54 = arith.constant 0 : index
    %71 = vector.load %arg7[%c0_53, %c192, %c0_54] : memref<2x672x128xbf16, #tpu.memory_space<vmem>>, vector<1x32x32xbf16>
    %72 = vector.shape_cast %71 : vector<1x32x32xbf16> to vector<32x32xbf16>
    %cst_55 = arith.constant dense<0.000000e+00> : vector<4x32xf32>
    %73 = tpu.matmul %63, %72, %cst_55 {dimension_numbers = #tpu.dot_dimension_numbers<[1], [0], [0], [1], [0, 0, 1, 1], [], []>} : vector<4x32xbf16>, vector<32x32xbf16>, vector<4x32xf32> -> vector<4x32xf32>
    %74 = arith.addf %70, %73 : vector<4x32xf32>
    %c0_56 = arith.constant 0 : index
    %c224 = arith.constant 224 : index
    %c0_57 = arith.constant 0 : index
    %75 = vector.load %arg7[%c0_56, %c224, %c0_57] : memref<2x672x128xbf16, #tpu.memory_space<vmem>>, vector<1x32x32xbf16>
    %76 = vector.shape_cast %75 : vector<1x32x32xbf16> to vector<32x32xbf16>
    %cst_58 = arith.constant dense<0.000000e+00> : vector<4x32xf32>
    %77 = tpu.matmul %32, %76, %cst_58 {dimension_numbers = #tpu.dot_dimension_numbers<[1], [0], [0], [1], [0, 0, 1, 1], [], []>} : vector<4x32xbf16>, vector<32x32xbf16>, vector<4x32xf32> -> vector<4x32xf32>
    %78 = arith.addf %74, %77 : vector<4x32xf32>
    %c0_59 = arith.constant 0 : index
    %c2 = arith.constant 2 : index
    %c0_60 = arith.constant 0 : index
    %79 = vector.load %arg8[%c0_59, %c2, %c0_60] : memref<2x16x128xf32, #tpu.memory_space<vmem>>, vector<1x1x32xf32>
    %80 = vector.shape_cast %79 : vector<1x1x32xf32> to vector<1x32xf32>
    %81 = vector.broadcast %80 : vector<1x32xf32> to vector<4x32xf32>
    %82 = arith.addf %78, %81 : vector<4x32xf32>
    %cst_61 = arith.constant 0.000000e+00 : f32
    %83 = vector.broadcast %cst_61 : f32 to vector<4x32xf32>
    %84 = arith.maximumf %82, %83 : vector<4x32xf32>
    %85 = arith.truncf %84 : vector<4x32xf32> to vector<4x32xbf16>
    %c0_62 = arith.constant 0 : index
    %c256 = arith.constant 256 : index
    %c0_63 = arith.constant 0 : index
    %86 = vector.load %arg7[%c0_62, %c256, %c0_63] : memref<2x672x128xbf16, #tpu.memory_space<vmem>>, vector<1x32x32xbf16>
    %87 = vector.shape_cast %86 : vector<1x32x32xbf16> to vector<32x32xbf16>
    %cst_64 = arith.constant dense<0.000000e+00> : vector<4x32xf32>
    %88 = tpu.matmul %26, %87, %cst_64 {dimension_numbers = #tpu.dot_dimension_numbers<[1], [0], [0], [1], [0, 0, 1, 1], [], []>} : vector<4x32xbf16>, vector<32x32xbf16>, vector<4x32xf32> -> vector<4x32xf32>
    %c0_65 = arith.constant 0 : index
    %c288 = arith.constant 288 : index
    %c0_66 = arith.constant 0 : index
    %89 = vector.load %arg7[%c0_65, %c288, %c0_66] : memref<2x672x128xbf16, #tpu.memory_space<vmem>>, vector<1x32x32xbf16>
    %90 = vector.shape_cast %89 : vector<1x32x32xbf16> to vector<32x32xbf16>
    %cst_67 = arith.constant dense<0.000000e+00> : vector<4x32xf32>
    %91 = tpu.matmul %27, %90, %cst_67 {dimension_numbers = #tpu.dot_dimension_numbers<[1], [0], [0], [1], [0, 0, 1, 1], [], []>} : vector<4x32xbf16>, vector<32x32xbf16>, vector<4x32xf32> -> vector<4x32xf32>
    %92 = arith.addf %88, %91 : vector<4x32xf32>
    %c0_68 = arith.constant 0 : index
    %c320 = arith.constant 320 : index
    %c0_69 = arith.constant 0 : index
    %93 = vector.load %arg7[%c0_68, %c320, %c0_69] : memref<2x672x128xbf16, #tpu.memory_space<vmem>>, vector<1x32x32xbf16>
    %94 = vector.shape_cast %93 : vector<1x32x32xbf16> to vector<32x32xbf16>
    %cst_70 = arith.constant dense<0.000000e+00> : vector<4x32xf32>
    %95 = tpu.matmul %63, %94, %cst_70 {dimension_numbers = #tpu.dot_dimension_numbers<[1], [0], [0], [1], [0, 0, 1, 1], [], []>} : vector<4x32xbf16>, vector<32x32xbf16>, vector<4x32xf32> -> vector<4x32xf32>
    %96 = arith.addf %92, %95 : vector<4x32xf32>
    %c0_71 = arith.constant 0 : index
    %c352 = arith.constant 352 : index
    %c0_72 = arith.constant 0 : index
    %97 = vector.load %arg7[%c0_71, %c352, %c0_72] : memref<2x672x128xbf16, #tpu.memory_space<vmem>>, vector<1x32x32xbf16>
    %98 = vector.shape_cast %97 : vector<1x32x32xbf16> to vector<32x32xbf16>
    %cst_73 = arith.constant dense<0.000000e+00> : vector<4x32xf32>
    %99 = tpu.matmul %32, %98, %cst_73 {dimension_numbers = #tpu.dot_dimension_numbers<[1], [0], [0], [1], [0, 0, 1, 1], [], []>} : vector<4x32xbf16>, vector<32x32xbf16>, vector<4x32xf32> -> vector<4x32xf32>
    %100 = arith.addf %96, %99 : vector<4x32xf32>
    %c0_74 = arith.constant 0 : index
    %c3 = arith.constant 3 : index
    %c0_75 = arith.constant 0 : index
    %101 = vector.load %arg8[%c0_74, %c3, %c0_75] : memref<2x16x128xf32, #tpu.memory_space<vmem>>, vector<1x1x32xf32>
    %102 = vector.shape_cast %101 : vector<1x1x32xf32> to vector<1x32xf32>
    %103 = vector.broadcast %102 : vector<1x32xf32> to vector<4x32xf32>
    %104 = arith.addf %100, %103 : vector<4x32xf32>
    %cst_76 = arith.constant 0.000000e+00 : f32
    %105 = vector.broadcast %cst_76 : f32 to vector<4x32xf32>
    %106 = arith.maximumf %104, %105 : vector<4x32xf32>
    %107 = arith.truncf %106 : vector<4x32xf32> to vector<4x32xbf16>
    %108 = tpu.concatenate %85, %107 in 0 : vector<4x32xbf16>, vector<4x32xbf16> -> vector<8x32xbf16>
    %c0_77 = arith.constant 0 : index
    %c384 = arith.constant 384 : index
    %c0_78 = arith.constant 0 : index
    %109 = vector.load %arg7[%c0_77, %c384, %c0_78] : memref<2x672x128xbf16, #tpu.memory_space<vmem>>, vector<1x32x32xbf16>
    %110 = vector.shape_cast %109 : vector<1x32x32xbf16> to vector<32x32xbf16>
    %c0_79 = arith.constant 0 : index
    %c4 = arith.constant 4 : index
    %c0_80 = arith.constant 0 : index
    %111 = vector.load %arg8[%c0_79, %c4, %c0_80] : memref<2x16x128xf32, #tpu.memory_space<vmem>>, vector<1x1x32xf32>
    %112 = vector.shape_cast %111 : vector<1x1x32xf32> to vector<1x32xf32>
    %cst_81 = arith.constant dense<0.000000e+00> : vector<8x32xf32>
    %113 = tpu.matmul %108, %110, %cst_81 {dimension_numbers = #tpu.dot_dimension_numbers<[1], [0], [0], [1], [0, 0, 1, 1], [], []>} : vector<8x32xbf16>, vector<32x32xbf16>, vector<8x32xf32> -> vector<8x32xf32>
    %114 = vector.broadcast %112 : vector<1x32xf32> to vector<8x32xf32>
    %115 = arith.addf %113, %114 : vector<8x32xf32>
    %cst_82 = arith.constant 0.000000e+00 : f32
    %116 = vector.broadcast %cst_82 : f32 to vector<8x32xf32>
    %117 = arith.maximumf %115, %116 : vector<8x32xf32>
    %118 = arith.truncf %117 : vector<8x32xf32> to vector<8x32xbf16>
    %c0_83 = arith.constant 0 : index
    %c416 = arith.constant 416 : index
    %c0_84 = arith.constant 0 : index
    %119 = vector.load %arg7[%c0_83, %c416, %c0_84] : memref<2x672x128xbf16, #tpu.memory_space<vmem>>, vector<1x32x32xbf16>
    %120 = vector.shape_cast %119 : vector<1x32x32xbf16> to vector<32x32xbf16>
    %c0_85 = arith.constant 0 : index
    %c4_86 = arith.constant 4 : index
    %c0_87 = arith.constant 0 : index
    %121 = vector.load %arg8[%c0_85, %c4_86, %c0_87] : memref<2x16x128xf32, #tpu.memory_space<vmem>>, vector<1x1x32xf32>
    %122 = vector.shape_cast %121 : vector<1x1x32xf32> to vector<1x32xf32>
    %cst_88 = arith.constant dense<0.000000e+00> : vector<8x32xf32>
    %123 = tpu.matmul %108, %120, %cst_88 {dimension_numbers = #tpu.dot_dimension_numbers<[1], [0], [0], [1], [0, 0, 1, 1], [], []>} : vector<8x32xbf16>, vector<32x32xbf16>, vector<8x32xf32> -> vector<8x32xf32>
    %124 = vector.broadcast %122 : vector<1x32xf32> to vector<8x32xf32>
    %125 = arith.addf %123, %124 : vector<8x32xf32>
    %cst_89 = arith.constant 0.000000e+00 : f32
    %126 = vector.broadcast %cst_89 : f32 to vector<8x32xf32>
    %127 = arith.maximumf %125, %126 : vector<8x32xf32>
    %128 = arith.truncf %127 : vector<8x32xf32> to vector<8x32xbf16>
    %129 = tpu.concatenate %118, %128 in 0 : vector<8x32xbf16>, vector<8x32xbf16> -> vector<16x32xbf16>
    %c0_90 = arith.constant 0 : index
    %c448 = arith.constant 448 : index
    %c0_91 = arith.constant 0 : index
    %130 = vector.load %arg7[%c0_90, %c448, %c0_91] : memref<2x672x128xbf16, #tpu.memory_space<vmem>>, vector<1x32x16xbf16>
    %131 = vector.shape_cast %130 : vector<1x32x16xbf16> to vector<32x16xbf16>
    %c0_92 = arith.constant 0 : index
    %c5 = arith.constant 5 : index
    %c0_93 = arith.constant 0 : index
    %132 = vector.load %arg8[%c0_92, %c5, %c0_93] : memref<2x16x128xf32, #tpu.memory_space<vmem>>, vector<1x1x16xf32>
    %133 = vector.shape_cast %132 : vector<1x1x16xf32> to vector<1x16xf32>
    %cst_94 = arith.constant dense<0.000000e+00> : vector<16x16xf32>
    %134 = tpu.matmul %129, %131, %cst_94 {dimension_numbers = #tpu.dot_dimension_numbers<[1], [0], [0], [1], [0, 0, 1, 1], [], []>} : vector<16x32xbf16>, vector<32x16xbf16>, vector<16x16xf32> -> vector<16x16xf32>
    %135 = vector.broadcast %133 : vector<1x16xf32> to vector<16x16xf32>
    %136 = arith.addf %134, %135 : vector<16x16xf32>
    %cst_95 = arith.constant 0.000000e+00 : f32
    %137 = vector.broadcast %cst_95 : f32 to vector<16x16xf32>
    %138 = arith.maximumf %136, %137 : vector<16x16xf32>
    %139 = arith.truncf %138 : vector<16x16xf32> to vector<16x16xbf16>
    %c0_96 = arith.constant 0 : index
    %c480 = arith.constant 480 : index
    %c0_97 = arith.constant 0 : index
    %140 = vector.load %arg7[%c0_96, %c480, %c0_97] : memref<2x672x128xbf16, #tpu.memory_space<vmem>>, vector<1x32x16xbf16>
    %141 = vector.shape_cast %140 : vector<1x32x16xbf16> to vector<32x16xbf16>
    %c0_98 = arith.constant 0 : index
    %c5_99 = arith.constant 5 : index
    %c0_100 = arith.constant 0 : index
    %142 = vector.load %arg8[%c0_98, %c5_99, %c0_100] : memref<2x16x128xf32, #tpu.memory_space<vmem>>, vector<1x1x16xf32>
    %143 = vector.shape_cast %142 : vector<1x1x16xf32> to vector<1x16xf32>
    %cst_101 = arith.constant dense<0.000000e+00> : vector<16x16xf32>
    %144 = tpu.matmul %129, %141, %cst_101 {dimension_numbers = #tpu.dot_dimension_numbers<[1], [0], [0], [1], [0, 0, 1, 1], [], []>} : vector<16x32xbf16>, vector<32x16xbf16>, vector<16x16xf32> -> vector<16x16xf32>
    %145 = vector.broadcast %143 : vector<1x16xf32> to vector<16x16xf32>
    %146 = arith.addf %144, %145 : vector<16x16xf32>
    %cst_102 = arith.constant 0.000000e+00 : f32
    %147 = vector.broadcast %cst_102 : f32 to vector<16x16xf32>
    %148 = arith.maximumf %146, %147 : vector<16x16xf32>
    %149 = arith.truncf %148 : vector<16x16xf32> to vector<16x16xbf16>
    %150 = tpu.concatenate %139, %149 in 0 : vector<16x16xbf16>, vector<16x16xbf16> -> vector<32x16xbf16>
    %c0_103 = arith.constant 0 : index
    %c512 = arith.constant 512 : index
    %c0_104 = arith.constant 0 : index
    %151 = vector.load %arg7[%c0_103, %c512, %c0_104] : memref<2x672x128xbf16, #tpu.memory_space<vmem>>, vector<1x16x16xbf16>
    %152 = vector.shape_cast %151 : vector<1x16x16xbf16> to vector<16x16xbf16>
    %c0_105 = arith.constant 0 : index
    %c6 = arith.constant 6 : index
    %c0_106 = arith.constant 0 : index
    %153 = vector.load %arg8[%c0_105, %c6, %c0_106] : memref<2x16x128xf32, #tpu.memory_space<vmem>>, vector<1x1x16xf32>
    %154 = vector.shape_cast %153 : vector<1x1x16xf32> to vector<1x16xf32>
    %cst_107 = arith.constant dense<0.000000e+00> : vector<32x16xf32>
    %155 = tpu.matmul %150, %152, %cst_107 {dimension_numbers = #tpu.dot_dimension_numbers<[1], [0], [0], [1], [0, 0, 1, 1], [], []>} : vector<32x16xbf16>, vector<16x16xbf16>, vector<32x16xf32> -> vector<32x16xf32>
    %156 = vector.broadcast %154 : vector<1x16xf32> to vector<32x16xf32>
    %157 = arith.addf %155, %156 : vector<32x16xf32>
    %cst_108 = arith.constant 0.000000e+00 : f32
    %158 = vector.broadcast %cst_108 : f32 to vector<32x16xf32>
    %159 = arith.maximumf %157, %158 : vector<32x16xf32>
    %160 = arith.truncf %159 : vector<32x16xf32> to vector<32x16xbf16>
    %c0_109 = arith.constant 0 : index
    %c528 = arith.constant 528 : index
    %c0_110 = arith.constant 0 : index
    %161 = vector.load %arg7[%c0_109, %c528, %c0_110] : memref<2x672x128xbf16, #tpu.memory_space<vmem>>, vector<1x16x16xbf16>
    %162 = vector.shape_cast %161 : vector<1x16x16xbf16> to vector<16x16xbf16>
    %c0_111 = arith.constant 0 : index
    %c6_112 = arith.constant 6 : index
    %c0_113 = arith.constant 0 : index
    %163 = vector.load %arg8[%c0_111, %c6_112, %c0_113] : memref<2x16x128xf32, #tpu.memory_space<vmem>>, vector<1x1x16xf32>
    %164 = vector.shape_cast %163 : vector<1x1x16xf32> to vector<1x16xf32>
    %cst_114 = arith.constant dense<0.000000e+00> : vector<32x16xf32>
    %165 = tpu.matmul %150, %162, %cst_114 {dimension_numbers = #tpu.dot_dimension_numbers<[1], [0], [0], [1], [0, 0, 1, 1], [], []>} : vector<32x16xbf16>, vector<16x16xbf16>, vector<32x16xf32> -> vector<32x16xf32>
    %166 = vector.broadcast %164 : vector<1x16xf32> to vector<32x16xf32>
    %167 = arith.addf %165, %166 : vector<32x16xf32>
    %cst_115 = arith.constant 0.000000e+00 : f32
    %168 = vector.broadcast %cst_115 : f32 to vector<32x16xf32>
    %169 = arith.maximumf %167, %168 : vector<32x16xf32>
    %170 = arith.truncf %169 : vector<32x16xf32> to vector<32x16xbf16>
    %171 = tpu.concatenate %160, %170 in 0 : vector<32x16xbf16>, vector<32x16xbf16> -> vector<64x16xbf16>
    %c0_116 = arith.constant 0 : index
    %c544 = arith.constant 544 : index
    %c0_117 = arith.constant 0 : index
    %172 = vector.load %arg7[%c0_116, %c544, %c0_117] : memref<2x672x128xbf16, #tpu.memory_space<vmem>>, vector<1x16x112xbf16>
    %173 = vector.shape_cast %172 : vector<1x16x112xbf16> to vector<16x112xbf16>
    %c0_118 = arith.constant 0 : index
    %c7 = arith.constant 7 : index
    %c0_119 = arith.constant 0 : index
    %174 = vector.load %arg8[%c0_118, %c7, %c0_119] : memref<2x16x128xf32, #tpu.memory_space<vmem>>, vector<1x1x112xf32>
    %175 = vector.shape_cast %174 : vector<1x1x112xf32> to vector<1x112xf32>
    %cst_120 = arith.constant dense<0.000000e+00> : vector<64x112xf32>
    %176 = tpu.matmul %171, %173, %cst_120 {dimension_numbers = #tpu.dot_dimension_numbers<[1], [0], [0], [1], [0, 0, 1, 1], [], []>} : vector<64x16xbf16>, vector<16x112xbf16>, vector<64x112xf32> -> vector<64x112xf32>
    %177 = vector.broadcast %175 : vector<1x112xf32> to vector<64x112xf32>
    %178 = arith.addf %176, %177 : vector<64x112xf32>
    %cst_121 = arith.constant 0.000000e+00 : f32
    %179 = vector.broadcast %cst_121 : f32 to vector<64x112xf32>
    %180 = arith.maximumf %178, %179 : vector<64x112xf32>
    %181 = arith.truncf %180 : vector<64x112xf32> to vector<64x112xbf16>
    %c0_122 = arith.constant 0 : index
    %c560 = arith.constant 560 : index
    %c0_123 = arith.constant 0 : index
    %182 = vector.load %arg7[%c0_122, %c560, %c0_123] : memref<2x672x128xbf16, #tpu.memory_space<vmem>>, vector<1x112x128xbf16>
    %183 = vector.shape_cast %182 : vector<1x112x128xbf16> to vector<112x128xbf16>
    %c0_124 = arith.constant 0 : index
    %c8 = arith.constant 8 : index
    %c0_125 = arith.constant 0 : index
    %184 = vector.load %arg8[%c0_124, %c8, %c0_125] : memref<2x16x128xf32, #tpu.memory_space<vmem>>, vector<1x1x128xf32>
    %185 = vector.shape_cast %184 : vector<1x1x128xf32> to vector<1x128xf32>
    %cst_126 = arith.constant dense<0.000000e+00> : vector<64x128xf32>
    %186 = tpu.matmul %181, %183, %cst_126 {dimension_numbers = #tpu.dot_dimension_numbers<[1], [0], [0], [1], [0, 0, 1, 1], [], []>} : vector<64x112xbf16>, vector<112x128xbf16>, vector<64x128xf32> -> vector<64x128xf32>
    %187 = vector.broadcast %185 : vector<1x128xf32> to vector<64x128xf32>
    %188 = arith.addf %186, %187 : vector<64x128xf32>
    %c0_127 = arith.constant 0 : index
    %c0_128 = arith.constant 0 : index
    %c0_129 = arith.constant 0 : index
    %189 = vector.load %arg9[%c0_127, %c0_128, %c0_129] : memref<2x64x128xf32, #tpu.memory_space<vmem>>, vector<1x64x128xf32>
    %190 = vector.shape_cast %189 : vector<1x64x128xf32> to vector<64x128xf32>
    %191 = vector.shape_cast %188 : vector<64x128xf32> to vector<1x64x128xf32>
    tpu.vector_store %arg9[%c0_127, %c0_128, %c0_129], %191 {strides = array<i32>} : memref<2x64x128xf32, #tpu.memory_space<vmem>>, vector<1x64x128xf32>,
    %c1_130 = arith.constant 1 : index
    %c0_131 = arith.constant 0 : index
    %c0_132 = arith.constant 0 : index
    %192 = vector.load %arg5[%c1_130, %c0_131, %c0_132] : memref<2x2x32xbf16, #tpu.memory_space<vmem>>, vector<1x2x32xbf16>
    %193 = vector.shape_cast %192 : vector<1x2x32xbf16> to vector<2x32xbf16>
    %c1_133 = arith.constant 1 : index
    %c0_134 = arith.constant 0 : index
    %c0_135 = arith.constant 0 : index
    %194 = vector.load %arg6[%c1_133, %c0_134, %c0_135] : memref<2x2x32xbf16, #tpu.memory_space<vmem>>, vector<1x2x32xbf16>
    %195 = vector.shape_cast %194 : vector<1x2x32xbf16> to vector<2x32xbf16>
    %196 = tpu.concatenate %195, %195 in 0 : vector<2x32xbf16>, vector<2x32xbf16> -> vector<4x32xbf16>
    %c1_136 = arith.constant 1 : index
    %c0_137 = arith.constant 0 : index
    %c0_138 = arith.constant 0 : index
    %197 = vector.load %arg7[%c1_136, %c0_137, %c0_138] : memref<2x672x128xbf16, #tpu.memory_space<vmem>>, vector<1x32x64xbf16>
    %198 = vector.shape_cast %197 : vector<1x32x64xbf16> to vector<32x64xbf16>
    %c1_139 = arith.constant 1 : index
    %c0_140 = arith.constant 0 : index
    %c0_141 = arith.constant 0 : index
    %199 = vector.load %arg8[%c1_139, %c0_140, %c0_141] : memref<2x16x128xf32, #tpu.memory_space<vmem>>, vector<1x1x64xf32>
    %200 = vector.shape_cast %199 : vector<1x1x64xf32> to vector<1x64xf32>
    %cst_142 = arith.constant dense<0.000000e+00> : vector<2x64xf32>
    %201 = tpu.matmul %193, %198, %cst_142 {dimension_numbers = #tpu.dot_dimension_numbers<[1], [0], [0], [1], [0, 0, 1, 1], [], []>} : vector<2x32xbf16>, vector<32x64xbf16>, vector<2x64xf32> -> vector<2x64xf32>
    %202 = vector.broadcast %200 : vector<1x64xf32> to vector<2x64xf32>
    %203 = arith.addf %201, %202 : vector<2x64xf32>
    %cst_143 = arith.constant 0.000000e+00 : f32
    %204 = vector.broadcast %cst_143 : f32 to vector<2x64xf32>
    %205 = arith.maximumf %203, %204 : vector<2x64xf32>
    %206 = arith.truncf %205 : vector<2x64xf32> to vector<2x64xbf16>
    %c1_144 = arith.constant 1 : index
    %c32_145 = arith.constant 32 : index
    %c0_146 = arith.constant 0 : index
    %207 = vector.load %arg7[%c1_144, %c32_145, %c0_146] : memref<2x672x128xbf16, #tpu.memory_space<vmem>>, vector<1x32x64xbf16>
    %208 = vector.shape_cast %207 : vector<1x32x64xbf16> to vector<32x64xbf16>
    %c1_147 = arith.constant 1 : index
    %c0_148 = arith.constant 0 : index
    %c0_149 = arith.constant 0 : index
    %209 = vector.load %arg8[%c1_147, %c0_148, %c0_149] : memref<2x16x128xf32, #tpu.memory_space<vmem>>, vector<1x1x64xf32>
    %210 = vector.shape_cast %209 : vector<1x1x64xf32> to vector<1x64xf32>
    %cst_150 = arith.constant dense<0.000000e+00> : vector<2x64xf32>
    %211 = tpu.matmul %193, %208, %cst_150 {dimension_numbers = #tpu.dot_dimension_numbers<[1], [0], [0], [1], [0, 0, 1, 1], [], []>} : vector<2x32xbf16>, vector<32x64xbf16>, vector<2x64xf32> -> vector<2x64xf32>
    %212 = vector.broadcast %210 : vector<1x64xf32> to vector<2x64xf32>
    %213 = arith.addf %211, %212 : vector<2x64xf32>
    %cst_151 = arith.constant 0.000000e+00 : f32
    %214 = vector.broadcast %cst_151 : f32 to vector<2x64xf32>
    %215 = arith.maximumf %213, %214 : vector<2x64xf32>
    %216 = arith.truncf %215 : vector<2x64xf32> to vector<2x64xbf16>
    %217 = tpu.concatenate %206, %216 in 0 : vector<2x64xbf16>, vector<2x64xbf16> -> vector<4x64xbf16>
    %c1_152 = arith.constant 1 : index
    %c64_153 = arith.constant 64 : index
    %c0_154 = arith.constant 0 : index
    %218 = vector.load %arg7[%c1_152, %c64_153, %c0_154] : memref<2x672x128xbf16, #tpu.memory_space<vmem>>, vector<1x64x32xbf16>
    %219 = vector.shape_cast %218 : vector<1x64x32xbf16> to vector<64x32xbf16>
    %c1_155 = arith.constant 1 : index
    %c1_156 = arith.constant 1 : index
    %c0_157 = arith.constant 0 : index
    %220 = vector.load %arg8[%c1_155, %c1_156, %c0_157] : memref<2x16x128xf32, #tpu.memory_space<vmem>>, vector<1x1x32xf32>
    %221 = vector.shape_cast %220 : vector<1x1x32xf32> to vector<1x32xf32>
    %cst_158 = arith.constant dense<0.000000e+00> : vector<4x32xf32>
    %222 = tpu.matmul %217, %219, %cst_158 {dimension_numbers = #tpu.dot_dimension_numbers<[1], [0], [0], [1], [0, 0, 1, 1], [], []>} : vector<4x64xbf16>, vector<64x32xbf16>, vector<4x32xf32> -> vector<4x32xf32>
    %223 = vector.broadcast %221 : vector<1x32xf32> to vector<4x32xf32>
    %224 = arith.addf %222, %223 : vector<4x32xf32>
    %cst_159 = arith.constant 0.000000e+00 : f32
    %225 = vector.broadcast %cst_159 : f32 to vector<4x32xf32>
    %226 = arith.maximumf %224, %225 : vector<4x32xf32>
    %227 = arith.truncf %226 : vector<4x32xf32> to vector<4x32xbf16>
    %c1_160 = arith.constant 1 : index
    %c128_161 = arith.constant 128 : index
    %c0_162 = arith.constant 0 : index
    %228 = vector.load %arg7[%c1_160, %c128_161, %c0_162] : memref<2x672x128xbf16, #tpu.memory_space<vmem>>, vector<1x32x32xbf16>
    %229 = vector.shape_cast %228 : vector<1x32x32xbf16> to vector<32x32xbf16>
    %cst_163 = arith.constant dense<0.000000e+00> : vector<4x32xf32>
    %230 = tpu.matmul %26, %229, %cst_163 {dimension_numbers = #tpu.dot_dimension_numbers<[1], [0], [0], [1], [0, 0, 1, 1], [], []>} : vector<4x32xbf16>, vector<32x32xbf16>, vector<4x32xf32> -> vector<4x32xf32>
    %c1_164 = arith.constant 1 : index
    %c160_165 = arith.constant 160 : index
    %c0_166 = arith.constant 0 : index
    %231 = vector.load %arg7[%c1_164, %c160_165, %c0_166] : memref<2x672x128xbf16, #tpu.memory_space<vmem>>, vector<1x32x32xbf16>
    %232 = vector.shape_cast %231 : vector<1x32x32xbf16> to vector<32x32xbf16>
    %cst_167 = arith.constant dense<0.000000e+00> : vector<4x32xf32>
    %233 = tpu.matmul %27, %232, %cst_167 {dimension_numbers = #tpu.dot_dimension_numbers<[1], [0], [0], [1], [0, 0, 1, 1], [], []>} : vector<4x32xbf16>, vector<32x32xbf16>, vector<4x32xf32> -> vector<4x32xf32>
    %234 = arith.addf %230, %233 : vector<4x32xf32>
    %c1_168 = arith.constant 1 : index
    %c192_169 = arith.constant 192 : index
    %c0_170 = arith.constant 0 : index
    %235 = vector.load %arg7[%c1_168, %c192_169, %c0_170] : memref<2x672x128xbf16, #tpu.memory_space<vmem>>, vector<1x32x32xbf16>
    %236 = vector.shape_cast %235 : vector<1x32x32xbf16> to vector<32x32xbf16>
    %cst_171 = arith.constant dense<0.000000e+00> : vector<4x32xf32>
    %237 = tpu.matmul %227, %236, %cst_171 {dimension_numbers = #tpu.dot_dimension_numbers<[1], [0], [0], [1], [0, 0, 1, 1], [], []>} : vector<4x32xbf16>, vector<32x32xbf16>, vector<4x32xf32> -> vector<4x32xf32>
    %238 = arith.addf %234, %237 : vector<4x32xf32>
    %c1_172 = arith.constant 1 : index
    %c224_173 = arith.constant 224 : index
    %c0_174 = arith.constant 0 : index
    %239 = vector.load %arg7[%c1_172, %c224_173, %c0_174] : memref<2x672x128xbf16, #tpu.memory_space<vmem>>, vector<1x32x32xbf16>
    %240 = vector.shape_cast %239 : vector<1x32x32xbf16> to vector<32x32xbf16>
    %cst_175 = arith.constant dense<0.000000e+00> : vector<4x32xf32>
    %241 = tpu.matmul %196, %240, %cst_175 {dimension_numbers = #tpu.dot_dimension_numbers<[1], [0], [0], [1], [0, 0, 1, 1], [], []>} : vector<4x32xbf16>, vector<32x32xbf16>, vector<4x32xf32> -> vector<4x32xf32>
    %242 = arith.addf %238, %241 : vector<4x32xf32>
    %c1_176 = arith.constant 1 : index
    %c2_177 = arith.constant 2 : index
    %c0_178 = arith.constant 0 : index
    %243 = vector.load %arg8[%c1_176, %c2_177, %c0_178] : memref<2x16x128xf32, #tpu.memory_space<vmem>>, vector<1x1x32xf32>
    %244 = vector.shape_cast %243 : vector<1x1x32xf32> to vector<1x32xf32>
    %245 = vector.broadcast %244 : vector<1x32xf32> to vector<4x32xf32>
    %246 = arith.addf %242, %245 : vector<4x32xf32>
    %cst_179 = arith.constant 0.000000e+00 : f32
    %247 = vector.broadcast %cst_179 : f32 to vector<4x32xf32>
    %248 = arith.maximumf %246, %247 : vector<4x32xf32>
    %249 = arith.truncf %248 : vector<4x32xf32> to vector<4x32xbf16>
    %c1_180 = arith.constant 1 : index
    %c256_181 = arith.constant 256 : index
    %c0_182 = arith.constant 0 : index
    %250 = vector.load %arg7[%c1_180, %c256_181, %c0_182] : memref<2x672x128xbf16, #tpu.memory_space<vmem>>, vector<1x32x32xbf16>
    %251 = vector.shape_cast %250 : vector<1x32x32xbf16> to vector<32x32xbf16>
    %cst_183 = arith.constant dense<0.000000e+00> : vector<4x32xf32>
    %252 = tpu.matmul %26, %251, %cst_183 {dimension_numbers = #tpu.dot_dimension_numbers<[1], [0], [0], [1], [0, 0, 1, 1], [], []>} : vector<4x32xbf16>, vector<32x32xbf16>, vector<4x32xf32> -> vector<4x32xf32>
    %c1_184 = arith.constant 1 : index
    %c288_185 = arith.constant 288 : index
    %c0_186 = arith.constant 0 : index
    %253 = vector.load %arg7[%c1_184, %c288_185, %c0_186] : memref<2x672x128xbf16, #tpu.memory_space<vmem>>, vector<1x32x32xbf16>
    %254 = vector.shape_cast %253 : vector<1x32x32xbf16> to vector<32x32xbf16>
    %cst_187 = arith.constant dense<0.000000e+00> : vector<4x32xf32>
    %255 = tpu.matmul %27, %254, %cst_187 {dimension_numbers = #tpu.dot_dimension_numbers<[1], [0], [0], [1], [0, 0, 1, 1], [], []>} : vector<4x32xbf16>, vector<32x32xbf16>, vector<4x32xf32> -> vector<4x32xf32>
    %256 = arith.addf %252, %255 : vector<4x32xf32>
    %c1_188 = arith.constant 1 : index
    %c320_189 = arith.constant 320 : index
    %c0_190 = arith.constant 0 : index
    %257 = vector.load %arg7[%c1_188, %c320_189, %c0_190] : memref<2x672x128xbf16, #tpu.memory_space<vmem>>, vector<1x32x32xbf16>
    %258 = vector.shape_cast %257 : vector<1x32x32xbf16> to vector<32x32xbf16>
    %cst_191 = arith.constant dense<0.000000e+00> : vector<4x32xf32>
    %259 = tpu.matmul %227, %258, %cst_191 {dimension_numbers = #tpu.dot_dimension_numbers<[1], [0], [0], [1], [0, 0, 1, 1], [], []>} : vector<4x32xbf16>, vector<32x32xbf16>, vector<4x32xf32> -> vector<4x32xf32>
    %260 = arith.addf %256, %259 : vector<4x32xf32>
    %c1_192 = arith.constant 1 : index
    %c352_193 = arith.constant 352 : index
    %c0_194 = arith.constant 0 : index
    %261 = vector.load %arg7[%c1_192, %c352_193, %c0_194] : memref<2x672x128xbf16, #tpu.memory_space<vmem>>, vector<1x32x32xbf16>
    %262 = vector.shape_cast %261 : vector<1x32x32xbf16> to vector<32x32xbf16>
    %cst_195 = arith.constant dense<0.000000e+00> : vector<4x32xf32>
    %263 = tpu.matmul %196, %262, %cst_195 {dimension_numbers = #tpu.dot_dimension_numbers<[1], [0], [0], [1], [0, 0, 1, 1], [], []>} : vector<4x32xbf16>, vector<32x32xbf16>, vector<4x32xf32> -> vector<4x32xf32>
    %264 = arith.addf %260, %263 : vector<4x32xf32>
    %c1_196 = arith.constant 1 : index
    %c3_197 = arith.constant 3 : index
    %c0_198 = arith.constant 0 : index
    %265 = vector.load %arg8[%c1_196, %c3_197, %c0_198] : memref<2x16x128xf32, #tpu.memory_space<vmem>>, vector<1x1x32xf32>
    %266 = vector.shape_cast %265 : vector<1x1x32xf32> to vector<1x32xf32>
    %267 = vector.broadcast %266 : vector<1x32xf32> to vector<4x32xf32>
    %268 = arith.addf %264, %267 : vector<4x32xf32>
    %cst_199 = arith.constant 0.000000e+00 : f32
    %269 = vector.broadcast %cst_199 : f32 to vector<4x32xf32>
    %270 = arith.maximumf %268, %269 : vector<4x32xf32>
    %271 = arith.truncf %270 : vector<4x32xf32> to vector<4x32xbf16>
    %272 = tpu.concatenate %249, %271 in 0 : vector<4x32xbf16>, vector<4x32xbf16> -> vector<8x32xbf16>
    %c1_200 = arith.constant 1 : index
    %c384_201 = arith.constant 384 : index
    %c0_202 = arith.constant 0 : index
    %273 = vector.load %arg7[%c1_200, %c384_201, %c0_202] : memref<2x672x128xbf16, #tpu.memory_space<vmem>>, vector<1x32x32xbf16>
    %274 = vector.shape_cast %273 : vector<1x32x32xbf16> to vector<32x32xbf16>
    %c1_203 = arith.constant 1 : index
    %c4_204 = arith.constant 4 : index
    %c0_205 = arith.constant 0 : index
    %275 = vector.load %arg8[%c1_203, %c4_204, %c0_205] : memref<2x16x128xf32, #tpu.memory_space<vmem>>, vector<1x1x32xf32>
    %276 = vector.shape_cast %275 : vector<1x1x32xf32> to vector<1x32xf32>
    %cst_206 = arith.constant dense<0.000000e+00> : vector<8x32xf32>
    %277 = tpu.matmul %272, %274, %cst_206 {dimension_numbers = #tpu.dot_dimension_numbers<[1], [0], [0], [1], [0, 0, 1, 1], [], []>} : vector<8x32xbf16>, vector<32x32xbf16>, vector<8x32xf32> -> vector<8x32xf32>
    %278 = vector.broadcast %276 : vector<1x32xf32> to vector<8x32xf32>
    %279 = arith.addf %277, %278 : vector<8x32xf32>
    %cst_207 = arith.constant 0.000000e+00 : f32
    %280 = vector.broadcast %cst_207 : f32 to vector<8x32xf32>
    %281 = arith.maximumf %279, %280 : vector<8x32xf32>
    %282 = arith.truncf %281 : vector<8x32xf32> to vector<8x32xbf16>
    %c1_208 = arith.constant 1 : index
    %c416_209 = arith.constant 416 : index
    %c0_210 = arith.constant 0 : index
    %283 = vector.load %arg7[%c1_208, %c416_209, %c0_210] : memref<2x672x128xbf16, #tpu.memory_space<vmem>>, vector<1x32x32xbf16>
    %284 = vector.shape_cast %283 : vector<1x32x32xbf16> to vector<32x32xbf16>
    %c1_211 = arith.constant 1 : index
    %c4_212 = arith.constant 4 : index
    %c0_213 = arith.constant 0 : index
    %285 = vector.load %arg8[%c1_211, %c4_212, %c0_213] : memref<2x16x128xf32, #tpu.memory_space<vmem>>, vector<1x1x32xf32>
    %286 = vector.shape_cast %285 : vector<1x1x32xf32> to vector<1x32xf32>
    %cst_214 = arith.constant dense<0.000000e+00> : vector<8x32xf32>
    %287 = tpu.matmul %272, %284, %cst_214 {dimension_numbers = #tpu.dot_dimension_numbers<[1], [0], [0], [1], [0, 0, 1, 1], [], []>} : vector<8x32xbf16>, vector<32x32xbf16>, vector<8x32xf32> -> vector<8x32xf32>
    %288 = vector.broadcast %286 : vector<1x32xf32> to vector<8x32xf32>
    %289 = arith.addf %287, %288 : vector<8x32xf32>
    %cst_215 = arith.constant 0.000000e+00 : f32
    %290 = vector.broadcast %cst_215 : f32 to vector<8x32xf32>
    %291 = arith.maximumf %289, %290 : vector<8x32xf32>
    %292 = arith.truncf %291 : vector<8x32xf32> to vector<8x32xbf16>
    %293 = tpu.concatenate %282, %292 in 0 : vector<8x32xbf16>, vector<8x32xbf16> -> vector<16x32xbf16>
    %c1_216 = arith.constant 1 : index
    %c448_217 = arith.constant 448 : index
    %c0_218 = arith.constant 0 : index
    %294 = vector.load %arg7[%c1_216, %c448_217, %c0_218] : memref<2x672x128xbf16, #tpu.memory_space<vmem>>, vector<1x32x16xbf16>
    %295 = vector.shape_cast %294 : vector<1x32x16xbf16> to vector<32x16xbf16>
    %c1_219 = arith.constant 1 : index
    %c5_220 = arith.constant 5 : index
    %c0_221 = arith.constant 0 : index
    %296 = vector.load %arg8[%c1_219, %c5_220, %c0_221] : memref<2x16x128xf32, #tpu.memory_space<vmem>>, vector<1x1x16xf32>
    %297 = vector.shape_cast %296 : vector<1x1x16xf32> to vector<1x16xf32>
    %cst_222 = arith.constant dense<0.000000e+00> : vector<16x16xf32>
    %298 = tpu.matmul %293, %295, %cst_222 {dimension_numbers = #tpu.dot_dimension_numbers<[1], [0], [0], [1], [0, 0, 1, 1], [], []>} : vector<16x32xbf16>, vector<32x16xbf16>, vector<16x16xf32> -> vector<16x16xf32>
    %299 = vector.broadcast %297 : vector<1x16xf32> to vector<16x16xf32>
    %300 = arith.addf %298, %299 : vector<16x16xf32>
    %cst_223 = arith.constant 0.000000e+00 : f32
    %301 = vector.broadcast %cst_223 : f32 to vector<16x16xf32>
    %302 = arith.maximumf %300, %301 : vector<16x16xf32>
    %303 = arith.truncf %302 : vector<16x16xf32> to vector<16x16xbf16>
    %c1_224 = arith.constant 1 : index
    %c480_225 = arith.constant 480 : index
    %c0_226 = arith.constant 0 : index
    %304 = vector.load %arg7[%c1_224, %c480_225, %c0_226] : memref<2x672x128xbf16, #tpu.memory_space<vmem>>, vector<1x32x16xbf16>
    %305 = vector.shape_cast %304 : vector<1x32x16xbf16> to vector<32x16xbf16>
    %c1_227 = arith.constant 1 : index
    %c5_228 = arith.constant 5 : index
    %c0_229 = arith.constant 0 : index
    %306 = vector.load %arg8[%c1_227, %c5_228, %c0_229] : memref<2x16x128xf32, #tpu.memory_space<vmem>>, vector<1x1x16xf32>
    %307 = vector.shape_cast %306 : vector<1x1x16xf32> to vector<1x16xf32>
    %cst_230 = arith.constant dense<0.000000e+00> : vector<16x16xf32>
    %308 = tpu.matmul %293, %305, %cst_230 {dimension_numbers = #tpu.dot_dimension_numbers<[1], [0], [0], [1], [0, 0, 1, 1], [], []>} : vector<16x32xbf16>, vector<32x16xbf16>, vector<16x16xf32> -> vector<16x16xf32>
    %309 = vector.broadcast %307 : vector<1x16xf32> to vector<16x16xf32>
    %310 = arith.addf %308, %309 : vector<16x16xf32>
    %cst_231 = arith.constant 0.000000e+00 : f32
    %311 = vector.broadcast %cst_231 : f32 to vector<16x16xf32>
    %312 = arith.maximumf %310, %311 : vector<16x16xf32>
    %313 = arith.truncf %312 : vector<16x16xf32> to vector<16x16xbf16>
    %314 = tpu.concatenate %303, %313 in 0 : vector<16x16xbf16>, vector<16x16xbf16> -> vector<32x16xbf16>
    %c1_232 = arith.constant 1 : index
    %c512_233 = arith.constant 512 : index
    %c0_234 = arith.constant 0 : index
    %315 = vector.load %arg7[%c1_232, %c512_233, %c0_234] : memref<2x672x128xbf16, #tpu.memory_space<vmem>>, vector<1x16x16xbf16>
    %316 = vector.shape_cast %315 : vector<1x16x16xbf16> to vector<16x16xbf16>
    %c1_235 = arith.constant 1 : index
    %c6_236 = arith.constant 6 : index
    %c0_237 = arith.constant 0 : index
    %317 = vector.load %arg8[%c1_235, %c6_236, %c0_237] : memref<2x16x128xf32, #tpu.memory_space<vmem>>, vector<1x1x16xf32>
    %318 = vector.shape_cast %317 : vector<1x1x16xf32> to vector<1x16xf32>
    %cst_238 = arith.constant dense<0.000000e+00> : vector<32x16xf32>
    %319 = tpu.matmul %314, %316, %cst_238 {dimension_numbers = #tpu.dot_dimension_numbers<[1], [0], [0], [1], [0, 0, 1, 1], [], []>} : vector<32x16xbf16>, vector<16x16xbf16>, vector<32x16xf32> -> vector<32x16xf32>
    %320 = vector.broadcast %318 : vector<1x16xf32> to vector<32x16xf32>
    %321 = arith.addf %319, %320 : vector<32x16xf32>
    %cst_239 = arith.constant 0.000000e+00 : f32
    %322 = vector.broadcast %cst_239 : f32 to vector<32x16xf32>
    %323 = arith.maximumf %321, %322 : vector<32x16xf32>
    %324 = arith.truncf %323 : vector<32x16xf32> to vector<32x16xbf16>
    %c1_240 = arith.constant 1 : index
    %c528_241 = arith.constant 528 : index
    %c0_242 = arith.constant 0 : index
    %325 = vector.load %arg7[%c1_240, %c528_241, %c0_242] : memref<2x672x128xbf16, #tpu.memory_space<vmem>>, vector<1x16x16xbf16>
    %326 = vector.shape_cast %325 : vector<1x16x16xbf16> to vector<16x16xbf16>
    %c1_243 = arith.constant 1 : index
    %c6_244 = arith.constant 6 : index
    %c0_245 = arith.constant 0 : index
    %327 = vector.load %arg8[%c1_243, %c6_244, %c0_245] : memref<2x16x128xf32, #tpu.memory_space<vmem>>, vector<1x1x16xf32>
    %328 = vector.shape_cast %327 : vector<1x1x16xf32> to vector<1x16xf32>
    %cst_246 = arith.constant dense<0.000000e+00> : vector<32x16xf32>
    %329 = tpu.matmul %314, %326, %cst_246 {dimension_numbers = #tpu.dot_dimension_numbers<[1], [0], [0], [1], [0, 0, 1, 1], [], []>} : vector<32x16xbf16>, vector<16x16xbf16>, vector<32x16xf32> -> vector<32x16xf32>
    %330 = vector.broadcast %328 : vector<1x16xf32> to vector<32x16xf32>
    %331 = arith.addf %329, %330 : vector<32x16xf32>
    %cst_247 = arith.constant 0.000000e+00 : f32
    %332 = vector.broadcast %cst_247 : f32 to vector<32x16xf32>
    %333 = arith.maximumf %331, %332 : vector<32x16xf32>
    %334 = arith.truncf %333 : vector<32x16xf32> to vector<32x16xbf16>
    %335 = tpu.concatenate %324, %334 in 0 : vector<32x16xbf16>, vector<32x16xbf16> -> vector<64x16xbf16>
    %c1_248 = arith.constant 1 : index
    %c544_249 = arith.constant 544 : index
    %c0_250 = arith.constant 0 : index
    %336 = vector.load %arg7[%c1_248, %c544_249, %c0_250] : memref<2x672x128xbf16, #tpu.memory_space<vmem>>, vector<1x16x112xbf16>
    %337 = vector.shape_cast %336 : vector<1x16x112xbf16> to vector<16x112xbf16>
    %c1_251 = arith.constant 1 : index
    %c7_252 = arith.constant 7 : index
    %c0_253 = arith.constant 0 : index
    %338 = vector.load %arg8[%c1_251, %c7_252, %c0_253] : memref<2x16x128xf32, #tpu.memory_space<vmem>>, vector<1x1x112xf32>
    %339 = vector.shape_cast %338 : vector<1x1x112xf32> to vector<1x112xf32>
    %cst_254 = arith.constant dense<0.000000e+00> : vector<64x112xf32>
    %340 = tpu.matmul %335, %337, %cst_254 {dimension_numbers = #tpu.dot_dimension_numbers<[1], [0], [0], [1], [0, 0, 1, 1], [], []>} : vector<64x16xbf16>, vector<16x112xbf16>, vector<64x112xf32> -> vector<64x112xf32>
    %341 = vector.broadcast %339 : vector<1x112xf32> to vector<64x112xf32>
    %342 = arith.addf %340, %341 : vector<64x112xf32>
    %cst_255 = arith.constant 0.000000e+00 : f32
    %343 = vector.broadcast %cst_255 : f32 to vector<64x112xf32>
    %344 = arith.maximumf %342, %343 : vector<64x112xf32>
    %345 = arith.truncf %344 : vector<64x112xf32> to vector<64x112xbf16>
    %c1_256 = arith.constant 1 : index
    %c560_257 = arith.constant 560 : index
    %c0_258 = arith.constant 0 : index
    %346 = vector.load %arg7[%c1_256, %c560_257, %c0_258] : memref<2x672x128xbf16, #tpu.memory_space<vmem>>, vector<1x112x128xbf16>
    %347 = vector.shape_cast %346 : vector<1x112x128xbf16> to vector<112x128xbf16>
    %c1_259 = arith.constant 1 : index
    %c8_260 = arith.constant 8 : index
    %c0_261 = arith.constant 0 : index
    %348 = vector.load %arg8[%c1_259, %c8_260, %c0_261] : memref<2x16x128xf32, #tpu.memory_space<vmem>>, vector<1x1x128xf32>
    %349 = vector.shape_cast %348 : vector<1x1x128xf32> to vector<1x128xf32>
    %cst_262 = arith.constant dense<0.000000e+00> : vector<64x128xf32>
    %350 = tpu.matmul %345, %347, %cst_262 {dimension_numbers = #tpu.dot_dimension_numbers<[1], [0], [0], [1], [0, 0, 1, 1], [], []>} : vector<64x112xbf16>, vector<112x128xbf16>, vector<64x128xf32> -> vector<64x128xf32>
    %351 = vector.broadcast %349 : vector<1x128xf32> to vector<64x128xf32>
    %352 = arith.addf %350, %351 : vector<64x128xf32>
    %c1_263 = arith.constant 1 : index
    %c0_264 = arith.constant 0 : index
    %c0_265 = arith.constant 0 : index
    %353 = vector.load %arg9[%c1_263, %c0_264, %c0_265] : memref<2x64x128xf32, #tpu.memory_space<vmem>>, vector<1x64x128xf32>
    %354 = vector.shape_cast %353 : vector<1x64x128xf32> to vector<64x128xf32>
    %355 = vector.shape_cast %352 : vector<64x128xf32> to vector<1x64x128xf32>
    tpu.vector_store %arg9[%c1_263, %c0_264, %c0_265], %355 {strides = array<i32>} : memref<2x64x128xf32, #tpu.memory_space<vmem>>, vector<1x64x128xf32>,
    return
  }
  func.func @transform_0(%arg0: i32) -> (i32, i32) {
    %c0_i32 = arith.constant 0 : i32
    %c0_i32_0 = arith.constant 0 : i32
    %c0_i32_1 = arith.constant 0 : i32
    return %c0_i32, %c0_i32_0 : i32, i32
  }
  func.func @transform_1(%arg0: i32) -> (i32, i32) {
    %c0_i32 = arith.constant 0 : i32
    %c0_i32_0 = arith.constant 0 : i32
    %c0_i32_1 = arith.constant 0 : i32
    return %c0_i32, %c0_i32_0 : i32, i32
  }
  func.func @transform_2(%arg0: i32) -> (i32, i32) {
    %c0_i32 = arith.constant 0 : i32
    %c0_i32_0 = arith.constant 0 : i32
    %c0_i32_1 = arith.constant 0 : i32
    return %c0_i32, %c0_i32_0 : i32, i32
  }
  func.func @transform_3(%arg0: i32) -> (i32, i32) {
    %c0_i32 = arith.constant 0 : i32
    %c0_i32_0 = arith.constant 0 : i32
    %c0_i32_1 = arith.constant 0 : i32
    return %c0_i32, %c0_i32_0 : i32, i32
  }
  func.func @transform_4(%arg0: i32) -> (i32, i32, i32) {
    %c0_i32 = arith.constant 0 : i32
    %c0_i32_0 = arith.constant 0 : i32
    %c0_i32_1 = arith.constant 0 : i32
    return %arg0, %c0_i32, %c0_i32_0 : i32, i32, i32
  }
  func.func @transform_5(%arg0: i32) -> (i32, i32, i32) {
    %c0_i32 = arith.constant 0 : i32
    %c0_i32_0 = arith.constant 0 : i32
    %c0_i32_1 = arith.constant 0 : i32
    return %arg0, %c0_i32, %c0_i32_0 : i32, i32, i32
  }
  func.func @transform_6(%arg0: i32) -> (i32, i32, i32) {
    %c0_i32 = arith.constant 0 : i32
    %c0_i32_0 = arith.constant 0 : i32
    %c0_i32_1 = arith.constant 0 : i32
    return %arg0, %c0_i32, %c0_i32_0 : i32, i32, i32
  }
  func.func @transform_7(%arg0: i32) -> (i32, i32, i32) {
    %c0_i32 = arith.constant 0 : i32
    %c0_i32_0 = arith.constant 0 : i32
    %c0_i32_1 = arith.constant 0 : i32
    return %arg0, %c0_i32, %c0_i32_0 : i32, i32, i32
  }
  func.func @transform_8(%arg0: i32) -> (i32, i32, i32) {
    %c0_i32 = arith.constant 0 : i32
    %c0_i32_0 = arith.constant 0 : i32
    %c0_i32_1 = arith.constant 0 : i32
    return %arg0, %c0_i32, %c0_i32_0 : i32, i32, i32
  }
}

</mosaic_0001>

<llo_original>
// kernel: muse_generator_forward.1
$region0: #{muse_generator_forward.1}
  #allocation0 [shape = 'u32[]', space=smem, size = 0x4, offset = 0x4, fixed_abs, tag = 'smem constant byte address 0x4 - core index']
  #allocation1 [shape = 'u32[144,128]{1,0:T(1,128)}', space=vmem, size = 0x12000, scoped, tag = 'internal scratch']
  %s0 = inlined_call_operand.vmem [shape: bf16[2,32], index: 0, kind: input, shape index: {}]
  %s1 = inlined_call_operand.vmem [shape: bf16[2,32], index: 1, kind: input, shape index: {}]
  %s2 = inlined_call_operand.hbm [shape: bf16[128,128], index: 2, kind: input, shape index: {}]
  %s3 = inlined_call_operand.vmem [shape: f32[8,128], index: 3, kind: input, shape index: {}]
  %s4 = inlined_call_operand.vmem [shape: bf16[4,2,32], index: 4, kind: input, shape index: {}]
  %s5 = inlined_call_operand.vmem [shape: bf16[4,2,32], index: 5, kind: input, shape index: {}]
  %s6 = inlined_call_operand.hbm [shape: bf16[4,672,128], index: 6, kind: input, shape index: {}]
  %s7 = inlined_call_operand.hbm [shape: f32[4,16,128], index: 7, kind: input, shape index: {}]
  %s8 = inlined_call_operand.vmem [shape: f32[4,64,128], index: 8, kind: output, shape index: {}]
  %s9 = sld [smem:[#allocation0]]
  $region77: #{muse_generator_forward.1} parent=0
    _
  %s11 = ssub.s32 1, %s9
  %s12 = scalar_select 0, %s11, %s9
  $region1: #{muse_generator_forward.1} parent=0
    #allocation2 [shape = 'u8[32768]{0}', space=vmem, size = 0x8000, scoped, tag = 'input window, operand 2, single buffered']
    #allocation3 [shape = 's32[2]{0}', space=sflag, size = 0x8, scoped, tag = 'scoped memory for muse_generator_forward.1']
    #allocation4 [shape = 'u8[688128]{0}', space=vmem, size = 0xa8000, scoped, tag = 'input window, operand 6']
    #allocation5 [shape = 's32[2]{0}', space=sflag, size = 0x8, scoped, tag = 'scoped memory for muse_generator_forward.1']
    #allocation6 [shape = 'u8[32768]{0}', space=vmem, size = 0x8000, scoped, tag = 'input window, operand 7']
    %13 = vsyncpa [#allocation3], 0
    %14 = vsyncpa [#allocation5], 0
    %s15 = scalar_lea.sflag [#allocation5], 1
    %16 = vsyncpa %s15, 0
    loop: start=0, step=1, limit=4
    $region2: #{muse_generator_forward.1} parent=1 // loop_pre_header
      _
    $region3: #{muse_generator_forward.1} parent=1 // loop_header
      %s18 = sphi 0, %s22
      %p19 = scmp.ge.s32.totalorder %s18, 4
      %s26 = sphi 0, %s26
      %s28 = sphi 0, %s26
      %s29 = sphi 0, %s28
      %s43 = sphi 0, %s29
      %s47 = sphi 0, %s47
      %s49 = sphi 0, %s47
      %s50 = sphi 0, %s49
      %s64 = sphi 0, %s50
      %s68 = sphi 0, %s68
      %s70 = sphi 0, %s68
      %s71 = sphi 0, %s70
      %s85 = sphi 0, %s71
      %s89 = sphi 0, %s89
      %s91 = sphi 0, %s89
      %s92 = sphi 0, %s91
      %s106 = sphi 0, %s92
      %s112 = sphi 0, %s114
      %s115 = sphi 0, %s112
      %s116 = sphi 0, %s115
      %s132 = sphi 0, %s116
      %s138 = sphi 0, %s140
      %s141 = sphi 0, %s138
      %s142 = sphi 0, %s141
      %s158 = sphi 0, %s142
      %s164 = sphi 0, %s166
      %s167 = sphi 0, %s164
      %s168 = sphi 0, %s167
      %s184 = sphi 0, %s168
      %s190 = sphi 0, %s192
      %s193 = sphi 0, %s190
      %s194 = sphi 0, %s193
      %s210 = sphi 0, %s194
      %s216 = sphi 0, %s218
      %s219 = sphi 0, %s216
      %s220 = sphi 0, %s219
      %s236 = sphi 0, %s220
    $region4: #{muse_generator_forward.1} parent=1 // loop_header_branch
      %21 = sbr.rel (%p19) target = $region8
    $region5: #{muse_generator_forward.1} parent=1 // loop_body
      %s23 = ssub.s32 %s18, 1
      %s24 = ssub.s32 %s18, 2
      %s25 = sadd.s32 %s18, 1
      %s27 = sadd.s32 %s26, 1
      %p30 = scmp.eq.s32.totalorder %s18, 1
      %p31 = scmp.ne.s32.totalorder %s26, %s28
      %p32 = scmp.eq.s32.totalorder %s18, 0
      %p33 = por %p31, %p32
      %p34 = scmp.ne.s32.totalorder %s26, %s28
      %p35 = scmp.eq.s32.totalorder %s23, 1
      %p36 = por %p34, %p35
      %p37 = scmp.ne.s32.totalorder %s28, %s29
      %p38 = scmp.eq.s32.totalorder %s23, 0
      %p39 = por %p37, %p38
      %p40 = scmp.ne.s32.totalorder %s28, %s29
      %p41 = scmp.eq.s32.totalorder %s24, 1
      %p42 = por %p40, %p41
      %p44 = scmp.ne.s32.totalorder %s29, %s43
      %p45 = scmp.eq.s32.totalorder %s24, 0
      %p46 = por %p44, %p45
      %s48 = sadd.s32 %s47, 1
      %p51 = scmp.eq.s32.totalorder %s18, 1
      %p52 = scmp.ne.s32.totalorder %s47, %s49
      %p53 = scmp.eq.s32.totalorder %s18, 0
      %p54 = por %p52, %p53
      %p55 = scmp.ne.s32.totalorder %s47, %s49
      %p56 = scmp.eq.s32.totalorder %s23, 1
      %p57 = por %p55, %p56
      %p58 = scmp.ne.s32.totalorder %s49, %s50
      %p59 = scmp.eq.s32.totalorder %s23, 0
      %p60 = por %p58, %p59
      %p61 = scmp.ne.s32.totalorder %s49, %s50
      %p62 = scmp.eq.s32.totalorder %s24, 1
      %p63 = por %p61, %p62
      %p65 = scmp.ne.s32.totalorder %s50, %s64
      %p66 = scmp.eq.s32.totalorder %s24, 0
      %p67 = por %p65, %p66
      %s69 = sadd.s32 %s68, 1
      %p72 = scmp.eq.s32.totalorder %s18, 1
      %p73 = scmp.ne.s32.totalorder %s68, %s70
      %p74 = scmp.eq.s32.totalorder %s18, 0
      %p75 = por %p73, %p74
      %p76 = scmp.ne.s32.totalorder %s68, %s70
      %p77 = scmp.eq.s32.totalorder %s23, 1
      %p78 = por %p76, %p77
      %p79 = scmp.ne.s32.totalorder %s70, %s71
      %p80 = scmp.eq.s32.totalorder %s23, 0
      %p81 = por %p79, %p80
      %p82 = scmp.ne.s32.totalorder %s70, %s71
      %p83 = scmp.eq.s32.totalorder %s24, 1
      %p84 = por %p82, %p83
      %p86 = scmp.ne.s32.totalorder %s71, %s85
      %p87 = scmp.eq.s32.totalorder %s24, 0
      %p88 = por %p86, %p87
      %s90 = sadd.s32 %s89, 1
      %p93 = scmp.eq.s32.totalorder %s18, 1
      %p94 = scmp.ne.s32.totalorder %s89, %s91
      %p95 = scmp.eq.s32.totalorder %s18, 0
      %p96 = por %p94, %p95
      %p97 = scmp.ne.s32.totalorder %s89, %s91
      %p98 = scmp.eq.s32.totalorder %s23, 1
      %p99 = por %p97, %p98
      %p100 = scmp.ne.s32.totalorder %s91, %s92
      %p101 = scmp.eq.s32.totalorder %s23, 0
      %p102 = por %p100, %p101
      %p103 = scmp.ne.s32.totalorder %s91, %s92
      %p104 = scmp.eq.s32.totalorder %s24, 1
      %p105 = por %p103, %p104
      %p107 = scmp.ne.s32.totalorder %s92, %s106
      %p108 = scmp.eq.s32.totalorder %s24, 0
      %p109 = por %p107, %p108
      %s110 = ssub.s32 %s18, %s25
      %p111 = scmp.eq.s32.totalorder %s110, 0
      %s113 = sadd.s32 %s112, 1
      %s114 = scalar_select %p111, %s112, %s113
      %p117 = pneg %p111
      %p118 = scmp.eq.s32.totalorder %s18, 1
      %p119 = por %p117, %p118
      %p120 = scmp.ne.s32.totalorder %s112, %s115
      %p121 = scmp.eq.s32.totalorder %s18, 0
      %p122 = por %p120, %p121
      %p123 = scmp.ne.s32.totalorder %s112, %s115
      %p124 = scmp.eq.s32.totalorder %s23, 1
      %p125 = por %p123, %p124
      %p126 = scmp.ne.s32.totalorder %s115, %s116
      %p127 = scmp.eq.s32.totalorder %s23, 0
      %p128 = por %p126, %p127
      %p129 = scmp.ne.s32.totalorder %s115, %s116
      %p130 = scmp.eq.s32.totalorder %s24, 1
      %p131 = por %p129, %p130
      %p133 = scmp.ne.s32.totalorder %s116, %s132
      %p134 = scmp.eq.s32.totalorder %s24, 0
      %p135 = por %p133, %p134
      %s136 = ssub.s32 %s18, %s25
      %p137 = scmp.eq.s32.totalorder %s136, 0
      %s139 = sadd.s32 %s138, 1
      %s140 = scalar_select %p137, %s138, %s139
      %p143 = pneg %p137
      %p144 = scmp.eq.s32.totalorder %s18, 1
      %p145 = por %p143, %p144
      %p146 = scmp.ne.s32.totalorder %s138, %s141
      %p147 = scmp.eq.s32.totalorder %s18, 0
      %p148 = por %p146, %p147
      %p149 = scmp.ne.s32.totalorder %s138, %s141
      %p150 = scmp.eq.s32.totalorder %s23, 1
      %p151 = por %p149, %p150
      %p152 = scmp.ne.s32.totalorder %s141, %s142
      %p153 = scmp.eq.s32.totalorder %s23, 0
      %p154 = por %p152, %p153
      %p155 = scmp.ne.s32.totalorder %s141, %s142
      %p156 = scmp.eq.s32.totalorder %s24, 1
      %p157 = por %p155, %p156
      %p159 = scmp.ne.s32.totalorder %s142, %s158
      %p160 = scmp.eq.s32.totalorder %s24, 0
      %p161 = por %p159, %p160
      %s162 = ssub.s32 %s18, %s25
      %p163 = scmp.eq.s32.totalorder %s162, 0
      %s165 = sadd.s32 %s164, 1
      %s166 = scalar_select %p163, %s164, %s165
      %p169 = pneg %p163
      %p170 = scmp.eq.s32.totalorder %s18, 1
      %p171 = por %p169, %p170
      %p172 = scmp.ne.s32.totalorder %s164, %s167
      %p173 = scmp.eq.s32.totalorder %s18, 0
      %p174 = por %p172, %p173
      %p175 = scmp.ne.s32.totalorder %s164, %s167
      %p176 = scmp.eq.s32.totalorder %s23, 1
      %p177 = por %p175, %p176
      %p178 = scmp.ne.s32.totalorder %s167, %s168
      %p179 = scmp.eq.s32.totalorder %s23, 0
      %p180 = por %p178, %p179
      %p181 = scmp.ne.s32.totalorder %s167, %s168
      %p182 = scmp.eq.s32.totalorder %s24, 1
      %p183 = por %p181, %p182
      %p185 = scmp.ne.s32.totalorder %s168, %s184
      %p186 = scmp.eq.s32.totalorder %s24, 0
      %p187 = por %p185, %p186
      %s188 = ssub.s32 %s18, %s25
      %p189 = scmp.eq.s32.totalorder %s188, 0
      %s191 = sadd.s32 %s190, 1
      %s192 = scalar_select %p189, %s190, %s191
      %p195 = pneg %p189
      %p196 = scmp.eq.s32.totalorder %s18, 1
      %p197 = por %p195, %p196
      %p198 = scmp.ne.s32.totalorder %s190, %s193
      %p199 = scmp.eq.s32.totalorder %s18, 0
      %p200 = por %p198, %p199
      %p201 = scmp.ne.s32.totalorder %s190, %s193
      %p202 = scmp.eq.s32.totalorder %s23, 1
      %p203 = por %p201, %p202
      %p204 = scmp.ne.s32.totalorder %s193, %s194
      %p205 = scmp.eq.s32.totalorder %s23, 0
      %p206 = por %p204, %p205
      %p207 = scmp.ne.s32.totalorder %s193, %s194
      %p208 = scmp.eq.s32.totalorder %s24, 1
      %p209 = por %p207, %p208
      %p211 = scmp.ne.s32.totalorder %s194, %s210
      %p212 = scmp.eq.s32.totalorder %s24, 0
      %p213 = por %p211, %p212
      %s214 = ssub.s32 %s18, %s25
      %p215 = scmp.eq.s32.totalorder %s214, 0
      %s217 = sadd.s32 %s216, 1
      %s218 = scalar_select %p215, %s216, %s217
      %p221 = pneg %p215
      %p222 = scmp.eq.s32.totalorder %s18, 1
      %p223 = por %p221, %p222
      %p224 = scmp.ne.s32.totalorder %s216, %s219
      %p225 = scmp.eq.s32.totalorder %s18, 0
      %p226 = por %p224, %p225
      %p227 = scmp.ne.s32.totalorder %s216, %s219
      %p228 = scmp.eq.s32.totalorder %s23, 1
      %p229 = por %p227, %p228
      %p230 = scmp.ne.s32.totalorder %s219, %s220
      %p231 = scmp.eq.s32.totalorder %s23, 0
      %p232 = por %p230, %p231
      %p233 = scmp.ne.s32.totalorder %s219, %s220
      %p234 = scmp.eq.s32.totalorder %s24, 1
      %p235 = por %p233, %p234
      %p237 = scmp.ne.s32.totalorder %s220, %s236
      %p238 = scmp.eq.s32.totalorder %s24, 0
      %p239 = por %p237, %p238
      %p240 = scmp.le.s32.totalorder 1, %s18
      %p241 = scmp.lt.s32.totalorder %s18, 3
      %p242 = pnand %p240, %p241
      %p243 = pneg %p242
      // Predicated region
      $region9: #{muse_generator_forward.1} parent=5 // pred_check
        _
      $region10: #{muse_generator_forward.1} parent=5 // pred_check_branch
        %245 = sbr.rel (%p242) target = $region12
      $region11: #{muse_generator_forward.1} parent=5 // pred_region
        %s246 = ssub.s32 %s18, 1
        // Predicated region
        $region13: #{muse_generator_forward.1} parent=11 // pred_check
          %p247 = pneg %p39
        $region14: #{muse_generator_forward.1} parent=11 // pred_check_branch
          %249 = sbr.rel (%p247) target = $region16
        $region15: #{muse_generator_forward.1} parent=11 // pred_region
          _
        $region16: #{muse_generator_forward.1} parent=11 // pred_fallthru
          _
        // Predicated region
        $region17: #{muse_generator_forward.1} parent=11 // pred_check
          %p250 = pneg %p60
        $region18: #{muse_generator_forward.1} parent=11 // pred_check_branch
          %252 = sbr.rel (%p250) target = $region20
        $region19: #{muse_generator_forward.1} parent=11 // pred_region
          _
        $region20: #{muse_generator_forward.1} parent=11 // pred_fallthru
          _
        // Predicated region
        $region21: #{muse_generator_forward.1} parent=11 // pred_check
          %p253 = pneg %p81
        $region22: #{muse_generator_forward.1} parent=11 // pred_check_branch
          %255 = sbr.rel (%p253) target = $region24
        $region23: #{muse_generator_forward.1} parent=11 // pred_region
          %s257 = ssub.s32 1024, 1024
          %258 = vsyncadd [#allocation3], %s257
          %s259 = sshll.u32 [#allocation2], 4
          %s260 = int_to_ptr.vmem [resolvable:$true] %s259
          %265 = dma.hbm_to_vmem [thread:$0]  %s2, 1024, %s260, [#allocation3], 64, 64, 4
        $region24: #{muse_generator_forward.1} parent=11 // pred_fallthru
          _
        // Predicated region
        $region25: #{muse_generator_forward.1} parent=11 // pred_check
          %p266 = pneg %p102
        $region26: #{muse_generator_forward.1} parent=11 // pred_check_branch
          %268 = sbr.rel (%p266) target = $region28
        $region27: #{muse_generator_forward.1} parent=11 // pred_region
          _
        $region28: #{muse_generator_forward.1} parent=11 // pred_fallthru
          _
      $region12: #{muse_generator_forward.1} parent=5 // pred_fallthru
        _
      %p269 = scmp.lt.s32.totalorder %s18, 2
      // Predicated region
      $region29: #{muse_generator_forward.1} parent=5 // pred_check
        %p270 = pneg %p269
      $region30: #{muse_generator_forward.1} parent=5 // pred_check_branch
        %272 = sbr.rel (%p270) target = $region32
      $region31: #{muse_generator_forward.1} parent=5 // pred_region
        // Predicated region
        $region33: #{muse_generator_forward.1} parent=31 // pred_check
          %p273 = pneg %p122
        $region34: #{muse_generator_forward.1} parent=31 // pred_check_branch
          %275 = sbr.rel (%p273) target = $region36
        $region35: #{muse_generator_forward.1} parent=31 // pred_region
          %s276 = smul.u32 2, %s18
          %p277 = scmp.lt.s32.totalorder %s276, 3
          %s278 = scalar_select %p277, %s276, 3
          %s279 = scalar_lea.vmem %s4, %s278
          %s280 = smul.u32 2, %s18
        $region36: #{muse_generator_forward.1} parent=31 // pred_fallthru
          _
        // Predicated region
        $region37: #{muse_generator_forward.1} parent=31 // pred_check
          %p281 = pneg %p148
        $region38: #{muse_generator_forward.1} parent=31 // pred_check_branch
          %283 = sbr.rel (%p281) target = $region40
        $region39: #{muse_generator_forward.1} parent=31 // pred_region
          %s284 = smul.u32 2, %s18
          %p285 = scmp.lt.s32.totalorder %s284, 3
          %s286 = scalar_select %p285, %s284, 3
          %s287 = scalar_lea.vmem %s5, %s286
          %s288 = smul.u32 2, %s18
        $region40: #{muse_generator_forward.1} parent=31 // pred_fallthru
          _
        // Predicated region
        $region41: #{muse_generator_forward.1} parent=31 // pred_check
          %p289 = pneg %p174
        $region42: #{muse_generator_forward.1} parent=31 // pred_check_branch
          %291 = sbr.rel (%p289) target = $region44
        $region43: #{muse_generator_forward.1} parent=31 // pred_region
          %s292 = sand.u32 %s18, 1
          %s293 = scalar_lea.sflag [#allocation5], %s292
          %s294 = sand.u32 %s164, 1
          %s295 = smul.addr %s294, 672
          %s296 = scalar_lea.vmem [#allocation4], %s295
          %s297 = smul.u32 2, %s18
          %s299 = ssub.s32 10752, 10752
          %300 = vsyncadd %s293, %s299
          %s301 = smul.addr %s297, 84
          %s302 = smul.addr %s301, 64
          %s303 = scalar_lea.hbm %s6, %s302
          %s304 = sshll.u32 %s296, 4
          %s305 = int_to_ptr.vmem [resolvable:$true] %s304
          %310 = dma.hbm_to_vmem [thread:$0]  %s303, 10752, %s305, %s293, 64, 64, 4
        $region44: #{muse_generator_forward.1} parent=31 // pred_fallthru
          _
        // Predicated region
        $region45: #{muse_generator_forward.1} parent=31 // pred_check
          %p311 = pneg %p200
        $region46: #{muse_generator_forward.1} parent=31 // pred_check_branch
          %313 = sbr.rel (%p311) target = $region48
        $region47: #{muse_generator_forward.1} parent=31 // pred_region
          %s314 = sand.u32 %s18, 1
          %s315 = scalar_lea.sflag [#allocation5], %s314
          %s316 = sand.u32 %s190, 1
          %s317 = smul.addr %s316, 32
          %s318 = scalar_lea.vmem [#allocation6], %s317
          %s319 = smul.u32 2, %s18
          %s321 = ssub.s32 512, 512
          %322 = vsyncadd %s315, %s321
          %s323 = smul.addr %s319, 2
          %s324 = smul.addr %s323, 128
          %s325 = scalar_lea.hbm %s7, %s324
          %s326 = sshll.u32 %s318, 4
          %s327 = int_to_ptr.vmem [resolvable:$true] %s326
          %332 = dma.hbm_to_vmem [thread:$0]  %s325, 512, %s327, %s315, 128, 128, 8
        $region48: #{muse_generator_forward.1} parent=31 // pred_fallthru
          _
      $region32: #{muse_generator_forward.1} parent=5 // pred_fallthru
        _
      %p333 = scmp.le.s32.totalorder 1, %s18
      %p334 = scmp.lt.s32.totalorder %s18, 3
      %p335 = pnand %p333, %p334
      %p336 = pneg %p335
      // Predicated region
      $region49: #{muse_generator_forward.1} parent=5 // pred_check
        _
      $region50: #{muse_generator_forward.1} parent=5 // pred_check_branch
        %338 = sbr.rel (%p335) target = $region52
      $region51: #{muse_generator_forward.1} parent=5 // pred_region
        %s339 = ssub.s32 %s18, 1
        // Predicated region
        $region53: #{muse_generator_forward.1} parent=51 // pred_check
          %p340 = pneg %p81
        $region54: #{muse_generator_forward.1} parent=51 // pred_check_branch
          %342 = sbr.rel (%p340) target = $region56
        $region55: #{muse_generator_forward.1} parent=51 // pred_region
          %343 = dma.done [#allocation3], 1024
        $region56: #{muse_generator_forward.1} parent=51 // pred_fallthru
          _
        %s344 = sand.u32 %s23, 1
        %s345 = scalar_lea.sflag [#allocation5], %s344
        %s346 = sand.u32 %s167, 1
        %s347 = smul.addr %s346, 672
        %s348 = scalar_lea.vmem [#allocation4], %s347
        // Predicated region
        $region57: #{muse_generator_forward.1} parent=51 // pred_check
          %p349 = pneg %p180
        $region58: #{muse_generator_forward.1} parent=51 // pred_check_branch
          %351 = sbr.rel (%p349) target = $region60
        $region59: #{muse_generator_forward.1} parent=51 // pred_region
          %352 = dma.done %s345, 10752
        $region60: #{muse_generator_forward.1} parent=51 // pred_fallthru
          _
        %s353 = sand.u32 %s23, 1
        %s354 = scalar_lea.sflag [#allocation5], %s353
        %s355 = sand.u32 %s193, 1
        %s356 = smul.addr %s355, 32
        %s357 = scalar_lea.vmem [#allocation6], %s356
        // Predicated region
        $region61: #{muse_generator_forward.1} parent=51 // pred_check
          %p358 = pneg %p206
        $region62: #{muse_generator_forward.1} parent=51 // pred_check_branch
          %360 = sbr.rel (%p358) target = $region64
        $region63: #{muse_generator_forward.1} parent=51 // pred_region
          %361 = dma.done %s354, 512
        $region64: #{muse_generator_forward.1} parent=51 // pred_fallthru
          _
        %p362 = pneg %p39
        %p363 = pneg %p36
        %p364 = pneg %p60
        %p365 = pneg %p57
        %p366 = pneg %p81
        %p367 = pneg %p78
        %p368 = pneg %p102
        %p369 = pneg %p99
        %s370 = smul.u32 2, %s23
        %p371 = scmp.lt.s32.totalorder %s370, 3
        %s372 = scalar_select %p371, %s370, 3
        %s373 = scalar_lea.vmem %s4, %s372
        %p374 = pneg %p128
        %p375 = pneg %p125
        %s376 = smul.u32 2, %s23
        %p377 = scmp.lt.s32.totalorder %s376, 3
        %s378 = scalar_select %p377, %s376, 3
        %s379 = scalar_lea.vmem %s5, %s378
        %p380 = pneg %p154
        %p381 = pneg %p151
        %s382 = sand.u32 %s23, 1
        %s383 = scalar_lea.sflag [#allocation5], %s382
        %s384 = sand.u32 %s167, 1
        %s385 = smul.addr %s384, 672
        %s386 = scalar_lea.vmem [#allocation4], %s385
        %p387 = pneg %p180
        %p388 = pneg %p177
        %s389 = sand.u32 %s23, 1
        %s390 = scalar_lea.sflag [#allocation5], %s389
        %s391 = sand.u32 %s193, 1
        %s392 = smul.addr %s391, 32
        %s393 = scalar_lea.vmem [#allocation6], %s392
        %p394 = pneg %p206
        %p395 = pneg %p203
        %p396 = pneg %p232
        %p397 = pneg %p229
        %s398 = smul.u32 2, %s23
        %p399 = scmp.lt.s32.totalorder %s398, 3
        %s400 = scalar_select %p399, %s398, 3
        %s401 = smul.addr %s400, 8
        %s402 = smul.addr %s401, 8
        %s403 = scalar_lea.vmem %s8, %s402
        %s404 = smul.u32 2, %s23
        %p405 = scmp.lt.s32.totalorder %s404, 3
        %s406 = scalar_select %p405, %s404, 3
        %s407 = scalar_lea.vmem %s4, %s406
        %s408 = smul.u32 2, %s23
        %s409 = smul.u32 2, %s23
        %p410 = scmp.lt.s32.totalorder %s409, 3
        %s411 = scalar_select %p410, %s409, 3
        %s412 = scalar_lea.vmem %s5, %s411
        %s413 = smul.u32 2, %s23
        %s414 = smul.u32 2, %s23
        %s415 = smul.u32 2, %s23
        %s416 = smul.u32 2, %s23
        %p417 = scmp.lt.s32.totalorder %s416, 3
        %s418 = scalar_select %p417, %s416, 3
        %s419 = smul.addr %s418, 8
        %s420 = smul.addr %s419, 8
        %s421 = scalar_lea.vmem %s8, %s420
        %s422 = smul.u32 2, %s23
        %v424 = vld [vmem:[%s0] sm:$0x1]
        %v425 = vld [vmem:[%s1] sm:$0x1]
        %v426 = vld [vmem:[#allocation2] sm:$0xf]
        %v427 = vld [vmem:[#allocation2 + $0x4] sm:$0xf]
        %v428 = vld [vmem:[#allocation2 + $0x8] sm:$0xf]
        %v429 = vld [vmem:[#allocation2 + $0xc] sm:$0xf]
        %v430 = vld [vmem:[%s3] sm:$0x1]
        %v431 = vlaneseq
        %v432 = vshrl.u32 %v431, 7
        %v433 = vsub.s32 0, %v432
        %v434 = vrot.slane %v430, %v433
        %v439 = vunpack.c.l.b16 %v426
        %v440 = vunpack.c.l.b16 %v427
        %v441 = vunpack.c.l.b16 %v428
        %v442 = vunpack.c.l.b16 %v429
        %v443 = vpack.c.b16 %v440, %v439
        %v444 = vpack.c.b16 %v442, %v441
        %vm447 = vcmask 261120
        %v449 = vsel %vm447, %v424, 0
        %451 = vmatprep.subr.bf16.mxu0 0
        %452 = vmatpush1.bf16.msra.mxu0 0
        %453 = vmatprep.subr.bf16.mxu0 0
        %454 = vmatpush1.bf16.msra.mxu0 0
        %455 = vmatprep.subr.bf16.mxu0 0
        %456 = vmatpush1.bf16.msra.mxu0 0
        %457 = vmatprep.subr.bf16.mxu0 0
        %458 = vmatpush1.bf16.msra.mxu0 0
        %459 = vmatprep.subr.bf16.mxu0 0
        %460 = vmatpush1.bf16.msra.mxu0 0
        %461 = vmatprep.subr.bf16.mxu0 0
        %462 = vmatpush1.bf16.msra.mxu0 0
        %463 = vmatprep.subr.bf16.mxu0 0
        %464 = vmatpush1.bf16.msra.mxu0 %v444
        %465 = vmatprep.subr.bf16.mxu0 0
        %466 = vmatpush1.bf16.msra.mxu0 %v443
        %467 = vmatprep.subr.bf16.mxu0 0
        %468 = vmatpush2.bf16.msra.mxu0 0
        %469 = vmatprep.subr.bf16.mxu0 0
        %470 = vmatpush2.bf16.msra.mxu0 0
        %471 = vmatprep.subr.bf16.mxu0 0
        %472 = vmatpush2.bf16.msra.mxu0 0
        %473 = vmatprep.subr.bf16.mxu0 0
        %474 = vmatpush2.bf16.msra.mxu0 0
        %475 = vmatprep.subr.bf16.mxu0 0
        %476 = vmatpush2.bf16.msra.mxu0 0
        %477 = vmatprep.subr.bf16.mxu0 0
        %478 = vmatpush2.bf16.msra.mxu0 0
        %479 = vmatprep.subr.bf16.mxu0 0
        %480 = vmatpush2.bf16.msra.mxu0 0
        %481 = vmatprep.subr.bf16.mxu0 0
        %482 = vmatpush2.bf16.msra.mxu0 0
        %483 = vmatprep.mubr.bf16.mxu0 0
        %484 = vmatmul.mubr.bf16.gmra.mxu0 %v449
        %v485 = vpop.f32.mrf.mxu0
        %v486 = vadd.f32 %v434, %v485
        %v487 = vpop.f32.mrf.mxu0
        %v488 = vpop.f32.mrf.mxu0
        %v489 = vpop.f32.mrf.mxu0
        %490 = vdwg.mxu0
        %v491 = vmax.f32 %v486, 0.0
        %v492 = vpack.c.bf16 %v491, %v491
        %v493 = vld [vmem:[#allocation2 + $0x10] sm:$0xf]
        %v494 = vld [vmem:[#allocation2 + $0x14] sm:$0xf]
        %v495 = vld [vmem:[#allocation2 + $0x18] sm:$0xf]
        %v496 = vld [vmem:[#allocation2 + $0x1c] sm:$0xf]
        %v501 = vunpack.c.l.b16 %v493
        %v502 = vunpack.c.l.b16 %v494
        %v503 = vunpack.c.l.b16 %v495
        %v504 = vunpack.c.l.b16 %v496
        %v505 = vpack.c.b16 %v502, %v501
        %v506 = vpack.c.b16 %v504, %v503
        %509 = vmatprep.subr.bf16.mxu0 0
        %510 = vmatpush1.bf16.msra.mxu0 0
        %511 = vmatprep.subr.bf16.mxu0 0
        %512 = vmatpush1.bf16.msra.mxu0 0
        %513 = vmatprep.subr.bf16.mxu0 0
        %514 = vmatpush1.bf16.msra.mxu0 0
        %515 = vmatprep.subr.bf16.mxu0 0
        %516 = vmatpush1.bf16.msra.mxu0 0
        %517 = vmatprep.subr.bf16.mxu0 0
        %518 = vmatpush1.bf16.msra.mxu0 0
        %519 = vmatprep.subr.bf16.mxu0 0
        %520 = vmatpush1.bf16.msra.mxu0 0
        %521 = vmatprep.subr.bf16.mxu0 0
        %522 = vmatpush1.bf16.msra.mxu0 %v506
        %523 = vmatprep.subr.bf16.mxu0 0
        %524 = vmatpush1.bf16.msra.mxu0 %v505
        %525 = vmatprep.subr.bf16.mxu0 0
        %526 = vmatpush2.bf16.msra.mxu0 0
        %527 = vmatprep.subr.bf16.mxu0 0
        %528 = vmatpush2.bf16.msra.mxu0 0
        %529 = vmatprep.subr.bf16.mxu0 0
        %530 = vmatpush2.bf16.msra.mxu0 0
        %531 = vmatprep.subr.bf16.mxu0 0
        %532 = vmatpush2.bf16.msra.mxu0 0
        %533 = vmatprep.subr.bf16.mxu0 0
        %534 = vmatpush2.bf16.msra.mxu0 0
        %535 = vmatprep.subr.bf16.mxu0 0
        %536 = vmatpush2.bf16.msra.mxu0 0
        %537 = vmatprep.subr.bf16.mxu0 0
        %538 = vmatpush2.bf16.msra.mxu0 0
        %539 = vmatprep.subr.bf16.mxu0 0
        %540 = vmatpush2.bf16.msra.mxu0 0
        %541 = vmatprep.mubr.bf16.mxu0 0
        %542 = vmatmul.mubr.bf16.gmra.mxu0 %v449
        %v543 = vpop.f32.mrf.mxu0
        %v544 = vadd.f32 %v434, %v543
        %v545 = vpop.f32.mrf.mxu0
        %v546 = vpop.f32.mrf.mxu0
        %v547 = vpop.f32.mrf.mxu0
        %548 = vdwg.mxu0
        %v549 = vmax.f32 %v544, 0.0
        %v550 = vpack.c.bf16 %v549, %v549
        %v552 = vrot.slane %v550, 7
        %vm553 = vcmask 1040384
        %v556 = vsel %vm553, %v492, %v552
        %v557 = vld [vmem:[#allocation2 + $0x20] sm:$0xf]
        %v558 = vld [vmem:[#allocation2 + $0x24] sm:$0xf]
        %v559 = vld [vmem:[#allocation2 + $0x28] sm:$0xf]
        %v560 = vld [vmem:[#allocation2 + $0x2c] sm:$0xf]
        %v561 = vld [vmem:[#allocation2 + $0x30] sm:$0xf]
        %v562 = vld [vmem:[#allocation2 + $0x34] sm:$0xf]
        %v563 = vld [vmem:[#allocation2 + $0x38] sm:$0xf]
        %v564 = vld [vmem:[#allocation2 + $0x3c] sm:$0xf]
        %v565 = vld [vmem:[%s3 + $0x1] sm:$0x1]
        %v566 = vlaneseq
        %v567 = vshrl.u32 %v566, 7
        %v568 = vsub.s32 0, %v567
        %v569 = vrot.slane %v565, %v568
        %v578 = vunpack.c.l.b16 %v557
        %v579 = vunpack.c.l.b16 %v558
        %v580 = vunpack.c.l.b16 %v559
        %v581 = vunpack.c.l.b16 %v560
        %v582 = vunpack.c.l.b16 %v561
        %v583 = vunpack.c.l.b16 %v562
        %v584 = vunpack.c.l.b16 %v563
        %v585 = vunpack.c.l.b16 %v564
        %v586 = vpack.c.b16 %v579, %v578
        %v587 = vpack.c.b16 %v581, %v580
        %v588 = vpack.c.b16 %v583, %v582
        %v589 = vpack.c.b16 %v585, %v584
        %vm594 = vcmask 523264
        %v595 = vsel %vm594, %v556, 0
        %597 = vmatprep.subr.bf16.mxu0 0
        %598 = vmatpush1.bf16.msra.mxu0 0
        %599 = vmatprep.subr.bf16.mxu0 0
        %600 = vmatpush1.bf16.msra.mxu0 0
        %601 = vmatprep.subr.bf16.mxu0 0
        %602 = vmatpush1.bf16.msra.mxu0 0
        %603 = vmatprep.subr.bf16.mxu0 0
        %604 = vmatpush1.bf16.msra.mxu0 0
        %605 = vmatprep.subr.bf16.mxu0 0
        %606 = vmatpush1.bf16.msra.mxu0 %v589
        %607 = vmatprep.subr.bf16.mxu0 0
        %608 = vmatpush1.bf16.msra.mxu0 %v588
        %609 = vmatprep.subr.bf16.mxu0 0
        %610 = vmatpush1.bf16.msra.mxu0 %v587
        %611 = vmatprep.subr.bf16.mxu0 0
        %612 = vmatpush1.bf16.msra.mxu0 %v586
        %613 = vmatprep.subr.bf16.mxu0 0
        %614 = vmatpush2.bf16.msra.mxu0 0
        %615 = vmatprep.subr.bf16.mxu0 0
        %616 = vmatpush2.bf16.msra.mxu0 0
        %617 = vmatprep.subr.bf16.mxu0 0
        %618 = vmatpush2.bf16.msra.mxu0 0
        %619 = vmatprep.subr.bf16.mxu0 0
        %620 = vmatpush2.bf16.msra.mxu0 0
        %621 = vmatprep.subr.bf16.mxu0 0
        %622 = vmatpush2.bf16.msra.mxu0 0
        %623 = vmatprep.subr.bf16.mxu0 0
        %624 = vmatpush2.bf16.msra.mxu0 0
        %625 = vmatprep.subr.bf16.mxu0 0
        %626 = vmatpush2.bf16.msra.mxu0 0
        %627 = vmatprep.subr.bf16.mxu0 0
        %628 = vmatpush2.bf16.msra.mxu0 0
        %629 = vmatprep.mubr.bf16.mxu0 0
        %630 = vmatmul.mubr.bf16.gmra.mxu0 %v595
        %v631 = vpop.f32.mrf.mxu0
        %v632 = vadd.f32 %v569, %v631
        %v633 = vpop.f32.mrf.mxu0
        %v634 = vpop.f32.mrf.mxu0
        %v635 = vpop.f32.mrf.mxu0
        %636 = vdwg.mxu0
        %v637 = vmax.f32 %v632, 0.0
        %v638 = vpack.c.bf16 %v637, %v637
        %v640 = vcombine.low %v425, %v425
        %v642 = vunpack.c.l.s4 1966171168
        %v643 = vunpack.c.0.s8 %v642
        %v644 = vlaneseq
        %v645 = vshrl.u32 %v644, 7
        %v646 = vsub.s32 %v643, %v645
        %v647 = vrot.slane %v640, %v646
        %v649 = vunpack.c.l.s4 1966171168
        %v650 = vunpack.c.0.s8 %v649
        %v651 = vlaneseq
        %v652 = vshrl.u32 %v651, 7
        %v653 = vsub.s32 %v650, %v652
        %v654 = vrot.slane %v647, %v653
        %v657 = vsel %vm553, %v425, %v654
        %v658 = vld [vmem:[%s407] sm:$0x1]
        %v659 = vld [vmem:[%s412] sm:$0x1]
        %v661 = vcombine.low %v659, %v659
        %v663 = vunpack.c.l.s4 1966171168
        %v664 = vunpack.c.0.s8 %v663
        %v665 = vlaneseq
        %v666 = vshrl.u32 %v665, 7
        %v667 = vsub.s32 %v664, %v666
        %v668 = vrot.slane %v661, %v667
        %v670 = vunpack.c.l.s4 1966171168
        %v671 = vunpack.c.0.s8 %v670
        %v672 = vlaneseq
        %v673 = vshrl.u32 %v672, 7
        %v674 = vsub.s32 %v671, %v673
        %v675 = vrot.slane %v668, %v674
        %v678 = vsel %vm553, %v659, %v675
        %v679 = vld [vmem:[%s348] sm:$0xf]
        %v680 = vld [vmem:[%s348 + $0x4] sm:$0xf]
        %v681 = vld [vmem:[%s348 + $0x8] sm:$0xf]
        %v682 = vld [vmem:[%s348 + $0xc] sm:$0xf]
        %v683 = vld [vmem:[%s357] sm:$0x1]
        %v684 = vlaneseq
        %v685 = vshrl.u32 %v684, 7
        %v686 = vsub.s32 0, %v685
        %v687 = vrot.slane %v683, %v686
        %v692 = vunpack.c.l.b16 %v679
        %v693 = vunpack.c.l.b16 %v680
        %v694 = vunpack.c.l.b16 %v681
        %v695 = vunpack.c.l.b16 %v682
        %v696 = vpack.c.b16 %v693, %v692
        %v697 = vpack.c.b16 %v695, %v694
        %v701 = vsel %vm447, %v658, 0
        %703 = vmatprep.subr.bf16.mxu0 0
        %704 = vmatpush1.bf16.msra.mxu0 0
        %705 = vmatprep.subr.bf16.mxu0 0
        %706 = vmatpush1.bf16.msra.mxu0 0
        %707 = vmatprep.subr.bf16.mxu0 0
        %708 = vmatpush1.bf16.msra.mxu0 0
        %709 = vmatprep.subr.bf16.mxu0 0
        %710 = vmatpush1.bf16.msra.mxu0 0
        %711 = vmatprep.subr.bf16.mxu0 0
        %712 = vmatpush1.bf16.msra.mxu0 0
        %713 = vmatprep.subr.bf16.mxu0 0
        %714 = vmatpush1.bf16.msra.mxu0 0
        %715 = vmatprep.subr.bf16.mxu0 0
        %716 = vmatpush1.bf16.msra.mxu0 %v697
        %717 = vmatprep.subr.bf16.mxu0 0
        %718 = vmatpush1.bf16.msra.mxu0 %v696
        %719 = vmatprep.subr.bf16.mxu0 0
        %720 = vmatpush2.bf16.msra.mxu0 0
        %721 = vmatprep.subr.bf16.mxu0 0
        %722 = vmatpush2.bf16.msra.mxu0 0
        %723 = vmatprep.subr.bf16.mxu0 0
        %724 = vmatpush2.bf16.msra.mxu0 0
        %725 = vmatprep.subr.bf16.mxu0 0
        %726 = vmatpush2.bf16.msra.mxu0 0
        %727 = vmatprep.subr.bf16.mxu0 0
        %728 = vmatpush2.bf16.msra.mxu0 0
        %729 = vmatprep.subr.bf16.mxu0 0
        %730 = vmatpush2.bf16.msra.mxu0 0
        %731 = vmatprep.subr.bf16.mxu0 0
        %732 = vmatpush2.bf16.msra.mxu0 0
        %733 = vmatprep.subr.bf16.mxu0 0
        %734 = vmatpush2.bf16.msra.mxu0 0
        %735 = vmatprep.mubr.bf16.mxu0 0
        %736 = vmatmul.mubr.bf16.gmra.mxu0 %v701
        %v737 = vpop.f32.mrf.mxu0
        %v738 = vadd.f32 %v687, %v737
        %v739 = vpop.f32.mrf.mxu0
        %v740 = vpop.f32.mrf.mxu0
        %v741 = vpop.f32.mrf.mxu0
        %742 = vdwg.mxu0
        %v743 = vmax.f32 %v738, 0.0
        %v744 = vpack.c.bf16 %v743, %v743
        %v745 = vld [vmem:[%s348 + $0x10] sm:$0xf]
        %v746 = vld [vmem:[%s348 + $0x14] sm:$0xf]
        %v747 = vld [vmem:[%s348 + $0x18] sm:$0xf]
        %v748 = vld [vmem:[%s348 + $0x1c] sm:$0xf]
        %v753 = vunpack.c.l.b16 %v745
        %v754 = vunpack.c.l.b16 %v746
        %v755 = vunpack.c.l.b16 %v747
        %v756 = vunpack.c.l.b16 %v748
        %v757 = vpack.c.b16 %v754, %v753
        %v758 = vpack.c.b16 %v756, %v755
        %761 = vmatprep.subr.bf16.mxu0 0
        %762 = vmatpush1.bf16.msra.mxu0 0
        %763 = vmatprep.subr.bf16.mxu0 0
        %764 = vmatpush1.bf16.msra.mxu0 0
        %765 = vmatprep.subr.bf16.mxu0 0
        %766 = vmatpush1.bf16.msra.mxu0 0
        %767 = vmatprep.subr.bf16.mxu0 0
        %768 = vmatpush1.bf16.msra.mxu0 0
        %769 = vmatprep.subr.bf16.mxu0 0
        %770 = vmatpush1.bf16.msra.mxu0 0
        %771 = vmatprep.subr.bf16.mxu0 0
        %772 = vmatpush1.bf16.msra.mxu0 0
        %773 = vmatprep.subr.bf16.mxu0 0
        %774 = vmatpush1.bf16.msra.mxu0 %v758
        %775 = vmatprep.subr.bf16.mxu0 0
        %776 = vmatpush1.bf16.msra.mxu0 %v757
        %777 = vmatprep.subr.bf16.mxu0 0
        %778 = vmatpush2.bf16.msra.mxu0 0
        %779 = vmatprep.subr.bf16.mxu0 0
        %780 = vmatpush2.bf16.msra.mxu0 0
        %781 = vmatprep.subr.bf16.mxu0 0
        %782 = vmatpush2.bf16.msra.mxu0 0
        %783 = vmatprep.subr.bf16.mxu0 0
        %784 = vmatpush2.bf16.msra.mxu0 0
        %785 = vmatprep.subr.bf16.mxu0 0
        %786 = vmatpush2.bf16.msra.mxu0 0
        %787 = vmatprep.subr.bf16.mxu0 0
        %788 = vmatpush2.bf16.msra.mxu0 0
        %789 = vmatprep.subr.bf16.mxu0 0
        %790 = vmatpush2.bf16.msra.mxu0 0
        %791 = vmatprep.subr.bf16.mxu0 0
        %792 = vmatpush2.bf16.msra.mxu0 0
        %793 = vmatprep.mubr.bf16.mxu0 0
        %794 = vmatmul.mubr.bf16.gmra.mxu0 %v701
        %v795 = vpop.f32.mrf.mxu0
        %v796 = vadd.f32 %v687, %v795
        %v797 = vpop.f32.mrf.mxu0
        %v798 = vpop.f32.mrf.mxu0
        %v799 = vpop.f32.mrf.mxu0
        %800 = vdwg.mxu0
        %v801 = vmax.f32 %v796, 0.0
        %v802 = vpack.c.bf16 %v801, %v801
        %v804 = vrot.slane %v802, 7
        %v807 = vsel %vm553, %v744, %v804
        %v808 = vld [vmem:[%s348 + $0x20] sm:$0xf]
        %v809 = vld [vmem:[%s348 + $0x24] sm:$0xf]
        %v810 = vld [vmem:[%s348 + $0x28] sm:$0xf]
        %v811 = vld [vmem:[%s348 + $0x2c] sm:$0xf]
        %v812 = vld [vmem:[%s348 + $0x30] sm:$0xf]
        %v813 = vld [vmem:[%s348 + $0x34] sm:$0xf]
        %v814 = vld [vmem:[%s348 + $0x38] sm:$0xf]
        %v815 = vld [vmem:[%s348 + $0x3c] sm:$0xf]
        %v816 = vld [vmem:[%s357 + $0x1] sm:$0x1]
        %v817 = vlaneseq
        %v818 = vshrl.u32 %v817, 7
        %v819 = vsub.s32 0, %v818
        %v820 = vrot.slane %v816, %v819
        %v829 = vunpack.c.l.b16 %v808
        %v830 = vunpack.c.l.b16 %v809
        %v831 = vunpack.c.l.b16 %v810
        %v832 = vunpack.c.l.b16 %v811
        %v833 = vunpack.c.l.b16 %v812
        %v834 = vunpack.c.l.b16 %v813
        %v835 = vunpack.c.l.b16 %v814
        %v836 = vunpack.c.l.b16 %v815
        %v837 = vpack.c.b16 %v830, %v829
        %v838 = vpack.c.b16 %v832, %v831
        %v839 = vpack.c.b16 %v834, %v833
        %v840 = vpack.c.b16 %v836, %v835
        %v845 = vsel %vm594, %v807, 0
        %847 = vmatprep.subr.bf16.mxu0 0
        %848 = vmatpush1.bf16.msra.mxu0 0
        %849 = vmatprep.subr.bf16.mxu0 0
        %850 = vmatpush1.bf16.msra.mxu0 0
        %851 = vmatprep.subr.bf16.mxu0 0
        %852 = vmatpush1.bf16.msra.mxu0 0
        %853 = vmatprep.subr.bf16.mxu0 0
        %854 = vmatpush1.bf16.msra.mxu0 0
        %855 = vmatprep.subr.bf16.mxu0 0
        %856 = vmatpush1.bf16.msra.mxu0 %v840
        %857 = vmatprep.subr.bf16.mxu0 0
        %858 = vmatpush1.bf16.msra.mxu0 %v839
        %859 = vmatprep.subr.bf16.mxu0 0
        %860 = vmatpush1.bf16.msra.mxu0 %v838
        %861 = vmatprep.subr.bf16.mxu0 0
        %862 = vmatpush1.bf16.msra.mxu0 %v837
        %863 = vmatprep.subr.bf16.mxu0 0
        %864 = vmatpush2.bf16.msra.mxu0 0
        %865 = vmatprep.subr.bf16.mxu0 0
        %866 = vmatpush2.bf16.msra.mxu0 0
        %867 = vmatprep.subr.bf16.mxu0 0
        %868 = vmatpush2.bf16.msra.mxu0 0
        %869 = vmatprep.subr.bf16.mxu0 0
        %870 = vmatpush2.bf16.msra.mxu0 0
        %871 = vmatprep.subr.bf16.mxu0 0
        %872 = vmatpush2.bf16.msra.mxu0 0
        %873 = vmatprep.subr.bf16.mxu0 0
        %874 = vmatpush2.bf16.msra.mxu0 0
        %875 = vmatprep.subr.bf16.mxu0 0
        %876 = vmatpush2.bf16.msra.mxu0 0
        %877 = vmatprep.subr.bf16.mxu0 0
        %878 = vmatpush2.bf16.msra.mxu0 0
        %879 = vmatprep.mubr.bf16.mxu0 0
        %880 = vmatmul.mubr.bf16.gmra.mxu0 %v845
        %v881 = vpop.f32.mrf.mxu0
        %v882 = vadd.f32 %v820, %v881
        %v883 = vpop.f32.mrf.mxu0
        %v884 = vpop.f32.mrf.mxu0
        %v885 = vpop.f32.mrf.mxu0
        %886 = vdwg.mxu0
        %v887 = vmax.f32 %v882, 0.0
        %v888 = vpack.c.bf16 %v887, %v887
        %v889 = vld [vmem:[%s348 + $0x40] sm:$0xf]
        %v890 = vld [vmem:[%s348 + $0x44] sm:$0xf]
        %v891 = vld [vmem:[%s348 + $0x48] sm:$0xf]
        %v892 = vld [vmem:[%s348 + $0x4c] sm:$0xf]
        %v893 = vld [vmem:[%s348 + $0x50] sm:$0xf]
        %v894 = vld [vmem:[%s348 + $0x54] sm:$0xf]
        %v895 = vld [vmem:[%s348 + $0x58] sm:$0xf]
        %v896 = vld [vmem:[%s348 + $0x5c] sm:$0xf]
        %v901 = vunpack.c.l.b16 %v893
        %v902 = vunpack.c.l.b16 %v894
        %v903 = vunpack.c.l.b16 %v895
        %v904 = vunpack.c.l.b16 %v896
        %v905 = vpack.c.b16 %v902, %v901
        %v906 = vpack.c.b16 %v904, %v903
        %v909 = vsel %vm447, %v657, 0
        %911 = vmatprep.subr.bf16.mxu0 0
        %912 = vmatpush1.bf16.msra.mxu0 0
        %913 = vmatprep.subr.bf16.mxu0 0
        %914 = vmatpush1.bf16.msra.mxu0 0
        %915 = vmatprep.subr.bf16.mxu0 0
        %916 = vmatpush1.bf16.msra.mxu0 0
        %917 = vmatprep.subr.bf16.mxu0 0
        %918 = vmatpush1.bf16.msra.mxu0 0
        %919 = vmatprep.subr.bf16.mxu0 0
        %920 = vmatpush1.bf16.msra.mxu0 0
        %921 = vmatprep.subr.bf16.mxu0 0
        %922 = vmatpush1.bf16.msra.mxu0 0
        %923 = vmatprep.subr.bf16.mxu0 0
        %924 = vmatpush1.bf16.msra.mxu0 %v906
        %925 = vmatprep.subr.bf16.mxu0 0
        %926 = vmatpush1.bf16.msra.mxu0 %v905
        %927 = vmatprep.subr.bf16.mxu0 0
        %928 = vmatpush2.bf16.msra.mxu0 0
        %929 = vmatprep.subr.bf16.mxu0 0
        %930 = vmatpush2.bf16.msra.mxu0 0
        %931 = vmatprep.subr.bf16.mxu0 0
        %932 = vmatpush2.bf16.msra.mxu0 0
        %933 = vmatprep.subr.bf16.mxu0 0
        %934 = vmatpush2.bf16.msra.mxu0 0
        %935 = vmatprep.subr.bf16.mxu0 0
        %936 = vmatpush2.bf16.msra.mxu0 0
        %937 = vmatprep.subr.bf16.mxu0 0
        %938 = vmatpush2.bf16.msra.mxu0 0
        %939 = vmatprep.subr.bf16.mxu0 0
        %940 = vmatpush2.bf16.msra.mxu0 0
        %941 = vmatprep.subr.bf16.mxu0 0
        %942 = vmatpush2.bf16.msra.mxu0 0
        %943 = vmatprep.mubr.bf16.mxu0 0
        %944 = vmatmul.mubr.bf16.gmra.mxu0 %v909
        %v945 = vpop.f32.mrf.mxu0
        %v946 = vadd.f32 0.0, %v945
        %v947 = vpop.f32.mrf.mxu0
        %v948 = vpop.f32.mrf.mxu0
        %v949 = vpop.f32.mrf.mxu0
        %950 = vdwg.mxu0
        %v955 = vunpack.c.l.b16 %v889
        %v956 = vunpack.c.l.b16 %v890
        %v957 = vunpack.c.l.b16 %v891
        %v958 = vunpack.c.l.b16 %v892
        %v959 = vpack.c.b16 %v956, %v955
        %v960 = vpack.c.b16 %v958, %v957
        %v964 = vsel %vm447, %v638, 0
        %966 = vmatprep.subr.bf16.mxu0 0
        %967 = vmatpush1.bf16.msra.mxu0 0
        %968 = vmatprep.subr.bf16.mxu0 0
        %969 = vmatpush1.bf16.msra.mxu0 0
        %970 = vmatprep.subr.bf16.mxu0 0
        %971 = vmatpush1.bf16.msra.mxu0 0
        %972 = vmatprep.subr.bf16.mxu0 0
        %973 = vmatpush1.bf16.msra.mxu0 0
        %974 = vmatprep.subr.bf16.mxu0 0
        %975 = vmatpush1.bf16.msra.mxu0 0
        %976 = vmatprep.subr.bf16.mxu0 0
        %977 = vmatpush1.bf16.msra.mxu0 0
        %978 = vmatprep.subr.bf16.mxu0 0
        %979 = vmatpush1.bf16.msra.mxu0 %v960
        %980 = vmatprep.subr.bf16.mxu0 0
        %981 = vmatpush1.bf16.msra.mxu0 %v959
        %982 = vmatprep.subr.bf16.mxu0 0
        %983 = vmatpush2.bf16.msra.mxu0 0
        %984 = vmatprep.subr.bf16.mxu0 0
        %985 = vmatpush2.bf16.msra.mxu0 0
        %986 = vmatprep.subr.bf16.mxu0 0
        %987 = vmatpush2.bf16.msra.mxu0 0
        %988 = vmatprep.subr.bf16.mxu0 0
        %989 = vmatpush2.bf16.msra.mxu0 0
        %990 = vmatprep.subr.bf16.mxu0 0
        %991 = vmatpush2.bf16.msra.mxu0 0
        %992 = vmatprep.subr.bf16.mxu0 0
        %993 = vmatpush2.bf16.msra.mxu0 0
        %994 = vmatprep.subr.bf16.mxu0 0
        %995 = vmatpush2.bf16.msra.mxu0 0
        %996 = vmatprep.subr.bf16.mxu0 0
        %997 = vmatpush2.bf16.msra.mxu0 0
        %998 = vmatprep.mubr.bf16.mxu0 0
        %999 = vmatmul.mubr.bf16.gmra.mxu0 %v964
        %v1000 = vpop.f32.mrf.mxu0
        %v1001 = vadd.f32 %v946, %v1000
        %v1002 = vpop.f32.mrf.mxu0
        %v1003 = vpop.f32.mrf.mxu0
        %v1004 = vpop.f32.mrf.mxu0
        %1005 = vdwg.mxu0
        %v1006 = vld [vmem:[%s348 + $0x60] sm:$0xf]
        %v1007 = vld [vmem:[%s348 + $0x64] sm:$0xf]
        %v1008 = vld [vmem:[%s348 + $0x68] sm:$0xf]
        %v1009 = vld [vmem:[%s348 + $0x6c] sm:$0xf]
        %v1014 = vunpack.c.l.b16 %v1006
        %v1015 = vunpack.c.l.b16 %v1007
        %v1016 = vunpack.c.l.b16 %v1008
        %v1017 = vunpack.c.l.b16 %v1009
        %v1018 = vpack.c.b16 %v1015, %v1014
        %v1019 = vpack.c.b16 %v1017, %v1016
        %v1023 = vsel %vm447, %v888, 0
        %1025 = vmatprep.subr.bf16.mxu0 0
        %1026 = vmatpush1.bf16.msra.mxu0 0
        %1027 = vmatprep.subr.bf16.mxu0 0
        %1028 = vmatpush1.bf16.msra.mxu0 0
        %1029 = vmatprep.subr.bf16.mxu0 0
        %1030 = vmatpush1.bf16.msra.mxu0 0
        %1031 = vmatprep.subr.bf16.mxu0 0
        %1032 = vmatpush1.bf16.msra.mxu0 0
        %1033 = vmatprep.subr.bf16.mxu0 0
        %1034 = vmatpush1.bf16.msra.mxu0 0
        %1035 = vmatprep.subr.bf16.mxu0 0
        %1036 = vmatpush1.bf16.msra.mxu0 0
        %1037 = vmatprep.subr.bf16.mxu0 0
        %1038 = vmatpush1.bf16.msra.mxu0 %v1019
        %1039 = vmatprep.subr.bf16.mxu0 0
        %1040 = vmatpush1.bf16.msra.mxu0 %v1018
        %1041 = vmatprep.subr.bf16.mxu0 0
        %1042 = vmatpush2.bf16.msra.mxu0 0
        %1043 = vmatprep.subr.bf16.mxu0 0
        %1044 = vmatpush2.bf16.msra.mxu0 0
        %1045 = vmatprep.subr.bf16.mxu0 0
        %1046 = vmatpush2.bf16.msra.mxu0 0
        %1047 = vmatprep.subr.bf16.mxu0 0
        %1048 = vmatpush2.bf16.msra.mxu0 0
        %1049 = vmatprep.subr.bf16.mxu0 0
        %1050 = vmatpush2.bf16.msra.mxu0 0
        %1051 = vmatprep.subr.bf16.mxu0 0
        %1052 = vmatpush2.bf16.msra.mxu0 0
        %1053 = vmatprep.subr.bf16.mxu0 0
        %1054 = vmatpush2.bf16.msra.mxu0 0
        %1055 = vmatprep.subr.bf16.mxu0 0
        %1056 = vmatpush2.bf16.msra.mxu0 0
        %1057 = vmatprep.mubr.bf16.mxu0 0
        %1058 = vmatmul.mubr.bf16.gmra.mxu0 %v1023
        %v1059 = vpop.f32.mrf.mxu0
        %v1060 = vadd.f32 0.0, %v1059
        %v1061 = vpop.f32.mrf.mxu0
        %v1062 = vpop.f32.mrf.mxu0
        %v1063 = vpop.f32.mrf.mxu0
        %1064 = vdwg.mxu0
        %v1065 = vadd.f32 %v1001, %v1060
        %v1066 = vld [vmem:[%s348 + $0x70] sm:$0xf]
        %v1067 = vld [vmem:[%s348 + $0x74] sm:$0xf]
        %v1068 = vld [vmem:[%s348 + $0x78] sm:$0xf]
        %v1069 = vld [vmem:[%s348 + $0x7c] sm:$0xf]
        %v1074 = vunpack.c.l.b16 %v1066
        %v1075 = vunpack.c.l.b16 %v1067
        %v1076 = vunpack.c.l.b16 %v1068
        %v1077 = vunpack.c.l.b16 %v1069
        %v1078 = vpack.c.b16 %v1075, %v1074
        %v1079 = vpack.c.b16 %v1077, %v1076
        %v1082 = vsel %vm447, %v678, 0
        %1084 = vmatprep.subr.bf16.mxu0 0
        %1085 = vmatpush1.bf16.msra.mxu0 0
        %1086 = vmatprep.subr.bf16.mxu0 0
        %1087 = vmatpush1.bf16.msra.mxu0 0
        %1088 = vmatprep.subr.bf16.mxu0 0
        %1089 = vmatpush1.bf16.msra.mxu0 0
        %1090 = vmatprep.subr.bf16.mxu0 0
        %1091 = vmatpush1.bf16.msra.mxu0 0
        %1092 = vmatprep.subr.bf16.mxu0 0
        %1093 = vmatpush1.bf16.msra.mxu0 0
        %1094 = vmatprep.subr.bf16.mxu0 0
        %1095 = vmatpush1.bf16.msra.mxu0 0
        %1096 = vmatprep.subr.bf16.mxu0 0
        %1097 = vmatpush1.bf16.msra.mxu0 %v1079
        %1098 = vmatprep.subr.bf16.mxu0 0
        %1099 = vmatpush1.bf16.msra.mxu0 %v1078
        %1100 = vmatprep.subr.bf16.mxu0 0
        %1101 = vmatpush2.bf16.msra.mxu0 0
        %1102 = vmatprep.subr.bf16.mxu0 0
        %1103 = vmatpush2.bf16.msra.mxu0 0
        %1104 = vmatprep.subr.bf16.mxu0 0
        %1105 = vmatpush2.bf16.msra.mxu0 0
        %1106 = vmatprep.subr.bf16.mxu0 0
        %1107 = vmatpush2.bf16.msra.mxu0 0
        %1108 = vmatprep.subr.bf16.mxu0 0
        %1109 = vmatpush2.bf16.msra.mxu0 0
        %1110 = vmatprep.subr.bf16.mxu0 0
        %1111 = vmatpush2.bf16.msra.mxu0 0
        %1112 = vmatprep.subr.bf16.mxu0 0
        %1113 = vmatpush2.bf16.msra.mxu0 0
        %1114 = vmatprep.subr.bf16.mxu0 0
        %1115 = vmatpush2.bf16.msra.mxu0 0
        %1116 = vmatprep.mubr.bf16.mxu0 0
        %1117 = vmatmul.mubr.bf16.gmra.mxu0 %v1082
        %v1118 = vpop.f32.mrf.mxu0
        %v1119 = vadd.f32 0.0, %v1118
        %v1120 = vpop.f32.mrf.mxu0
        %v1121 = vpop.f32.mrf.mxu0
        %v1122 = vpop.f32.mrf.mxu0
        %1123 = vdwg.mxu0
        %v1124 = vadd.f32 %v1065, %v1119
        %v1125 = vld [vmem:[%s357 + $0x2] sm:$0x1]
        %v1126 = vlaneseq
        %v1127 = vshrl.u32 %v1126, 7
        %v1128 = vsub.s32 0, %v1127
        %v1129 = vrot.slane %v1125, %v1128
        %v1130 = vadd.f32 %v1124, %v1129
        %v1131 = vmax.f32 %v1130, 0.0
        %v1132 = vpack.c.bf16 %v1131, %v1131
        %v1133 = vld [vmem:[%s348 + $0x80] sm:$0xf]
        %v1134 = vld [vmem:[%s348 + $0x84] sm:$0xf]
        %v1135 = vld [vmem:[%s348 + $0x88] sm:$0xf]
        %v1136 = vld [vmem:[%s348 + $0x8c] sm:$0xf]
        %v1137 = vld [vmem:[%s348 + $0x90] sm:$0xf]
        %v1138 = vld [vmem:[%s348 + $0x94] sm:$0xf]
        %v1139 = vld [vmem:[%s348 + $0x98] sm:$0xf]
        %v1140 = vld [vmem:[%s348 + $0x9c] sm:$0xf]
        %v1145 = vunpack.c.l.b16 %v1137
        %v1146 = vunpack.c.l.b16 %v1138
        %v1147 = vunpack.c.l.b16 %v1139
        %v1148 = vunpack.c.l.b16 %v1140
        %v1149 = vpack.c.b16 %v1146, %v1145
        %v1150 = vpack.c.b16 %v1148, %v1147
        %1153 = vmatprep.subr.bf16.mxu0 0
        %1154 = vmatpush1.bf16.msra.mxu0 0
        %1155 = vmatprep.subr.bf16.mxu0 0
        %1156 = vmatpush1.bf16.msra.mxu0 0
        %1157 = vmatprep.subr.bf16.mxu0 0
        %1158 = vmatpush1.bf16.msra.mxu0 0
        %1159 = vmatprep.subr.bf16.mxu0 0
        %1160 = vmatpush1.bf16.msra.mxu0 0
        %1161 = vmatprep.subr.bf16.mxu0 0
        %1162 = vmatpush1.bf16.msra.mxu0 0
        %1163 = vmatprep.subr.bf16.mxu0 0
        %1164 = vmatpush1.bf16.msra.mxu0 0
        %1165 = vmatprep.subr.bf16.mxu0 0
        %1166 = vmatpush1.bf16.msra.mxu0 %v1150
        %1167 = vmatprep.subr.bf16.mxu0 0
        %1168 = vmatpush1.bf16.msra.mxu0 %v1149
        %1169 = vmatprep.subr.bf16.mxu0 0
        %1170 = vmatpush2.bf16.msra.mxu0 0
        %1171 = vmatprep.subr.bf16.mxu0 0
        %1172 = vmatpush2.bf16.msra.mxu0 0
        %1173 = vmatprep.subr.bf16.mxu0 0
        %1174 = vmatpush2.bf16.msra.mxu0 0
        %1175 = vmatprep.subr.bf16.mxu0 0
        %1176 = vmatpush2.bf16.msra.mxu0 0
        %1177 = vmatprep.subr.bf16.mxu0 0
        %1178 = vmatpush2.bf16.msra.mxu0 0
        %1179 = vmatprep.subr.bf16.mxu0 0
        %1180 = vmatpush2.bf16.msra.mxu0 0
        %1181 = vmatprep.subr.bf16.mxu0 0
        %1182 = vmatpush2.bf16.msra.mxu0 0
        %1183 = vmatprep.subr.bf16.mxu0 0
        %1184 = vmatpush2.bf16.msra.mxu0 0
        %1185 = vmatprep.mubr.bf16.mxu0 0
        %1186 = vmatmul.mubr.bf16.gmra.mxu0 %v909
        %v1187 = vpop.f32.mrf.mxu0
        %v1188 = vadd.f32 0.0, %v1187
        %v1189 = vpop.f32.mrf.mxu0
        %v1190 = vpop.f32.mrf.mxu0
        %v1191 = vpop.f32.mrf.mxu0
        %1192 = vdwg.mxu0
        %v1197 = vunpack.c.l.b16 %v1133
        %v1198 = vunpack.c.l.b16 %v1134
        %v1199 = vunpack.c.l.b16 %v1135
        %v1200 = vunpack.c.l.b16 %v1136
        %v1201 = vpack.c.b16 %v1198, %v1197
        %v1202 = vpack.c.b16 %v1200, %v1199
        %1205 = vmatprep.subr.bf16.mxu0 0
        %1206 = vmatpush1.bf16.msra.mxu0 0
        %1207 = vmatprep.subr.bf16.mxu0 0
        %1208 = vmatpush1.bf16.msra.mxu0 0
        %1209 = vmatprep.subr.bf16.mxu0 0
        %1210 = vmatpush1.bf16.msra.mxu0 0
        %1211 = vmatprep.subr.bf16.mxu0 0
        %1212 = vmatpush1.bf16.msra.mxu0 0
        %1213 = vmatprep.subr.bf16.mxu0 0
        %1214 = vmatpush1.bf16.msra.mxu0 0
        %1215 = vmatprep.subr.bf16.mxu0 0
        %1216 = vmatpush1.bf16.msra.mxu0 0
        %1217 = vmatprep.subr.bf16.mxu0 0
        %1218 = vmatpush1.bf16.msra.mxu0 %v1202
        %1219 = vmatprep.subr.bf16.mxu0 0
        %1220 = vmatpush1.bf16.msra.mxu0 %v1201
        %1221 = vmatprep.subr.bf16.mxu0 0
        %1222 = vmatpush2.bf16.msra.mxu0 0
        %1223 = vmatprep.subr.bf16.mxu0 0
        %1224 = vmatpush2.bf16.msra.mxu0 0
        %1225 = vmatprep.subr.bf16.mxu0 0
        %1226 = vmatpush2.bf16.msra.mxu0 0
        %1227 = vmatprep.subr.bf16.mxu0 0
        %1228 = vmatpush2.bf16.msra.mxu0 0
        %1229 = vmatprep.subr.bf16.mxu0 0
        %1230 = vmatpush2.bf16.msra.mxu0 0
        %1231 = vmatprep.subr.bf16.mxu0 0
        %1232 = vmatpush2.bf16.msra.mxu0 0
        %1233 = vmatprep.subr.bf16.mxu0 0
        %1234 = vmatpush2.bf16.msra.mxu0 0
        %1235 = vmatprep.subr.bf16.mxu0 0
        %1236 = vmatpush2.bf16.msra.mxu0 0
        %1237 = vmatprep.mubr.bf16.mxu0 0
        %1238 = vmatmul.mubr.bf16.gmra.mxu0 %v964
        %v1239 = vpop.f32.mrf.mxu0
        %v1240 = vadd.f32 %v1188, %v1239
        %v1241 = vpop.f32.mrf.mxu0
        %v1242 = vpop.f32.mrf.mxu0
        %v1243 = vpop.f32.mrf.mxu0
        %1244 = vdwg.mxu0
        %v1245 = vld [vmem:[%s348 + $0xa0] sm:$0xf]
        %v1246 = vld [vmem:[%s348 + $0xa4] sm:$0xf]
        %v1247 = vld [vmem:[%s348 + $0xa8] sm:$0xf]
        %v1248 = vld [vmem:[%s348 + $0xac] sm:$0xf]
        %v1253 = vunpack.c.l.b16 %v1245
        %v1254 = vunpack.c.l.b16 %v1246
        %v1255 = vunpack.c.l.b16 %v1247
        %v1256 = vunpack.c.l.b16 %v1248
        %v1257 = vpack.c.b16 %v1254, %v1253
        %v1258 = vpack.c.b16 %v1256, %v1255
        %1261 = vmatprep.subr.bf16.mxu0 0
        %1262 = vmatpush1.bf16.msra.mxu0 0
        %1263 = vmatprep.subr.bf16.mxu0 0
        %1264 = vmatpush1.bf16.msra.mxu0 0
        %1265 = vmatprep.subr.bf16.mxu0 0
        %1266 = vmatpush1.bf16.msra.mxu0 0
        %1267 = vmatprep.subr.bf16.mxu0 0
        %1268 = vmatpush1.bf16.msra.mxu0 0
        %1269 = vmatprep.subr.bf16.mxu0 0
        %1270 = vmatpush1.bf16.msra.mxu0 0
        %1271 = vmatprep.subr.bf16.mxu0 0
        %1272 = vmatpush1.bf16.msra.mxu0 0
        %1273 = vmatprep.subr.bf16.mxu0 0
        %1274 = vmatpush1.bf16.msra.mxu0 %v1258
        %1275 = vmatprep.subr.bf16.mxu0 0
        %1276 = vmatpush1.bf16.msra.mxu0 %v1257
        %1277 = vmatprep.subr.bf16.mxu0 0
        %1278 = vmatpush2.bf16.msra.mxu0 0
        %1279 = vmatprep.subr.bf16.mxu0 0
        %1280 = vmatpush2.bf16.msra.mxu0 0
        %1281 = vmatprep.subr.bf16.mxu0 0
        %1282 = vmatpush2.bf16.msra.mxu0 0
        %1283 = vmatprep.subr.bf16.mxu0 0
        %1284 = vmatpush2.bf16.msra.mxu0 0
        %1285 = vmatprep.subr.bf16.mxu0 0
        %1286 = vmatpush2.bf16.msra.mxu0 0
        %1287 = vmatprep.subr.bf16.mxu0 0
        %1288 = vmatpush2.bf16.msra.mxu0 0
        %1289 = vmatprep.subr.bf16.mxu0 0
        %1290 = vmatpush2.bf16.msra.mxu0 0
        %1291 = vmatprep.subr.bf16.mxu0 0
        %1292 = vmatpush2.bf16.msra.mxu0 0
        %1293 = vmatprep.mubr.bf16.mxu0 0
        %1294 = vmatmul.mubr.bf16.gmra.mxu0 %v1023
        %v1295 = vpop.f32.mrf.mxu0
        %v1296 = vadd.f32 0.0, %v1295
        %v1297 = vpop.f32.mrf.mxu0
        %v1298 = vpop.f32.mrf.mxu0
        %v1299 = vpop.f32.mrf.mxu0
        %1300 = vdwg.mxu0
        %v1301 = vadd.f32 %v1240, %v1296
        %v1302 = vld [vmem:[%s348 + $0xb0] sm:$0xf]
        %v1303 = vld [vmem:[%s348 + $0xb4] sm:$0xf]
        %v1304 = vld [vmem:[%s348 + $0xb8] sm:$0xf]
        %v1305 = vld [vmem:[%s348 + $0xbc] sm:$0xf]
        %v1310 = vunpack.c.l.b16 %v1302
        %v1311 = vunpack.c.l.b16 %v1303
        %v1312 = vunpack.c.l.b16 %v1304
        %v1313 = vunpack.c.l.b16 %v1305
        %v1314 = vpack.c.b16 %v1311, %v1310
        %v1315 = vpack.c.b16 %v1313, %v1312
        %1318 = vmatprep.subr.bf16.mxu0 0
        %1319 = vmatpush1.bf16.msra.mxu0 0
        %1320 = vmatprep.subr.bf16.mxu0 0
        %1321 = vmatpush1.bf16.msra.mxu0 0
        %1322 = vmatprep.subr.bf16.mxu0 0
        %1323 = vmatpush1.bf16.msra.mxu0 0
        %1324 = vmatprep.subr.bf16.mxu0 0
        %1325 = vmatpush1.bf16.msra.mxu0 0
        %1326 = vmatprep.subr.bf16.mxu0 0
        %1327 = vmatpush1.bf16.msra.mxu0 0
        %1328 = vmatprep.subr.bf16.mxu0 0
        %1329 = vmatpush1.bf16.msra.mxu0 0
        %1330 = vmatprep.subr.bf16.mxu0 0
        %1331 = vmatpush1.bf16.msra.mxu0 %v1315
        %1332 = vmatprep.subr.bf16.mxu0 0
        %1333 = vmatpush1.bf16.msra.mxu0 %v1314
        %1334 = vmatprep.subr.bf16.mxu0 0
        %1335 = vmatpush2.bf16.msra.mxu0 0
        %1336 = vmatprep.subr.bf16.mxu0 0
        %1337 = vmatpush2.bf16.msra.mxu0 0
        %1338 = vmatprep.subr.bf16.mxu0 0
        %1339 = vmatpush2.bf16.msra.mxu0 0
        %1340 = vmatprep.subr.bf16.mxu0 0
        %1341 = vmatpush2.bf16.msra.mxu0 0
        %1342 = vmatprep.subr.bf16.mxu0 0
        %1343 = vmatpush2.bf16.msra.mxu0 0
        %1344 = vmatprep.subr.bf16.mxu0 0
        %1345 = vmatpush2.bf16.msra.mxu0 0
        %1346 = vmatprep.subr.bf16.mxu0 0
        %1347 = vmatpush2.bf16.msra.mxu0 0
        %1348 = vmatprep.subr.bf16.mxu0 0
        %1349 = vmatpush2.bf16.msra.mxu0 0
        %1350 = vmatprep.mubr.bf16.mxu0 0
        %1351 = vmatmul.mubr.bf16.gmra.mxu0 %v1082
        %v1352 = vpop.f32.mrf.mxu0
        %v1353 = vadd.f32 0.0, %v1352
        %v1354 = vpop.f32.mrf.mxu0
        %v1355 = vpop.f32.mrf.mxu0
        %v1356 = vpop.f32.mrf.mxu0
        %1357 = vdwg.mxu0
        %v1358 = vadd.f32 %v1301, %v1353
        %v1359 = vld [vmem:[%s357 + $0x3] sm:$0x1]
        %v1360 = vlaneseq
        %v1361 = vshrl.u32 %v1360, 7
        %v1362 = vsub.s32 0, %v1361
        %v1363 = vrot.slane %v1359, %v1362
        %v1364 = vadd.f32 %v1358, %v1363
        %v1365 = vmax.f32 %v1364, 0.0
        %v1366 = vpack.c.bf16 %v1365, %v1365
        %v1368 = vrot.slane %v1366, 6
        %vm1369 = vcmask 1041408
        %v1372 = vsel %vm1369, %v1132, %v1368
        %v1373 = vld [vmem:[%s348 + $0xc0] sm:$0xf]
        %v1374 = vld [vmem:[%s348 + $0xc4] sm:$0xf]
        %v1375 = vld [vmem:[%s348 + $0xc8] sm:$0xf]
        %v1376 = vld [vmem:[%s348 + $0xcc] sm:$0xf]
        %v1377 = vld [vmem:[%s357 + $0x4] sm:$0x1]
        %v1378 = vlaneseq
        %v1379 = vshrl.u32 %v1378, 7
        %v1380 = vsub.s32 0, %v1379
        %v1381 = vrot.slane %v1377, %v1380
        %v1386 = vunpack.c.l.b16 %v1373
        %v1387 = vunpack.c.l.b16 %v1374
        %v1388 = vunpack.c.l.b16 %v1375
        %v1389 = vunpack.c.l.b16 %v1376
        %v1390 = vpack.c.b16 %v1387, %v1386
        %v1391 = vpack.c.b16 %v1389, %v1388
        %v1394 = vsel %vm447, %v1372, 0
        %1396 = vmatprep.subr.bf16.mxu0 0
        %1397 = vmatpush1.bf16.msra.mxu0 0
        %1398 = vmatprep.subr.bf16.mxu0 0
        %1399 = vmatpush1.bf16.msra.mxu0 0
        %1400 = vmatprep.subr.bf16.mxu0 0
        %1401 = vmatpush1.bf16.msra.mxu0 0
        %1402 = vmatprep.subr.bf16.mxu0 0
        %1403 = vmatpush1.bf16.msra.mxu0 0
        %1404 = vmatprep.subr.bf16.mxu0 0
        %1405 = vmatpush1.bf16.msra.mxu0 0
        %1406 = vmatprep.subr.bf16.mxu0 0
        %1407 = vmatpush1.bf16.msra.mxu0 0
        %1408 = vmatprep.subr.bf16.mxu0 0
        %1409 = vmatpush1.bf16.msra.mxu0 %v1391
        %1410 = vmatprep.subr.bf16.mxu0 0
        %1411 = vmatpush1.bf16.msra.mxu0 %v1390
        %1412 = vmatprep.subr.bf16.mxu0 0
        %1413 = vmatpush2.bf16.msra.mxu0 0
        %1414 = vmatprep.subr.bf16.mxu0 0
        %1415 = vmatpush2.bf16.msra.mxu0 0
        %1416 = vmatprep.subr.bf16.mxu0 0
        %1417 = vmatpush2.bf16.msra.mxu0 0
        %1418 = vmatprep.subr.bf16.mxu0 0
        %1419 = vmatpush2.bf16.msra.mxu0 0
        %1420 = vmatprep.subr.bf16.mxu0 0
        %1421 = vmatpush2.bf16.msra.mxu0 0
        %1422 = vmatprep.subr.bf16.mxu0 0
        %1423 = vmatpush2.bf16.msra.mxu0 0
        %1424 = vmatprep.subr.bf16.mxu0 0
        %1425 = vmatpush2.bf16.msra.mxu0 0
        %1426 = vmatprep.subr.bf16.mxu0 0
        %1427 = vmatpush2.bf16.msra.mxu0 0
        %1428 = vmatprep.mubr.bf16.mxu0 0
        %1429 = vmatmul.mubr.bf16.gmra.mxu0 %v1394
        %v1430 = vpop.f32.mrf.mxu0
        %v1431 = vadd.f32 %v1381, %v1430
        %v1432 = vpop.f32.mrf.mxu0
        %v1433 = vpop.f32.mrf.mxu0
        %v1434 = vpop.f32.mrf.mxu0
        %1435 = vdwg.mxu0
        %v1436 = vmax.f32 %v1431, 0.0
        %v1437 = vpack.c.bf16 %v1436, %v1436
        %v1438 = vld [vmem:[%s348 + $0xd0] sm:$0xf]
        %v1439 = vld [vmem:[%s348 + $0xd4] sm:$0xf]
        %v1440 = vld [vmem:[%s348 + $0xd8] sm:$0xf]
        %v1441 = vld [vmem:[%s348 + $0xdc] sm:$0xf]
        %v1446 = vunpack.c.l.b16 %v1438
        %v1447 = vunpack.c.l.b16 %v1439
        %v1448 = vunpack.c.l.b16 %v1440
        %v1449 = vunpack.c.l.b16 %v1441
        %v1450 = vpack.c.b16 %v1447, %v1446
        %v1451 = vpack.c.b16 %v1449, %v1448
        %1454 = vmatprep.subr.bf16.mxu0 0
        %1455 = vmatpush1.bf16.msra.mxu0 0
        %1456 = vmatprep.subr.bf16.mxu0 0
        %1457 = vmatpush1.bf16.msra.mxu0 0
        %1458 = vmatprep.subr.bf16.mxu0 0
        %1459 = vmatpush1.bf16.msra.mxu0 0
        %1460 = vmatprep.subr.bf16.mxu0 0
        %1461 = vmatpush1.bf16.msra.mxu0 0
        %1462 = vmatprep.subr.bf16.mxu0 0
        %1463 = vmatpush1.bf16.msra.mxu0 0
        %1464 = vmatprep.subr.bf16.mxu0 0
        %1465 = vmatpush1.bf16.msra.mxu0 0
        %1466 = vmatprep.subr.bf16.mxu0 0
        %1467 = vmatpush1.bf16.msra.mxu0 %v1451
        %1468 = vmatprep.subr.bf16.mxu0 0
        %1469 = vmatpush1.bf16.msra.mxu0 %v1450
        %1470 = vmatprep.subr.bf16.mxu0 0
        %1471 = vmatpush2.bf16.msra.mxu0 0
        %1472 = vmatprep.subr.bf16.mxu0 0
        %1473 = vmatpush2.bf16.msra.mxu0 0
        %1474 = vmatprep.subr.bf16.mxu0 0
        %1475 = vmatpush2.bf16.msra.mxu0 0
        %1476 = vmatprep.subr.bf16.mxu0 0
        %1477 = vmatpush2.bf16.msra.mxu0 0
        %1478 = vmatprep.subr.bf16.mxu0 0
        %1479 = vmatpush2.bf16.msra.mxu0 0
        %1480 = vmatprep.subr.bf16.mxu0 0
        %1481 = vmatpush2.bf16.msra.mxu0 0
        %1482 = vmatprep.subr.bf16.mxu0 0
        %1483 = vmatpush2.bf16.msra.mxu0 0
        %1484 = vmatprep.subr.bf16.mxu0 0
        %1485 = vmatpush2.bf16.msra.mxu0 0
        %1486 = vmatprep.mubr.bf16.mxu0 0
        %1487 = vmatmul.mubr.bf16.gmra.mxu0 %v1394
        %v1488 = vpop.f32.mrf.mxu0
        %v1489 = vadd.f32 %v1381, %v1488
        %v1490 = vpop.f32.mrf.mxu0
        %v1491 = vpop.f32.mrf.mxu0
        %v1492 = vpop.f32.mrf.mxu0
        %1493 = vdwg.mxu0
        %v1494 = vmax.f32 %v1489, 0.0
        %v1495 = vpack.c.bf16 %v1494, %v1494
        %v1497 = vrot.slane %v1495, 4
        %vm1498 = vcmask 1043456
        %v1501 = vsel %vm1498, %v1437, %v1497
        %v1502 = vld [vmem:[%s348 + $0xe0] sm:$0xf]
        %v1503 = vld [vmem:[%s348 + $0xe4] sm:$0xf]
        %v1504 = vld [vmem:[%s348 + $0xe8] sm:$0xf]
        %v1505 = vld [vmem:[%s348 + $0xec] sm:$0xf]
        %v1506 = vld [vmem:[%s357 + $0x5] sm:$0x1]
        %v1507 = vlaneseq
        %v1508 = vshrl.u32 %v1507, 7
        %v1509 = vsub.s32 0, %v1508
        %v1510 = vrot.slane %v1506, %v1509
        %v1515 = vunpack.c.l.b16 %v1502
        %v1516 = vunpack.c.l.b16 %v1503
        %v1517 = vunpack.c.l.b16 %v1504
        %v1518 = vunpack.c.l.b16 %v1505
        %v1519 = vpack.c.b16 %v1516, %v1515
        %v1520 = vpack.c.b16 %v1518, %v1517
        %v1523 = vsel %vm447, %v1501, 0
        %1525 = vmatprep.subr.bf16.mxu0 0
        %1526 = vmatpush1.bf16.msra.mxu0 0
        %1527 = vmatprep.subr.bf16.mxu0 0
        %1528 = vmatpush1.bf16.msra.mxu0 0
        %1529 = vmatprep.subr.bf16.mxu0 0
        %1530 = vmatpush1.bf16.msra.mxu0 0
        %1531 = vmatprep.subr.bf16.mxu0 0
        %1532 = vmatpush1.bf16.msra.mxu0 0
        %1533 = vmatprep.subr.bf16.mxu0 0
        %1534 = vmatpush1.bf16.msra.mxu0 0
        %1535 = vmatprep.subr.bf16.mxu0 0
        %1536 = vmatpush1.bf16.msra.mxu0 0
        %1537 = vmatprep.subr.bf16.mxu0 0
        %1538 = vmatpush1.bf16.msra.mxu0 %v1520
        %1539 = vmatprep.subr.bf16.mxu0 0
        %1540 = vmatpush1.bf16.msra.mxu0 %v1519
        %1541 = vmatprep.subr.bf16.mxu0 0
        %1542 = vmatpush2.bf16.msra.mxu0 0
        %1543 = vmatprep.subr.bf16.mxu0 0
        %1544 = vmatpush2.bf16.msra.mxu0 0
        %1545 = vmatprep.subr.bf16.mxu0 0
        %1546 = vmatpush2.bf16.msra.mxu0 0
        %1547 = vmatprep.subr.bf16.mxu0 0
        %1548 = vmatpush2.bf16.msra.mxu0 0
        %1549 = vmatprep.subr.bf16.mxu0 0
        %1550 = vmatpush2.bf16.msra.mxu0 0
        %1551 = vmatprep.subr.bf16.mxu0 0
        %1552 = vmatpush2.bf16.msra.mxu0 0
        %1553 = vmatprep.subr.bf16.mxu0 0
        %1554 = vmatpush2.bf16.msra.mxu0 0
        %1555 = vmatprep.subr.bf16.mxu0 0
        %1556 = vmatpush2.bf16.msra.mxu0 0
        %1557 = vmatprep.mubr.bf16.mxu0 0
        %1558 = vmatmul.mubr.bf16.gmra.mxu0 %v1523
        %v1559 = vpop.f32.mrf.mxu0
        %v1560 = vadd.f32 %v1510, %v1559
        %v1561 = vpop.f32.mrf.mxu0
        %v1562 = vpop.f32.mrf.mxu0
        %v1563 = vadd.f32 %v1510, %v1562
        %v1564 = vpop.f32.mrf.mxu0
        %1565 = vdwg.mxu0
        %v1566 = vmax.f32 %v1560, 0.0
        %v1567 = vmax.f32 %v1563, 0.0
        %v1568 = vpack.c.bf16 %v1567, %v1566
        %v1569 = vld [vmem:[%s348 + $0xf0] sm:$0xf]
        %v1570 = vld [vmem:[%s348 + $0xf4] sm:$0xf]
        %v1571 = vld [vmem:[%s348 + $0xf8] sm:$0xf]
        %v1572 = vld [vmem:[%s348 + $0xfc] sm:$0xf]
        %v1577 = vunpack.c.l.b16 %v1569
        %v1578 = vunpack.c.l.b16 %v1570
        %v1579 = vunpack.c.l.b16 %v1571
        %v1580 = vunpack.c.l.b16 %v1572
        %v1581 = vpack.c.b16 %v1578, %v1577
        %v1582 = vpack.c.b16 %v1580, %v1579
        %1585 = vmatprep.subr.bf16.mxu0 0
        %1586 = vmatpush1.bf16.msra.mxu0 0
        %1587 = vmatprep.subr.bf16.mxu0 0
        %1588 = vmatpush1.bf16.msra.mxu0 0
        %1589 = vmatprep.subr.bf16.mxu0 0
        %1590 = vmatpush1.bf16.msra.mxu0 0
        %1591 = vmatprep.subr.bf16.mxu0 0
        %1592 = vmatpush1.bf16.msra.mxu0 0
        %1593 = vmatprep.subr.bf16.mxu0 0
        %1594 = vmatpush1.bf16.msra.mxu0 0
        %1595 = vmatprep.subr.bf16.mxu0 0
        %1596 = vmatpush1.bf16.msra.mxu0 0
        %1597 = vmatprep.subr.bf16.mxu0 0
        %1598 = vmatpush1.bf16.msra.mxu0 %v1582
        %1599 = vmatprep.subr.bf16.mxu0 0
        %1600 = vmatpush1.bf16.msra.mxu0 %v1581
        %1601 = vmatprep.subr.bf16.mxu0 0
        %1602 = vmatpush2.bf16.msra.mxu0 0
        %1603 = vmatprep.subr.bf16.mxu0 0
        %1604 = vmatpush2.bf16.msra.mxu0 0
        %1605 = vmatprep.subr.bf16.mxu0 0
        %1606 = vmatpush2.bf16.msra.mxu0 0
        %1607 = vmatprep.subr.bf16.mxu0 0
        %1608 = vmatpush2.bf16.msra.mxu0 0
        %1609 = vmatprep.subr.bf16.mxu0 0
        %1610 = vmatpush2.bf16.msra.mxu0 0
        %1611 = vmatprep.subr.bf16.mxu0 0
        %1612 = vmatpush2.bf16.msra.mxu0 0
        %1613 = vmatprep.subr.bf16.mxu0 0
        %1614 = vmatpush2.bf16.msra.mxu0 0
        %1615 = vmatprep.subr.bf16.mxu0 0
        %1616 = vmatpush2.bf16.msra.mxu0 0
        %1617 = vmatprep.mubr.bf16.mxu0 0
        %1618 = vmatmul.mubr.bf16.gmra.mxu0 %v1523
        %v1619 = vpop.f32.mrf.mxu0
        %v1620 = vadd.f32 %v1510, %v1619
        %v1621 = vpop.f32.mrf.mxu0
        %v1622 = vpop.f32.mrf.mxu0
        %v1623 = vadd.f32 %v1510, %v1622
        %v1624 = vpop.f32.mrf.mxu0
        %1625 = vdwg.mxu0
        %v1626 = vmax.f32 %v1620, 0.0
        %v1627 = vmax.f32 %v1623, 0.0
        %v1628 = vpack.c.bf16 %v1627, %v1626
        %v1629 = vld [vmem:[%s348 + $0x100] sm:$0xf]
        %v1630 = vld [vmem:[%s348 + $0x104] sm:$0xf]
        %v1631 = vld [vmem:[%s357 + $0x6] sm:$0x1]
        %v1632 = vlaneseq
        %v1633 = vshrl.u32 %v1632, 7
        %v1634 = vsub.s32 0, %v1633
        %v1635 = vrot.slane %v1631, %v1634
        %v1638 = vunpack.c.l.b16 %v1629
        %v1639 = vunpack.c.l.b16 %v1630
        %v1640 = vpack.c.b16 %v1639, %v1638
        %vm1642 = vcmask 130048
        %v1644 = vsel %vm1642, %v1568, 0
        %v1647 = vsel %vm1642, %v1628, 0
        %1649 = vmatprep.subr.bf16.mxu0 0
        %1650 = vmatpush1.bf16.msra.mxu0 0
        %1651 = vmatprep.subr.bf16.mxu0 0
        %1652 = vmatpush1.bf16.msra.mxu0 0
        %1653 = vmatprep.subr.bf16.mxu0 0
        %1654 = vmatpush1.bf16.msra.mxu0 0
        %1655 = vmatprep.subr.bf16.mxu0 0
        %1656 = vmatpush1.bf16.msra.mxu0 0
        %1657 = vmatprep.subr.bf16.mxu0 0
        %1658 = vmatpush1.bf16.msra.mxu0 0
        %1659 = vmatprep.subr.bf16.mxu0 0
        %1660 = vmatpush1.bf16.msra.mxu0 0
        %1661 = vmatprep.subr.bf16.mxu0 0
        %1662 = vmatpush1.bf16.msra.mxu0 0
        %1663 = vmatprep.subr.bf16.mxu0 0
        %1664 = vmatpush1.bf16.msra.mxu0 %v1640
        %1665 = vmatprep.subr.bf16.mxu0 0
        %1666 = vmatpush2.bf16.msra.mxu0 0
        %1667 = vmatprep.subr.bf16.mxu0 0
        %1668 = vmatpush2.bf16.msra.mxu0 0
        %1669 = vmatprep.subr.bf16.mxu0 0
        %1670 = vmatpush2.bf16.msra.mxu0 0
        %1671 = vmatprep.subr.bf16.mxu0 0
        %1672 = vmatpush2.bf16.msra.mxu0 0
        %1673 = vmatprep.subr.bf16.mxu0 0
        %1674 = vmatpush2.bf16.msra.mxu0 0
        %1675 = vmatprep.subr.bf16.mxu0 0
        %1676 = vmatpush2.bf16.msra.mxu0 0
        %1677 = vmatprep.subr.bf16.mxu0 0
        %1678 = vmatpush2.bf16.msra.mxu0 0
        %1679 = vmatprep.subr.bf16.mxu0 0
        %1680 = vmatpush2.bf16.msra.mxu0 0
        %1681 = vmatprep.mubr.bf16.mxu0 0
        %1682 = vmatmul.mubr.bf16.gmra.mxu0 %v1644
        %v1683 = vpop.f32.mrf.mxu0
        %v1684 = vadd.f32 %v1635, %v1683
        %v1685 = vpop.f32.mrf.mxu0
        %v1686 = vpop.f32.mrf.mxu0
        %v1687 = vadd.f32 %v1635, %v1686
        %v1688 = vpop.f32.mrf.mxu0
        %1689 = vmatprep.mubr.bf16.mxu0 0
        %1690 = vmatmul.mubr.bf16.gmra.mxu0 %v1647
        %v1691 = vpop.f32.mrf.mxu0
        %v1692 = vadd.f32 %v1635, %v1691
        %v1693 = vpop.f32.mrf.mxu0
        %v1694 = vpop.f32.mrf.mxu0
        %v1695 = vadd.f32 %v1635, %v1694
        %v1696 = vpop.f32.mrf.mxu0
        %1697 = vdwg.mxu0
        %v1698 = vmax.f32 %v1684, 0.0
        %v1699 = vmax.f32 %v1687, 0.0
        %v1700 = vmax.f32 %v1692, 0.0
        %v1701 = vmax.f32 %v1695, 0.0
        %v1702 = vpack.c.bf16 %v1699, %v1698
        %v1703 = vpack.c.bf16 %v1701, %v1700
        %v1704 = vld [vmem:[%s348 + $0x108] sm:$0xf]
        %v1705 = vld [vmem:[%s348 + $0x10c] sm:$0xf]
        %v1708 = vunpack.c.l.b16 %v1704
        %v1709 = vunpack.c.l.b16 %v1705
        %v1710 = vpack.c.b16 %v1709, %v1708
        %1712 = vmatprep.subr.bf16.mxu0 0
        %1713 = vmatpush1.bf16.msra.mxu0 0
        %1714 = vmatprep.subr.bf16.mxu0 0
        %1715 = vmatpush1.bf16.msra.mxu0 0
        %1716 = vmatprep.subr.bf16.mxu0 0
        %1717 = vmatpush1.bf16.msra.mxu0 0
        %1718 = vmatprep.subr.bf16.mxu0 0
        %1719 = vmatpush1.bf16.msra.mxu0 0
        %1720 = vmatprep.subr.bf16.mxu0 0
        %1721 = vmatpush1.bf16.msra.mxu0 0
        %1722 = vmatprep.subr.bf16.mxu0 0
        %1723 = vmatpush1.bf16.msra.mxu0 0
        %1724 = vmatprep.subr.bf16.mxu0 0
        %1725 = vmatpush1.bf16.msra.mxu0 0
        %1726 = vmatprep.subr.bf16.mxu0 0
        %1727 = vmatpush1.bf16.msra.mxu0 %v1710
        %1728 = vmatprep.subr.bf16.mxu0 0
        %1729 = vmatpush2.bf16.msra.mxu0 0
        %1730 = vmatprep.subr.bf16.mxu0 0
        %1731 = vmatpush2.bf16.msra.mxu0 0
        %1732 = vmatprep.subr.bf16.mxu0 0
        %1733 = vmatpush2.bf16.msra.mxu0 0
        %1734 = vmatprep.subr.bf16.mxu0 0
        %1735 = vmatpush2.bf16.msra.mxu0 0
        %1736 = vmatprep.subr.bf16.mxu0 0
        %1737 = vmatpush2.bf16.msra.mxu0 0
        %1738 = vmatprep.subr.bf16.mxu0 0
        %1739 = vmatpush2.bf16.msra.mxu0 0
        %1740 = vmatprep.subr.bf16.mxu0 0
        %1741 = vmatpush2.bf16.msra.mxu0 0
        %1742 = vmatprep.subr.bf16.mxu0 0
        %1743 = vmatpush2.bf16.msra.mxu0 0
        %1744 = vmatprep.mubr.bf16.mxu0 0
        %1745 = vmatmul.mubr.bf16.gmra.mxu0 %v1644
        %v1746 = vpop.f32.mrf.mxu0
        %v1747 = vadd.f32 %v1635, %v1746
        %v1748 = vpop.f32.mrf.mxu0
        %v1749 = vpop.f32.mrf.mxu0
        %v1750 = vadd.f32 %v1635, %v1749
        %v1751 = vpop.f32.mrf.mxu0
        %1752 = vmatprep.mubr.bf16.mxu0 0
        %1753 = vmatmul.mubr.bf16.gmra.mxu0 %v1647
        %v1754 = vpop.f32.mrf.mxu0
        %v1755 = vadd.f32 %v1635, %v1754
        %v1756 = vpop.f32.mrf.mxu0
        %v1757 = vpop.f32.mrf.mxu0
        %v1758 = vadd.f32 %v1635, %v1757
        %v1759 = vpop.f32.mrf.mxu0
        %1760 = vdwg.mxu0
        %v1761 = vmax.f32 %v1747, 0.0
        %v1762 = vmax.f32 %v1750, 0.0
        %v1763 = vmax.f32 %v1755, 0.0
        %v1764 = vmax.f32 %v1758, 0.0
        %v1765 = vpack.c.bf16 %v1762, %v1761
        %v1766 = vpack.c.bf16 %v1764, %v1763
        %v1767 = vld [vmem:[%s348 + $0x110] sm:$0xf]
        %v1768 = vld [vmem:[%s348 + $0x114] sm:$0xf]
        %v1769 = vld [vmem:[%s357 + $0x7] sm:$0x1]
        %v1770 = vlaneseq
        %v1771 = vshrl.u32 %v1770, 7
        %v1772 = vsub.s32 0, %v1771
        %v1773 = vrot.slane %v1769, %v1772
        %v1776 = vunpack.c.l.b16 %v1767
        %v1777 = vunpack.c.l.b16 %v1768
        %v1778 = vpack.c.b16 %v1777, %v1776
        %v1781 = vsel %vm1642, %v1702, 0
        %v1784 = vsel %vm1642, %v1703, 0
        %v1787 = vsel %vm1642, %v1765, 0
        %v1790 = vsel %vm1642, %v1766, 0
        %1792 = vmatprep.subr.bf16.mxu0 0
        %1793 = vmatpush1.bf16.msra.mxu0 0
        %1794 = vmatprep.subr.bf16.mxu0 0
        %1795 = vmatpush1.bf16.msra.mxu0 0
        %1796 = vmatprep.subr.bf16.mxu0 0
        %1797 = vmatpush1.bf16.msra.mxu0 0
        %1798 = vmatprep.subr.bf16.mxu0 0
        %1799 = vmatpush1.bf16.msra.mxu0 0
        %1800 = vmatprep.subr.bf16.mxu0 0
        %1801 = vmatpush1.bf16.msra.mxu0 0
        %1802 = vmatprep.subr.bf16.mxu0 0
        %1803 = vmatpush1.bf16.msra.mxu0 0
        %1804 = vmatprep.subr.bf16.mxu0 0
        %1805 = vmatpush1.bf16.msra.mxu0 0
        %1806 = vmatprep.subr.bf16.mxu0 0
        %1807 = vmatpush1.bf16.msra.mxu0 %v1778
        %1808 = vmatprep.subr.bf16.mxu0 0
        %1809 = vmatpush2.bf16.msra.mxu0 0
        %1810 = vmatprep.subr.bf16.mxu0 0
        %1811 = vmatpush2.bf16.msra.mxu0 0
        %1812 = vmatprep.subr.bf16.mxu0 0
        %1813 = vmatpush2.bf16.msra.mxu0 0
        %1814 = vmatprep.subr.bf16.mxu0 0
        %1815 = vmatpush2.bf16.msra.mxu0 0
        %1816 = vmatprep.subr.bf16.mxu0 0
        %1817 = vmatpush2.bf16.msra.mxu0 0
        %1818 = vmatprep.subr.bf16.mxu0 0
        %1819 = vmatpush2.bf16.msra.mxu0 0
        %1820 = vmatprep.subr.bf16.mxu0 0
        %1821 = vmatpush2.bf16.msra.mxu0 0
        %1822 = vmatprep.subr.bf16.mxu0 0
        %1823 = vmatpush2.bf16.msra.mxu0 0
        %1824 = vmatprep.mubr.bf16.mxu0 0
        %1825 = vmatmul.mubr.bf16.gmra.mxu0 %v1781
        %v1826 = vpop.f32.mrf.mxu0
        %v1827 = vadd.f32 %v1773, %v1826
        %v1828 = vpop.f32.mrf.mxu0
        %v1829 = vpop.f32.mrf.mxu0
        %v1830 = vadd.f32 %v1773, %v1829
        %v1831 = vpop.f32.mrf.mxu0
        %1832 = vmatprep.mubr.bf16.mxu0 0
        %1833 = vmatmul.mubr.bf16.gmra.mxu0 %v1784
        %v1834 = vpop.f32.mrf.mxu0
        %v1835 = vadd.f32 %v1773, %v1834
        %v1836 = vpop.f32.mrf.mxu0
        %v1837 = vpop.f32.mrf.mxu0
        %v1838 = vadd.f32 %v1773, %v1837
        %v1839 = vpop.f32.mrf.mxu0
        %1840 = vmatprep.mubr.bf16.mxu0 0
        %1841 = vmatmul.mubr.bf16.gmra.mxu0 %v1787
        %v1842 = vpop.f32.mrf.mxu0
        %v1843 = vadd.f32 %v1773, %v1842
        %v1844 = vpop.f32.mrf.mxu0
        %v1845 = vpop.f32.mrf.mxu0
        %v1846 = vadd.f32 %v1773, %v1845
        %v1847 = vpop.f32.mrf.mxu0
        %1848 = vmatprep.mubr.bf16.mxu0 0
        %1849 = vmatmul.mubr.bf16.gmra.mxu0 %v1790
        %v1850 = vpop.f32.mrf.mxu0
        %v1851 = vadd.f32 %v1773, %v1850
        %v1852 = vpop.f32.mrf.mxu0
        %v1853 = vpop.f32.mrf.mxu0
        %v1854 = vadd.f32 %v1773, %v1853
        %v1855 = vpop.f32.mrf.mxu0
        %1856 = vdwg.mxu0
        %v1857 = vmax.f32 %v1827, 0.0
        %v1858 = vmax.f32 %v1830, 0.0
        %v1859 = vmax.f32 %v1835, 0.0
        %v1860 = vmax.f32 %v1838, 0.0
        %v1861 = vmax.f32 %v1843, 0.0
        %v1862 = vmax.f32 %v1846, 0.0
        %v1863 = vmax.f32 %v1851, 0.0
        %v1864 = vmax.f32 %v1854, 0.0
        %v1865 = vpack.c.bf16 %v1858, %v1857
        %v1866 = vpack.c.bf16 %v1860, %v1859
        %v1867 = vpack.c.bf16 %v1862, %v1861
        %v1868 = vpack.c.bf16 %v1864, %v1863
        %v1869 = vld [vmem:[%s348 + $0x118] sm:$0xf]
        %v1870 = vld [vmem:[%s348 + $0x11c] sm:$0xf]
        %v1871 = vld [vmem:[%s348 + $0x120] sm:$0xf]
        %v1872 = vld [vmem:[%s348 + $0x124] sm:$0xf]
        %v1873 = vld [vmem:[%s348 + $0x128] sm:$0xf]
        %v1874 = vld [vmem:[%s348 + $0x12c] sm:$0xf]
        %v1875 = vld [vmem:[%s348 + $0x130] sm:$0xf]
        %v1876 = vld [vmem:[%s348 + $0x134] sm:$0xf]
        %v1877 = vld [vmem:[%s348 + $0x138] sm:$0xf]
        %v1878 = vld [vmem:[%s348 + $0x13c] sm:$0xf]
        %v1879 = vld [vmem:[%s348 + $0x140] sm:$0xf]
        %v1880 = vld [vmem:[%s348 + $0x144] sm:$0xf]
        %v1881 = vld [vmem:[%s348 + $0x148] sm:$0xf]
        %v1882 = vld [vmem:[%s348 + $0x14c] sm:$0xf]
        %v1883 = vld [vmem:[%s357 + $0x8] sm:$0x1]
        %v1884 = vlaneseq
        %v1885 = vshrl.u32 %v1884, 7
        %v1886 = vsub.s32 0, %v1885
        %v1887 = vrot.slane %v1883, %v1886
        %v1902 = vunpack.c.l.b16 %v1869
        %v1903 = vunpack.c.l.b16 %v1870
        %v1904 = vunpack.c.l.b16 %v1871
        %v1905 = vunpack.c.l.b16 %v1872
        %v1906 = vunpack.c.l.b16 %v1873
        %v1907 = vunpack.c.l.b16 %v1874
        %v1908 = vunpack.c.l.b16 %v1875
        %v1909 = vunpack.c.l.b16 %v1876
        %v1910 = vunpack.c.l.b16 %v1877
        %v1911 = vunpack.c.l.b16 %v1878
        %v1912 = vunpack.c.l.b16 %v1879
        %v1913 = vunpack.c.l.b16 %v1880
        %v1914 = vunpack.c.l.b16 %v1881
        %v1915 = vunpack.c.l.b16 %v1882
        %v1916 = vpack.c.b16 %v1903, %v1902
        %v1917 = vpack.c.b16 %v1905, %v1904
        %v1918 = vpack.c.b16 %v1907, %v1906
        %v1919 = vpack.c.b16 %v1909, %v1908
        %v1920 = vpack.c.b16 %v1911, %v1910
        %v1921 = vpack.c.b16 %v1913, %v1912
        %v1922 = vpack.c.b16 %v1915, %v1914
        %vm1930 = vcmask 916480
        %v1932 = vsel %vm1930, %v1865, 0
        %v1935 = vsel %vm1930, %v1866, 0
        %v1938 = vsel %vm1930, %v1867, 0
        %v1941 = vsel %vm1930, %v1868, 0
        %1943 = vmatprep.subr.bf16.mxu0 0
        %1944 = vmatpush1.bf16.msra.mxu0 0
        %1945 = vmatprep.subr.bf16.mxu0 0
        %1946 = vmatpush1.bf16.msra.mxu0 %v1922
        %1947 = vmatprep.subr.bf16.mxu0 0
        %1948 = vmatpush1.bf16.msra.mxu0 %v1921
        %1949 = vmatprep.subr.bf16.mxu0 0
        %1950 = vmatpush1.bf16.msra.mxu0 %v1920
        %1951 = vmatprep.subr.bf16.mxu0 0
        %1952 = vmatpush1.bf16.msra.mxu0 %v1919
        %1953 = vmatprep.subr.bf16.mxu0 0
        %1954 = vmatpush1.bf16.msra.mxu0 %v1918
        %1955 = vmatprep.subr.bf16.mxu0 0
        %1956 = vmatpush1.bf16.msra.mxu0 %v1917
        %1957 = vmatprep.subr.bf16.mxu0 0
        %1958 = vmatpush1.bf16.msra.mxu0 %v1916
        %1959 = vmatprep.subr.bf16.mxu0 0
        %1960 = vmatpush2.bf16.msra.mxu0 0
        %1961 = vmatprep.subr.bf16.mxu0 0
        %1962 = vmatpush2.bf16.msra.mxu0 0
        %1963 = vmatprep.subr.bf16.mxu0 0
        %1964 = vmatpush2.bf16.msra.mxu0 0
        %1965 = vmatprep.subr.bf16.mxu0 0
        %1966 = vmatpush2.bf16.msra.mxu0 0
        %1967 = vmatprep.subr.bf16.mxu0 0
        %1968 = vmatpush2.bf16.msra.mxu0 0
        %1969 = vmatprep.subr.bf16.mxu0 0
        %1970 = vmatpush2.bf16.msra.mxu0 0
        %1971 = vmatprep.subr.bf16.mxu0 0
        %1972 = vmatpush2.bf16.msra.mxu0 0
        %1973 = vmatprep.subr.bf16.mxu0 0
        %1974 = vmatpush2.bf16.msra.mxu0 0
        %1975 = vmatprep.mubr.bf16.mxu0 0
        %1976 = vmatmul.mubr.bf16.gmra.mxu0 %v1932
        %v1977 = vpop.f32.mrf.mxu0
        %v1978 = vadd.f32 %v1887, %v1977
        %v1979 = vpop.f32.mrf.mxu0
        %v1980 = vpop.f32.mrf.mxu0
        %v1981 = vadd.f32 %v1887, %v1980
        %v1982 = vpop.f32.mrf.mxu0
        %1983 = vmatprep.mubr.bf16.mxu0 0
        %1984 = vmatmul.mubr.bf16.gmra.mxu0 %v1935
        %v1985 = vpop.f32.mrf.mxu0
        %v1986 = vadd.f32 %v1887, %v1985
        %v1987 = vpop.f32.mrf.mxu0
        %v1988 = vpop.f32.mrf.mxu0
        %v1989 = vadd.f32 %v1887, %v1988
        %v1990 = vpop.f32.mrf.mxu0
        %1991 = vmatprep.mubr.bf16.mxu0 0
        %1992 = vmatmul.mubr.bf16.gmra.mxu0 %v1938
        %v1993 = vpop.f32.mrf.mxu0
        %v1994 = vadd.f32 %v1887, %v1993
        %v1995 = vpop.f32.mrf.mxu0
        %v1996 = vpop.f32.mrf.mxu0
        %v1997 = vadd.f32 %v1887, %v1996
        %v1998 = vpop.f32.mrf.mxu0
        %1999 = vmatprep.mubr.bf16.mxu0 0
        %2000 = vmatmul.mubr.bf16.gmra.mxu0 %v1941
        %v2001 = vpop.f32.mrf.mxu0
        %v2002 = vadd.f32 %v1887, %v2001
        %v2003 = vpop.f32.mrf.mxu0
        %v2004 = vpop.f32.mrf.mxu0
        %v2005 = vadd.f32 %v1887, %v2004
        %v2006 = vpop.f32.mrf.mxu0
        %2007 = vdwg.mxu0
        %2008 = vst [vmem:[%s421] sm:$0xff] %v1978
        %2009 = vst [vmem:[%s421 + $0x8] sm:$0xff] %v1981
        %2010 = vst [vmem:[%s421 + $0x10] sm:$0xff] %v1986
        %2011 = vst [vmem:[%s421 + $0x18] sm:$0xff] %v1989
        %2012 = vst [vmem:[%s421 + $0x20] sm:$0xff] %v1994
        %2013 = vst [vmem:[%s421 + $0x28] sm:$0xff] %v1997
        %2014 = vst [vmem:[%s421 + $0x30] sm:$0xff] %v2002
        %2015 = vst [vmem:[%s421 + $0x38] sm:$0xff] %v2005
        %s2016 = scalar_lea.vmem %s407, 1
        %v2017 = vld [vmem:[%s2016] sm:$0x1]
        %s2018 = scalar_lea.vmem %s412, 1
        %v2019 = vld [vmem:[%s2018] sm:$0x1]
        %v2021 = vcombine.low %v2019, %v2019
        %v2023 = vunpack.c.l.s4 1966171168
        %v2024 = vunpack.c.0.s8 %v2023
        %v2025 = vlaneseq
        %v2026 = vshrl.u32 %v2025, 7
        %v2027 = vsub.s32 %v2024, %v2026
        %v2028 = vrot.slane %v2021, %v2027
        %v2030 = vunpack.c.l.s4 1966171168
        %v2031 = vunpack.c.0.s8 %v2030
        %v2032 = vlaneseq
        %v2033 = vshrl.u32 %v2032, 7
        %v2034 = vsub.s32 %v2031, %v2033
        %v2035 = vrot.slane %v2028, %v2034
        %v2038 = vsel %vm553, %v2019, %v2035
        %s2039 = scalar_lea.vmem %s348, 336 [#allocation4]
        %v2040 = vld [vmem:[%s2039] sm:$0xf]
        %v2041 = vld [vmem:[%s2039 + $0x4] sm:$0xf]
        %v2042 = vld [vmem:[%s2039 + $0x8] sm:$0xf]
        %v2043 = vld [vmem:[%s2039 + $0xc] sm:$0xf]
        %s2044 = scalar_lea.vmem %s357, 16 [#allocation6]
        %v2045 = vld [vmem:[%s2044] sm:$0x1]
        %v2046 = vlaneseq
        %v2047 = vshrl.u32 %v2046, 7
        %v2048 = vsub.s32 0, %v2047
        %v2049 = vrot.slane %v2045, %v2048
        %v2054 = vunpack.c.l.b16 %v2040
        %v2055 = vunpack.c.l.b16 %v2041
        %v2056 = vunpack.c.l.b16 %v2042
        %v2057 = vunpack.c.l.b16 %v2043
        %v2058 = vpack.c.b16 %v2055, %v2054
        %v2059 = vpack.c.b16 %v2057, %v2056
        %v2063 = vsel %vm447, %v2017, 0
        %2065 = vmatprep.subr.bf16.mxu0 0
        %2066 = vmatpush1.bf16.msra.mxu0 0
        %2067 = vmatprep.subr.bf16.mxu0 0
        %2068 = vmatpush1.bf16.msra.mxu0 0
        %2069 = vmatprep.subr.bf16.mxu0 0
        %2070 = vmatpush1.bf16.msra.mxu0 0
        %2071 = vmatprep.subr.bf16.mxu0 0
        %2072 = vmatpush1.bf16.msra.mxu0 0
        %2073 = vmatprep.subr.bf16.mxu0 0
        %2074 = vmatpush1.bf16.msra.mxu0 0
        %2075 = vmatprep.subr.bf16.mxu0 0
        %2076 = vmatpush1.bf16.msra.mxu0 0
        %2077 = vmatprep.subr.bf16.mxu0 0
        %2078 = vmatpush1.bf16.msra.mxu0 %v2059
        %2079 = vmatprep.subr.bf16.mxu0 0
        %2080 = vmatpush1.bf16.msra.mxu0 %v2058
        %2081 = vmatprep.subr.bf16.mxu0 0
        %2082 = vmatpush2.bf16.msra.mxu0 0
        %2083 = vmatprep.subr.bf16.mxu0 0
        %2084 = vmatpush2.bf16.msra.mxu0 0
        %2085 = vmatprep.subr.bf16.mxu0 0
        %2086 = vmatpush2.bf16.msra.mxu0 0
        %2087 = vmatprep.subr.bf16.mxu0 0
        %2088 = vmatpush2.bf16.msra.mxu0 0
        %2089 = vmatprep.subr.bf16.mxu0 0
        %2090 = vmatpush2.bf16.msra.mxu0 0
        %2091 = vmatprep.subr.bf16.mxu0 0
        %2092 = vmatpush2.bf16.msra.mxu0 0
        %2093 = vmatprep.subr.bf16.mxu0 0
        %2094 = vmatpush2.bf16.msra.mxu0 0
        %2095 = vmatprep.subr.bf16.mxu0 0
        %2096 = vmatpush2.bf16.msra.mxu0 0
        %2097 = vmatprep.mubr.bf16.mxu0 0
        %2098 = vmatmul.mubr.bf16.gmra.mxu0 %v2063
        %v2099 = vpop.f32.mrf.mxu0
        %v2100 = vadd.f32 %v2049, %v2099
        %v2101 = vpop.f32.mrf.mxu0
        %v2102 = vpop.f32.mrf.mxu0
        %v2103 = vpop.f32.mrf.mxu0
        %2104 = vdwg.mxu0
        %v2105 = vmax.f32 %v2100, 0.0
        %v2106 = vpack.c.bf16 %v2105, %v2105
        %v2107 = vld [vmem:[%s2039 + $0x10] sm:$0xf]
        %v2108 = vld [vmem:[%s2039 + $0x14] sm:$0xf]
        %v2109 = vld [vmem:[%s2039 + $0x18] sm:$0xf]
        %v2110 = vld [vmem:[%s2039 + $0x1c] sm:$0xf]
        %v2115 = vunpack.c.l.b16 %v2107
        %v2116 = vunpack.c.l.b16 %v2108
        %v2117 = vunpack.c.l.b16 %v2109
        %v2118 = vunpack.c.l.b16 %v2110
        %v2119 = vpack.c.b16 %v2116, %v2115
        %v2120 = vpack.c.b16 %v2118, %v2117
        %2123 = vmatprep.subr.bf16.mxu0 0
        %2124 = vmatpush1.bf16.msra.mxu0 0
        %2125 = vmatprep.subr.bf16.mxu0 0
        %2126 = vmatpush1.bf16.msra.mxu0 0
        %2127 = vmatprep.subr.bf16.mxu0 0
        %2128 = vmatpush1.bf16.msra.mxu0 0
        %2129 = vmatprep.subr.bf16.mxu0 0
        %2130 = vmatpush1.bf16.msra.mxu0 0
        %2131 = vmatprep.subr.bf16.mxu0 0
        %2132 = vmatpush1.bf16.msra.mxu0 0
        %2133 = vmatprep.subr.bf16.mxu0 0
        %2134 = vmatpush1.bf16.msra.mxu0 0
        %2135 = vmatprep.subr.bf16.mxu0 0
        %2136 = vmatpush1.bf16.msra.mxu0 %v2120
        %2137 = vmatprep.subr.bf16.mxu0 0
        %2138 = vmatpush1.bf16.msra.mxu0 %v2119
        %2139 = vmatprep.subr.bf16.mxu0 0
        %2140 = vmatpush2.bf16.msra.mxu0 0
        %2141 = vmatprep.subr.bf16.mxu0 0
        %2142 = vmatpush2.bf16.msra.mxu0 0
        %2143 = vmatprep.subr.bf16.mxu0 0
        %2144 = vmatpush2.bf16.msra.mxu0 0
        %2145 = vmatprep.subr.bf16.mxu0 0
        %2146 = vmatpush2.bf16.msra.mxu0 0
        %2147 = vmatprep.subr.bf16.mxu0 0
        %2148 = vmatpush2.bf16.msra.mxu0 0
        %2149 = vmatprep.subr.bf16.mxu0 0
        %2150 = vmatpush2.bf16.msra.mxu0 0
        %2151 = vmatprep.subr.bf16.mxu0 0
        %2152 = vmatpush2.bf16.msra.mxu0 0
        %2153 = vmatprep.subr.bf16.mxu0 0
        %2154 = vmatpush2.bf16.msra.mxu0 0
        %2155 = vmatprep.mubr.bf16.mxu0 0
        %2156 = vmatmul.mubr.bf16.gmra.mxu0 %v2063
        %v2157 = vpop.f32.mrf.mxu0
        %v2158 = vadd.f32 %v2049, %v2157
        %v2159 = vpop.f32.mrf.mxu0
        %v2160 = vpop.f32.mrf.mxu0
        %v2161 = vpop.f32.mrf.mxu0
        %2162 = vdwg.mxu0
        %v2163 = vmax.f32 %v2158, 0.0
        %v2164 = vpack.c.bf16 %v2163, %v2163
        %v2166 = vrot.slane %v2164, 7
        %v2169 = vsel %vm553, %v2106, %v2166
        %v2170 = vld [vmem:[%s2039 + $0x20] sm:$0xf]
        %v2171 = vld [vmem:[%s2039 + $0x24] sm:$0xf]
        %v2172 = vld [vmem:[%s2039 + $0x28] sm:$0xf]
        %v2173 = vld [vmem:[%s2039 + $0x2c] sm:$0xf]
        %v2174 = vld [vmem:[%s2039 + $0x30] sm:$0xf]
        %v2175 = vld [vmem:[%s2039 + $0x34] sm:$0xf]
        %v2176 = vld [vmem:[%s2039 + $0x38] sm:$0xf]
        %v2177 = vld [vmem:[%s2039 + $0x3c] sm:$0xf]
        %v2178 = vld [vmem:[%s2044 + $0x1] sm:$0x1]
        %v2179 = vlaneseq
        %v2180 = vshrl.u32 %v2179, 7
        %v2181 = vsub.s32 0, %v2180
        %v2182 = vrot.slane %v2178, %v2181
        %v2191 = vunpack.c.l.b16 %v2170
        %v2192 = vunpack.c.l.b16 %v2171
        %v2193 = vunpack.c.l.b16 %v2172
        %v2194 = vunpack.c.l.b16 %v2173
        %v2195 = vunpack.c.l.b16 %v2174
        %v2196 = vunpack.c.l.b16 %v2175
        %v2197 = vunpack.c.l.b16 %v2176
        %v2198 = vunpack.c.l.b16 %v2177
        %v2199 = vpack.c.b16 %v2192, %v2191
        %v2200 = vpack.c.b16 %v2194, %v2193
        %v2201 = vpack.c.b16 %v2196, %v2195
        %v2202 = vpack.c.b16 %v2198, %v2197
        %v2207 = vsel %vm594, %v2169, 0
        %2209 = vmatprep.subr.bf16.mxu0 0
        %2210 = vmatpush1.bf16.msra.mxu0 0
        %2211 = vmatprep.subr.bf16.mxu0 0
        %2212 = vmatpush1.bf16.msra.mxu0 0
        %2213 = vmatprep.subr.bf16.mxu0 0
        %2214 = vmatpush1.bf16.msra.mxu0 0
        %2215 = vmatprep.subr.bf16.mxu0 0
        %2216 = vmatpush1.bf16.msra.mxu0 0
        %2217 = vmatprep.subr.bf16.mxu0 0
        %2218 = vmatpush1.bf16.msra.mxu0 %v2202
        %2219 = vmatprep.subr.bf16.mxu0 0
        %2220 = vmatpush1.bf16.msra.mxu0 %v2201
        %2221 = vmatprep.subr.bf16.mxu0 0
        %2222 = vmatpush1.bf16.msra.mxu0 %v2200
        %2223 = vmatprep.subr.bf16.mxu0 0
        %2224 = vmatpush1.bf16.msra.mxu0 %v2199
        %2225 = vmatprep.subr.bf16.mxu0 0
        %2226 = vmatpush2.bf16.msra.mxu0 0
        %2227 = vmatprep.subr.bf16.mxu0 0
        %2228 = vmatpush2.bf16.msra.mxu0 0
        %2229 = vmatprep.subr.bf16.mxu0 0
        %2230 = vmatpush2.bf16.msra.mxu0 0
        %2231 = vmatprep.subr.bf16.mxu0 0
        %2232 = vmatpush2.bf16.msra.mxu0 0
        %2233 = vmatprep.subr.bf16.mxu0 0
        %2234 = vmatpush2.bf16.msra.mxu0 0
        %2235 = vmatprep.subr.bf16.mxu0 0
        %2236 = vmatpush2.bf16.msra.mxu0 0
        %2237 = vmatprep.subr.bf16.mxu0 0
        %2238 = vmatpush2.bf16.msra.mxu0 0
        %2239 = vmatprep.subr.bf16.mxu0 0
        %2240 = vmatpush2.bf16.msra.mxu0 0
        %2241 = vmatprep.mubr.bf16.mxu0 0
        %2242 = vmatmul.mubr.bf16.gmra.mxu0 %v2207
        %v2243 = vpop.f32.mrf.mxu0
        %v2244 = vadd.f32 %v2182, %v2243
        %v2245 = vpop.f32.mrf.mxu0
        %v2246 = vpop.f32.mrf.mxu0
        %v2247 = vpop.f32.mrf.mxu0
        %2248 = vdwg.mxu0
        %v2249 = vmax.f32 %v2244, 0.0
        %v2250 = vpack.c.bf16 %v2249, %v2249
        %v2251 = vld [vmem:[%s2039 + $0x40] sm:$0xf]
        %v2252 = vld [vmem:[%s2039 + $0x44] sm:$0xf]
        %v2253 = vld [vmem:[%s2039 + $0x48] sm:$0xf]
        %v2254 = vld [vmem:[%s2039 + $0x4c] sm:$0xf]
        %v2255 = vld [vmem:[%s2039 + $0x50] sm:$0xf]
        %v2256 = vld [vmem:[%s2039 + $0x54] sm:$0xf]
        %v2257 = vld [vmem:[%s2039 + $0x58] sm:$0xf]
        %v2258 = vld [vmem:[%s2039 + $0x5c] sm:$0xf]
        %v2263 = vunpack.c.l.b16 %v2255
        %v2264 = vunpack.c.l.b16 %v2256
        %v2265 = vunpack.c.l.b16 %v2257
        %v2266 = vunpack.c.l.b16 %v2258
        %v2267 = vpack.c.b16 %v2264, %v2263
        %v2268 = vpack.c.b16 %v2266, %v2265
        %2271 = vmatprep.subr.bf16.mxu0 0
        %2272 = vmatpush1.bf16.msra.mxu0 0
        %2273 = vmatprep.subr.bf16.mxu0 0
        %2274 = vmatpush1.bf16.msra.mxu0 0
        %2275 = vmatprep.subr.bf16.mxu0 0
        %2276 = vmatpush1.bf16.msra.mxu0 0
        %2277 = vmatprep.subr.bf16.mxu0 0
        %2278 = vmatpush1.bf16.msra.mxu0 0
        %2279 = vmatprep.subr.bf16.mxu0 0
        %2280 = vmatpush1.bf16.msra.mxu0 0
        %2281 = vmatprep.subr.bf16.mxu0 0
        %2282 = vmatpush1.bf16.msra.mxu0 0
        %2283 = vmatprep.subr.bf16.mxu0 0
        %2284 = vmatpush1.bf16.msra.mxu0 %v2268
        %2285 = vmatprep.subr.bf16.mxu0 0
        %2286 = vmatpush1.bf16.msra.mxu0 %v2267
        %2287 = vmatprep.subr.bf16.mxu0 0
        %2288 = vmatpush2.bf16.msra.mxu0 0
        %2289 = vmatprep.subr.bf16.mxu0 0
        %2290 = vmatpush2.bf16.msra.mxu0 0
        %2291 = vmatprep.subr.bf16.mxu0 0
        %2292 = vmatpush2.bf16.msra.mxu0 0
        %2293 = vmatprep.subr.bf16.mxu0 0
        %2294 = vmatpush2.bf16.msra.mxu0 0
        %2295 = vmatprep.subr.bf16.mxu0 0
        %2296 = vmatpush2.bf16.msra.mxu0 0
        %2297 = vmatprep.subr.bf16.mxu0 0
        %2298 = vmatpush2.bf16.msra.mxu0 0
        %2299 = vmatprep.subr.bf16.mxu0 0
        %2300 = vmatpush2.bf16.msra.mxu0 0
        %2301 = vmatprep.subr.bf16.mxu0 0
        %2302 = vmatpush2.bf16.msra.mxu0 0
        %2303 = vmatprep.mubr.bf16.mxu0 0
        %2304 = vmatmul.mubr.bf16.gmra.mxu0 %v909
        %v2305 = vpop.f32.mrf.mxu0
        %v2306 = vadd.f32 0.0, %v2305
        %v2307 = vpop.f32.mrf.mxu0
        %v2308 = vpop.f32.mrf.mxu0
        %v2309 = vpop.f32.mrf.mxu0
        %2310 = vdwg.mxu0
        %v2315 = vunpack.c.l.b16 %v2251
        %v2316 = vunpack.c.l.b16 %v2252
        %v2317 = vunpack.c.l.b16 %v2253
        %v2318 = vunpack.c.l.b16 %v2254
        %v2319 = vpack.c.b16 %v2316, %v2315
        %v2320 = vpack.c.b16 %v2318, %v2317
        %2323 = vmatprep.subr.bf16.mxu0 0
        %2324 = vmatpush1.bf16.msra.mxu0 0
        %2325 = vmatprep.subr.bf16.mxu0 0
        %2326 = vmatpush1.bf16.msra.mxu0 0
        %2327 = vmatprep.subr.bf16.mxu0 0
        %2328 = vmatpush1.bf16.msra.mxu0 0
        %2329 = vmatprep.subr.bf16.mxu0 0
        %2330 = vmatpush1.bf16.msra.mxu0 0
        %2331 = vmatprep.subr.bf16.mxu0 0
        %2332 = vmatpush1.bf16.msra.mxu0 0
        %2333 = vmatprep.subr.bf16.mxu0 0
        %2334 = vmatpush1.bf16.msra.mxu0 0
        %2335 = vmatprep.subr.bf16.mxu0 0
        %2336 = vmatpush1.bf16.msra.mxu0 %v2320
        %2337 = vmatprep.subr.bf16.mxu0 0
        %2338 = vmatpush1.bf16.msra.mxu0 %v2319
        %2339 = vmatprep.subr.bf16.mxu0 0
        %2340 = vmatpush2.bf16.msra.mxu0 0
        %2341 = vmatprep.subr.bf16.mxu0 0
        %2342 = vmatpush2.bf16.msra.mxu0 0
        %2343 = vmatprep.subr.bf16.mxu0 0
        %2344 = vmatpush2.bf16.msra.mxu0 0
        %2345 = vmatprep.subr.bf16.mxu0 0
        %2346 = vmatpush2.bf16.msra.mxu0 0
        %2347 = vmatprep.subr.bf16.mxu0 0
        %2348 = vmatpush2.bf16.msra.mxu0 0
        %2349 = vmatprep.subr.bf16.mxu0 0
        %2350 = vmatpush2.bf16.msra.mxu0 0
        %2351 = vmatprep.subr.bf16.mxu0 0
        %2352 = vmatpush2.bf16.msra.mxu0 0
        %2353 = vmatprep.subr.bf16.mxu0 0
        %2354 = vmatpush2.bf16.msra.mxu0 0
        %2355 = vmatprep.mubr.bf16.mxu0 0
        %2356 = vmatmul.mubr.bf16.gmra.mxu0 %v964
        %v2357 = vpop.f32.mrf.mxu0
        %v2358 = vadd.f32 %v2306, %v2357
        %v2359 = vpop.f32.mrf.mxu0
        %v2360 = vpop.f32.mrf.mxu0
        %v2361 = vpop.f32.mrf.mxu0
        %2362 = vdwg.mxu0
        %v2363 = vld [vmem:[%s2039 + $0x60] sm:$0xf]
        %v2364 = vld [vmem:[%s2039 + $0x64] sm:$0xf]
        %v2365 = vld [vmem:[%s2039 + $0x68] sm:$0xf]
        %v2366 = vld [vmem:[%s2039 + $0x6c] sm:$0xf]
        %v2371 = vunpack.c.l.b16 %v2363
        %v2372 = vunpack.c.l.b16 %v2364
        %v2373 = vunpack.c.l.b16 %v2365
        %v2374 = vunpack.c.l.b16 %v2366
        %v2375 = vpack.c.b16 %v2372, %v2371
        %v2376 = vpack.c.b16 %v2374, %v2373
        %v2380 = vsel %vm447, %v2250, 0
        %2382 = vmatprep.subr.bf16.mxu0 0
        %2383 = vmatpush1.bf16.msra.mxu0 0
        %2384 = vmatprep.subr.bf16.mxu0 0
        %2385 = vmatpush1.bf16.msra.mxu0 0
        %2386 = vmatprep.subr.bf16.mxu0 0
        %2387 = vmatpush1.bf16.msra.mxu0 0
        %2388 = vmatprep.subr.bf16.mxu0 0
        %2389 = vmatpush1.bf16.msra.mxu0 0
        %2390 = vmatprep.subr.bf16.mxu0 0
        %2391 = vmatpush1.bf16.msra.mxu0 0
        %2392 = vmatprep.subr.bf16.mxu0 0
        %2393 = vmatpush1.bf16.msra.mxu0 0
        %2394 = vmatprep.subr.bf16.mxu0 0
        %2395 = vmatpush1.bf16.msra.mxu0 %v2376
        %2396 = vmatprep.subr.bf16.mxu0 0
        %2397 = vmatpush1.bf16.msra.mxu0 %v2375
        %2398 = vmatprep.subr.bf16.mxu0 0
        %2399 = vmatpush2.bf16.msra.mxu0 0
        %2400 = vmatprep.subr.bf16.mxu0 0
        %2401 = vmatpush2.bf16.msra.mxu0 0
        %2402 = vmatprep.subr.bf16.mxu0 0
        %2403 = vmatpush2.bf16.msra.mxu0 0
        %2404 = vmatprep.subr.bf16.mxu0 0
        %2405 = vmatpush2.bf16.msra.mxu0 0
        %2406 = vmatprep.subr.bf16.mxu0 0
        %2407 = vmatpush2.bf16.msra.mxu0 0
        %2408 = vmatprep.subr.bf16.mxu0 0
        %2409 = vmatpush2.bf16.msra.mxu0 0
        %2410 = vmatprep.subr.bf16.mxu0 0
        %2411 = vmatpush2.bf16.msra.mxu0 0
        %2412 = vmatprep.subr.bf16.mxu0 0
        %2413 = vmatpush2.bf16.msra.mxu0 0
        %2414 = vmatprep.mubr.bf16.mxu0 0
        %2415 = vmatmul.mubr.bf16.gmra.mxu0 %v2380
        %v2416 = vpop.f32.mrf.mxu0
        %v2417 = vadd.f32 0.0, %v2416
        %v2418 = vpop.f32.mrf.mxu0
        %v2419 = vpop.f32.mrf.mxu0
        %v2420 = vpop.f32.mrf.mxu0
        %2421 = vdwg.mxu0
        %v2422 = vadd.f32 %v2358, %v2417
        %v2423 = vld [vmem:[%s2039 + $0x70] sm:$0xf]
        %v2424 = vld [vmem:[%s2039 + $0x74] sm:$0xf]
        %v2425 = vld [vmem:[%s2039 + $0x78] sm:$0xf]
        %v2426 = vld [vmem:[%s2039 + $0x7c] sm:$0xf]
        %v2431 = vunpack.c.l.b16 %v2423
        %v2432 = vunpack.c.l.b16 %v2424
        %v2433 = vunpack.c.l.b16 %v2425
        %v2434 = vunpack.c.l.b16 %v2426
        %v2435 = vpack.c.b16 %v2432, %v2431
        %v2436 = vpack.c.b16 %v2434, %v2433
        %v2439 = vsel %vm447, %v2038, 0
        %2441 = vmatprep.subr.bf16.mxu0 0
        %2442 = vmatpush1.bf16.msra.mxu0 0
        %2443 = vmatprep.subr.bf16.mxu0 0
        %2444 = vmatpush1.bf16.msra.mxu0 0
        %2445 = vmatprep.subr.bf16.mxu0 0
        %2446 = vmatpush1.bf16.msra.mxu0 0
        %2447 = vmatprep.subr.bf16.mxu0 0
        %2448 = vmatpush1.bf16.msra.mxu0 0
        %2449 = vmatprep.subr.bf16.mxu0 0
        %2450 = vmatpush1.bf16.msra.mxu0 0
        %2451 = vmatprep.subr.bf16.mxu0 0
        %2452 = vmatpush1.bf16.msra.mxu0 0
        %2453 = vmatprep.subr.bf16.mxu0 0
        %2454 = vmatpush1.bf16.msra.mxu0 %v2436
        %2455 = vmatprep.subr.bf16.mxu0 0
        %2456 = vmatpush1.bf16.msra.mxu0 %v2435
        %2457 = vmatprep.subr.bf16.mxu0 0
        %2458 = vmatpush2.bf16.msra.mxu0 0
        %2459 = vmatprep.subr.bf16.mxu0 0
        %2460 = vmatpush2.bf16.msra.mxu0 0
        %2461 = vmatprep.subr.bf16.mxu0 0
        %2462 = vmatpush2.bf16.msra.mxu0 0
        %2463 = vmatprep.subr.bf16.mxu0 0
        %2464 = vmatpush2.bf16.msra.mxu0 0
        %2465 = vmatprep.subr.bf16.mxu0 0
        %2466 = vmatpush2.bf16.msra.mxu0 0
        %2467 = vmatprep.subr.bf16.mxu0 0
        %2468 = vmatpush2.bf16.msra.mxu0 0
        %2469 = vmatprep.subr.bf16.mxu0 0
        %2470 = vmatpush2.bf16.msra.mxu0 0
        %2471 = vmatprep.subr.bf16.mxu0 0
        %2472 = vmatpush2.bf16.msra.mxu0 0
        %2473 = vmatprep.mubr.bf16.mxu0 0
        %2474 = vmatmul.mubr.bf16.gmra.mxu0 %v2439
        %v2475 = vpop.f32.mrf.mxu0
        %v2476 = vadd.f32 0.0, %v2475
        %v2477 = vpop.f32.mrf.mxu0
        %v2478 = vpop.f32.mrf.mxu0
        %v2479 = vpop.f32.mrf.mxu0
        %2480 = vdwg.mxu0
        %v2481 = vadd.f32 %v2422, %v2476
        %v2482 = vld [vmem:[%s2044 + $0x2] sm:$0x1]
        %v2483 = vlaneseq
        %v2484 = vshrl.u32 %v2483, 7
        %v2485 = vsub.s32 0, %v2484
        %v2486 = vrot.slane %v2482, %v2485
        %v2487 = vadd.f32 %v2481, %v2486
        %v2488 = vmax.f32 %v2487, 0.0
        %v2489 = vpack.c.bf16 %v2488, %v2488
        %v2490 = vld [vmem:[%s2039 + $0x80] sm:$0xf]
        %v2491 = vld [vmem:[%s2039 + $0x84] sm:$0xf]
        %v2492 = vld [vmem:[%s2039 + $0x88] sm:$0xf]
        %v2493 = vld [vmem:[%s2039 + $0x8c] sm:$0xf]
        %v2494 = vld [vmem:[%s2039 + $0x90] sm:$0xf]
        %v2495 = vld [vmem:[%s2039 + $0x94] sm:$0xf]
        %v2496 = vld [vmem:[%s2039 + $0x98] sm:$0xf]
        %v2497 = vld [vmem:[%s2039 + $0x9c] sm:$0xf]
        %v2502 = vunpack.c.l.b16 %v2494
        %v2503 = vunpack.c.l.b16 %v2495
        %v2504 = vunpack.c.l.b16 %v2496
        %v2505 = vunpack.c.l.b16 %v2497
        %v2506 = vpack.c.b16 %v2503, %v2502
        %v2507 = vpack.c.b16 %v2505, %v2504
        %2510 = vmatprep.subr.bf16.mxu0 0
        %2511 = vmatpush1.bf16.msra.mxu0 0
        %2512 = vmatprep.subr.bf16.mxu0 0
        %2513 = vmatpush1.bf16.msra.mxu0 0
        %2514 = vmatprep.subr.bf16.mxu0 0
        %2515 = vmatpush1.bf16.msra.mxu0 0
        %2516 = vmatprep.subr.bf16.mxu0 0
        %2517 = vmatpush1.bf16.msra.mxu0 0
        %2518 = vmatprep.subr.bf16.mxu0 0
        %2519 = vmatpush1.bf16.msra.mxu0 0
        %2520 = vmatprep.subr.bf16.mxu0 0
        %2521 = vmatpush1.bf16.msra.mxu0 0
        %2522 = vmatprep.subr.bf16.mxu0 0
        %2523 = vmatpush1.bf16.msra.mxu0 %v2507
        %2524 = vmatprep.subr.bf16.mxu0 0
        %2525 = vmatpush1.bf16.msra.mxu0 %v2506
        %2526 = vmatprep.subr.bf16.mxu0 0
        %2527 = vmatpush2.bf16.msra.mxu0 0
        %2528 = vmatprep.subr.bf16.mxu0 0
        %2529 = vmatpush2.bf16.msra.mxu0 0
        %2530 = vmatprep.subr.bf16.mxu0 0
        %2531 = vmatpush2.bf16.msra.mxu0 0
        %2532 = vmatprep.subr.bf16.mxu0 0
        %2533 = vmatpush2.bf16.msra.mxu0 0
        %2534 = vmatprep.subr.bf16.mxu0 0
        %2535 = vmatpush2.bf16.msra.mxu0 0
        %2536 = vmatprep.subr.bf16.mxu0 0
        %2537 = vmatpush2.bf16.msra.mxu0 0
        %2538 = vmatprep.subr.bf16.mxu0 0
        %2539 = vmatpush2.bf16.msra.mxu0 0
        %2540 = vmatprep.subr.bf16.mxu0 0
        %2541 = vmatpush2.bf16.msra.mxu0 0
        %2542 = vmatprep.mubr.bf16.mxu0 0
        %2543 = vmatmul.mubr.bf16.gmra.mxu0 %v909
        %v2544 = vpop.f32.mrf.mxu0
        %v2545 = vadd.f32 0.0, %v2544
        %v2546 = vpop.f32.mrf.mxu0
        %v2547 = vpop.f32.mrf.mxu0
        %v2548 = vpop.f32.mrf.mxu0
        %2549 = vdwg.mxu0
        %v2554 = vunpack.c.l.b16 %v2490
        %v2555 = vunpack.c.l.b16 %v2491
        %v2556 = vunpack.c.l.b16 %v2492
        %v2557 = vunpack.c.l.b16 %v2493
        %v2558 = vpack.c.b16 %v2555, %v2554
        %v2559 = vpack.c.b16 %v2557, %v2556
        %2562 = vmatprep.subr.bf16.mxu0 0
        %2563 = vmatpush1.bf16.msra.mxu0 0
        %2564 = vmatprep.subr.bf16.mxu0 0
        %2565 = vmatpush1.bf16.msra.mxu0 0
        %2566 = vmatprep.subr.bf16.mxu0 0
        %2567 = vmatpush1.bf16.msra.mxu0 0
        %2568 = vmatprep.subr.bf16.mxu0 0
        %2569 = vmatpush1.bf16.msra.mxu0 0
        %2570 = vmatprep.subr.bf16.mxu0 0
        %2571 = vmatpush1.bf16.msra.mxu0 0
        %2572 = vmatprep.subr.bf16.mxu0 0
        %2573 = vmatpush1.bf16.msra.mxu0 0
        %2574 = vmatprep.subr.bf16.mxu0 0
        %2575 = vmatpush1.bf16.msra.mxu0 %v2559
        %2576 = vmatprep.subr.bf16.mxu0 0
        %2577 = vmatpush1.bf16.msra.mxu0 %v2558
        %2578 = vmatprep.subr.bf16.mxu0 0
        %2579 = vmatpush2.bf16.msra.mxu0 0
        %2580 = vmatprep.subr.bf16.mxu0 0
        %2581 = vmatpush2.bf16.msra.mxu0 0
        %2582 = vmatprep.subr.bf16.mxu0 0
        %2583 = vmatpush2.bf16.msra.mxu0 0
        %2584 = vmatprep.subr.bf16.mxu0 0
        %2585 = vmatpush2.bf16.msra.mxu0 0
        %2586 = vmatprep.subr.bf16.mxu0 0
        %2587 = vmatpush2.bf16.msra.mxu0 0
        %2588 = vmatprep.subr.bf16.mxu0 0
        %2589 = vmatpush2.bf16.msra.mxu0 0
        %2590 = vmatprep.subr.bf16.mxu0 0
        %2591 = vmatpush2.bf16.msra.mxu0 0
        %2592 = vmatprep.subr.bf16.mxu0 0
        %2593 = vmatpush2.bf16.msra.mxu0 0
        %2594 = vmatprep.mubr.bf16.mxu0 0
        %2595 = vmatmul.mubr.bf16.gmra.mxu0 %v964
        %v2596 = vpop.f32.mrf.mxu0
        %v2597 = vadd.f32 %v2545, %v2596
        %v2598 = vpop.f32.mrf.mxu0
        %v2599 = vpop.f32.mrf.mxu0
        %v2600 = vpop.f32.mrf.mxu0
        %2601 = vdwg.mxu0
        %v2602 = vld [vmem:[%s2039 + $0xa0] sm:$0xf]
        %v2603 = vld [vmem:[%s2039 + $0xa4] sm:$0xf]
        %v2604 = vld [vmem:[%s2039 + $0xa8] sm:$0xf]
        %v2605 = vld [vmem:[%s2039 + $0xac] sm:$0xf]
        %v2610 = vunpack.c.l.b16 %v2602
        %v2611 = vunpack.c.l.b16 %v2603
        %v2612 = vunpack.c.l.b16 %v2604
        %v2613 = vunpack.c.l.b16 %v2605
        %v2614 = vpack.c.b16 %v2611, %v2610
        %v2615 = vpack.c.b16 %v2613, %v2612
        %2618 = vmatprep.subr.bf16.mxu0 0
        %2619 = vmatpush1.bf16.msra.mxu0 0
        %2620 = vmatprep.subr.bf16.mxu0 0
        %2621 = vmatpush1.bf16.msra.mxu0 0
        %2622 = vmatprep.subr.bf16.mxu0 0
        %2623 = vmatpush1.bf16.msra.mxu0 0
        %2624 = vmatprep.subr.bf16.mxu0 0
        %2625 = vmatpush1.bf16.msra.mxu0 0
        %2626 = vmatprep.subr.bf16.mxu0 0
        %2627 = vmatpush1.bf16.msra.mxu0 0
        %2628 = vmatprep.subr.bf16.mxu0 0
        %2629 = vmatpush1.bf16.msra.mxu0 0
        %2630 = vmatprep.subr.bf16.mxu0 0
        %2631 = vmatpush1.bf16.msra.mxu0 %v2615
        %2632 = vmatprep.subr.bf16.mxu0 0
        %2633 = vmatpush1.bf16.msra.mxu0 %v2614
        %2634 = vmatprep.subr.bf16.mxu0 0
        %2635 = vmatpush2.bf16.msra.mxu0 0
        %2636 = vmatprep.subr.bf16.mxu0 0
        %2637 = vmatpush2.bf16.msra.mxu0 0
        %2638 = vmatprep.subr.bf16.mxu0 0
        %2639 = vmatpush2.bf16.msra.mxu0 0
        %2640 = vmatprep.subr.bf16.mxu0 0
        %2641 = vmatpush2.bf16.msra.mxu0 0
        %2642 = vmatprep.subr.bf16.mxu0 0
        %2643 = vmatpush2.bf16.msra.mxu0 0
        %2644 = vmatprep.subr.bf16.mxu0 0
        %2645 = vmatpush2.bf16.msra.mxu0 0
        %2646 = vmatprep.subr.bf16.mxu0 0
        %2647 = vmatpush2.bf16.msra.mxu0 0
        %2648 = vmatprep.subr.bf16.mxu0 0
        %2649 = vmatpush2.bf16.msra.mxu0 0
        %2650 = vmatprep.mubr.bf16.mxu0 0
        %2651 = vmatmul.mubr.bf16.gmra.mxu0 %v2380
        %v2652 = vpop.f32.mrf.mxu0
        %v2653 = vadd.f32 0.0, %v2652
        %v2654 = vpop.f32.mrf.mxu0
        %v2655 = vpop.f32.mrf.mxu0
        %v2656 = vpop.f32.mrf.mxu0
        %2657 = vdwg.mxu0
        %v2658 = vadd.f32 %v2597, %v2653
        %v2659 = vld [vmem:[%s2039 + $0xb0] sm:$0xf]
        %v2660 = vld [vmem:[%s2039 + $0xb4] sm:$0xf]
        %v2661 = vld [vmem:[%s2039 + $0xb8] sm:$0xf]
        %v2662 = vld [vmem:[%s2039 + $0xbc] sm:$0xf]
        %v2667 = vunpack.c.l.b16 %v2659
        %v2668 = vunpack.c.l.b16 %v2660
        %v2669 = vunpack.c.l.b16 %v2661
        %v2670 = vunpack.c.l.b16 %v2662
        %v2671 = vpack.c.b16 %v2668, %v2667
        %v2672 = vpack.c.b16 %v2670, %v2669
        %2675 = vmatprep.subr.bf16.mxu0 0
        %2676 = vmatpush1.bf16.msra.mxu0 0
        %2677 = vmatprep.subr.bf16.mxu0 0
        %2678 = vmatpush1.bf16.msra.mxu0 0
        %2679 = vmatprep.subr.bf16.mxu0 0
        %2680 = vmatpush1.bf16.msra.mxu0 0
        %2681 = vmatprep.subr.bf16.mxu0 0
        %2682 = vmatpush1.bf16.msra.mxu0 0
        %2683 = vmatprep.subr.bf16.mxu0 0
        %2684 = vmatpush1.bf16.msra.mxu0 0
        %2685 = vmatprep.subr.bf16.mxu0 0
        %2686 = vmatpush1.bf16.msra.mxu0 0
        %2687 = vmatprep.subr.bf16.mxu0 0
        %2688 = vmatpush1.bf16.msra.mxu0 %v2672
        %2689 = vmatprep.subr.bf16.mxu0 0
        %2690 = vmatpush1.bf16.msra.mxu0 %v2671
        %2691 = vmatprep.subr.bf16.mxu0 0
        %2692 = vmatpush2.bf16.msra.mxu0 0
        %2693 = vmatprep.subr.bf16.mxu0 0
        %2694 = vmatpush2.bf16.msra.mxu0 0
        %2695 = vmatprep.subr.bf16.mxu0 0
        %2696 = vmatpush2.bf16.msra.mxu0 0
        %2697 = vmatprep.subr.bf16.mxu0 0
        %2698 = vmatpush2.bf16.msra.mxu0 0
        %2699 = vmatprep.subr.bf16.mxu0 0
        %2700 = vmatpush2.bf16.msra.mxu0 0
        %2701 = vmatprep.subr.bf16.mxu0 0
        %2702 = vmatpush2.bf16.msra.mxu0 0
        %2703 = vmatprep.subr.bf16.mxu0 0
        %2704 = vmatpush2.bf16.msra.mxu0 0
        %2705 = vmatprep.subr.bf16.mxu0 0
        %2706 = vmatpush2.bf16.msra.mxu0 0
        %2707 = vmatprep.mubr.bf16.mxu0 0
        %2708 = vmatmul.mubr.bf16.gmra.mxu0 %v2439
        %v2709 = vpop.f32.mrf.mxu0
        %v2710 = vadd.f32 0.0, %v2709
        %v2711 = vpop.f32.mrf.mxu0
        %v2712 = vpop.f32.mrf.mxu0
        %v2713 = vpop.f32.mrf.mxu0
        %2714 = vdwg.mxu0
        %v2715 = vadd.f32 %v2658, %v2710
        %v2716 = vld [vmem:[%s2044 + $0x3] sm:$0x1]
        %v2717 = vlaneseq
        %v2718 = vshrl.u32 %v2717, 7
        %v2719 = vsub.s32 0, %v2718
        %v2720 = vrot.slane %v2716, %v2719
        %v2721 = vadd.f32 %v2715, %v2720
        %v2722 = vmax.f32 %v2721, 0.0
        %v2723 = vpack.c.bf16 %v2722, %v2722
        %v2725 = vrot.slane %v2723, 6
        %v2728 = vsel %vm1369, %v2489, %v2725
        %v2729 = vld [vmem:[%s2039 + $0xc0] sm:$0xf]
        %v2730 = vld [vmem:[%s2039 + $0xc4] sm:$0xf]
        %v2731 = vld [vmem:[%s2039 + $0xc8] sm:$0xf]
        %v2732 = vld [vmem:[%s2039 + $0xcc] sm:$0xf]
        %v2733 = vld [vmem:[%s2044 + $0x4] sm:$0x1]
        %v2734 = vlaneseq
        %v2735 = vshrl.u32 %v2734, 7
        %v2736 = vsub.s32 0, %v2735
        %v2737 = vrot.slane %v2733, %v2736
        %v2742 = vunpack.c.l.b16 %v2729
        %v2743 = vunpack.c.l.b16 %v2730
        %v2744 = vunpack.c.l.b16 %v2731
        %v2745 = vunpack.c.l.b16 %v2732
        %v2746 = vpack.c.b16 %v2743, %v2742
        %v2747 = vpack.c.b16 %v2745, %v2744
        %v2750 = vsel %vm447, %v2728, 0
        %2752 = vmatprep.subr.bf16.mxu0 0
        %2753 = vmatpush1.bf16.msra.mxu0 0
        %2754 = vmatprep.subr.bf16.mxu0 0
        %2755 = vmatpush1.bf16.msra.mxu0 0
        %2756 = vmatprep.subr.bf16.mxu0 0
        %2757 = vmatpush1.bf16.msra.mxu0 0
        %2758 = vmatprep.subr.bf16.mxu0 0
        %2759 = vmatpush1.bf16.msra.mxu0 0
        %2760 = vmatprep.subr.bf16.mxu0 0
        %2761 = vmatpush1.bf16.msra.mxu0 0
        %2762 = vmatprep.subr.bf16.mxu0 0
        %2763 = vmatpush1.bf16.msra.mxu0 0
        %2764 = vmatprep.subr.bf16.mxu0 0
        %2765 = vmatpush1.bf16.msra.mxu0 %v2747
        %2766 = vmatprep.subr.bf16.mxu0 0
        %2767 = vmatpush1.bf16.msra.mxu0 %v2746
        %2768 = vmatprep.subr.bf16.mxu0 0
        %2769 = vmatpush2.bf16.msra.mxu0 0
        %2770 = vmatprep.subr.bf16.mxu0 0
        %2771 = vmatpush2.bf16.msra.mxu0 0
        %2772 = vmatprep.subr.bf16.mxu0 0
        %2773 = vmatpush2.bf16.msra.mxu0 0
        %2774 = vmatprep.subr.bf16.mxu0 0
        %2775 = vmatpush2.bf16.msra.mxu0 0
        %2776 = vmatprep.subr.bf16.mxu0 0
        %2777 = vmatpush2.bf16.msra.mxu0 0
        %2778 = vmatprep.subr.bf16.mxu0 0
        %2779 = vmatpush2.bf16.msra.mxu0 0
        %2780 = vmatprep.subr.bf16.mxu0 0
        %2781 = vmatpush2.bf16.msra.mxu0 0
        %2782 = vmatprep.subr.bf16.mxu0 0
        %2783 = vmatpush2.bf16.msra.mxu0 0
        %2784 = vmatprep.mubr.bf16.mxu0 0
        %2785 = vmatmul.mubr.bf16.gmra.mxu0 %v2750
        %v2786 = vpop.f32.mrf.mxu0
        %v2787 = vadd.f32 %v2737, %v2786
        %v2788 = vpop.f32.mrf.mxu0
        %v2789 = vpop.f32.mrf.mxu0
        %v2790 = vpop.f32.mrf.mxu0
        %2791 = vdwg.mxu0
        %v2792 = vmax.f32 %v2787, 0.0
        %v2793 = vpack.c.bf16 %v2792, %v2792
        %v2794 = vld [vmem:[%s2039 + $0xd0] sm:$0xf]
        %v2795 = vld [vmem:[%s2039 + $0xd4] sm:$0xf]
        %v2796 = vld [vmem:[%s2039 + $0xd8] sm:$0xf]
        %v2797 = vld [vmem:[%s2039 + $0xdc] sm:$0xf]
        %v2802 = vunpack.c.l.b16 %v2794
        %v2803 = vunpack.c.l.b16 %v2795
        %v2804 = vunpack.c.l.b16 %v2796
        %v2805 = vunpack.c.l.b16 %v2797
        %v2806 = vpack.c.b16 %v2803, %v2802
        %v2807 = vpack.c.b16 %v2805, %v2804
        %2810 = vmatprep.subr.bf16.mxu0 0
        %2811 = vmatpush1.bf16.msra.mxu0 0
        %2812 = vmatprep.subr.bf16.mxu0 0
        %2813 = vmatpush1.bf16.msra.mxu0 0
        %2814 = vmatprep.subr.bf16.mxu0 0
        %2815 = vmatpush1.bf16.msra.mxu0 0
        %2816 = vmatprep.subr.bf16.mxu0 0
        %2817 = vmatpush1.bf16.msra.mxu0 0
        %2818 = vmatprep.subr.bf16.mxu0 0
        %2819 = vmatpush1.bf16.msra.mxu0 0
        %2820 = vmatprep.subr.bf16.mxu0 0
        %2821 = vmatpush1.bf16.msra.mxu0 0
        %2822 = vmatprep.subr.bf16.mxu0 0
        %2823 = vmatpush1.bf16.msra.mxu0 %v2807
        %2824 = vmatprep.subr.bf16.mxu0 0
        %2825 = vmatpush1.bf16.msra.mxu0 %v2806
        %2826 = vmatprep.subr.bf16.mxu0 0
        %2827 = vmatpush2.bf16.msra.mxu0 0
        %2828 = vmatprep.subr.bf16.mxu0 0
        %2829 = vmatpush2.bf16.msra.mxu0 0
        %2830 = vmatprep.subr.bf16.mxu0 0
        %2831 = vmatpush2.bf16.msra.mxu0 0
        %2832 = vmatprep.subr.bf16.mxu0 0
        %2833 = vmatpush2.bf16.msra.mxu0 0
        %2834 = vmatprep.subr.bf16.mxu0 0
        %2835 = vmatpush2.bf16.msra.mxu0 0
        %2836 = vmatprep.subr.bf16.mxu0 0
        %2837 = vmatpush2.bf16.msra.mxu0 0
        %2838 = vmatprep.subr.bf16.mxu0 0
        %2839 = vmatpush2.bf16.msra.mxu0 0
        %2840 = vmatprep.subr.bf16.mxu0 0
        %2841 = vmatpush2.bf16.msra.mxu0 0
        %2842 = vmatprep.mubr.bf16.mxu0 0
        %2843 = vmatmul.mubr.bf16.gmra.mxu0 %v2750
        %v2844 = vpop.f32.mrf.mxu0
        %v2845 = vadd.f32 %v2737, %v2844
        %v2846 = vpop.f32.mrf.mxu0
        %v2847 = vpop.f32.mrf.mxu0
        %v2848 = vpop.f32.mrf.mxu0
        %2849 = vdwg.mxu0
        %v2850 = vmax.f32 %v2845, 0.0
        %v2851 = vpack.c.bf16 %v2850, %v2850
        %v2853 = vrot.slane %v2851, 4
        %v2856 = vsel %vm1498, %v2793, %v2853
        %v2857 = vld [vmem:[%s2039 + $0xe0] sm:$0xf]
        %v2858 = vld [vmem:[%s2039 + $0xe4] sm:$0xf]
        %v2859 = vld [vmem:[%s2039 + $0xe8] sm:$0xf]
        %v2860 = vld [vmem:[%s2039 + $0xec] sm:$0xf]
        %v2861 = vld [vmem:[%s2044 + $0x5] sm:$0x1]
        %v2862 = vlaneseq
        %v2863 = vshrl.u32 %v2862, 7
        %v2864 = vsub.s32 0, %v2863
        %v2865 = vrot.slane %v2861, %v2864
        %v2870 = vunpack.c.l.b16 %v2857
        %v2871 = vunpack.c.l.b16 %v2858
        %v2872 = vunpack.c.l.b16 %v2859
        %v2873 = vunpack.c.l.b16 %v2860
        %v2874 = vpack.c.b16 %v2871, %v2870
        %v2875 = vpack.c.b16 %v2873, %v2872
        %v2878 = vsel %vm447, %v2856, 0
        %2880 = vmatprep.subr.bf16.mxu0 0
        %2881 = vmatpush1.bf16.msra.mxu0 0
        %2882 = vmatprep.subr.bf16.mxu0 0
        %2883 = vmatpush1.bf16.msra.mxu0 0
        %2884 = vmatprep.subr.bf16.mxu0 0
        %2885 = vmatpush1.bf16.msra.mxu0 0
        %2886 = vmatprep.subr.bf16.mxu0 0
        %2887 = vmatpush1.bf16.msra.mxu0 0
        %2888 = vmatprep.subr.bf16.mxu0 0
        %2889 = vmatpush1.bf16.msra.mxu0 0
        %2890 = vmatprep.subr.bf16.mxu0 0
        %2891 = vmatpush1.bf16.msra.mxu0 0
        %2892 = vmatprep.subr.bf16.mxu0 0
        %2893 = vmatpush1.bf16.msra.mxu0 %v2875
        %2894 = vmatprep.subr.bf16.mxu0 0
        %2895 = vmatpush1.bf16.msra.mxu0 %v2874
        %2896 = vmatprep.subr.bf16.mxu0 0
        %2897 = vmatpush2.bf16.msra.mxu0 0
        %2898 = vmatprep.subr.bf16.mxu0 0
        %2899 = vmatpush2.bf16.msra.mxu0 0
        %2900 = vmatprep.subr.bf16.mxu0 0
        %2901 = vmatpush2.bf16.msra.mxu0 0
        %2902 = vmatprep.subr.bf16.mxu0 0
        %2903 = vmatpush2.bf16.msra.mxu0 0
        %2904 = vmatprep.subr.bf16.mxu0 0
        %2905 = vmatpush2.bf16.msra.mxu0 0
        %2906 = vmatprep.subr.bf16.mxu0 0
        %2907 = vmatpush2.bf16.msra.mxu0 0
        %2908 = vmatprep.subr.bf16.mxu0 0
        %2909 = vmatpush2.bf16.msra.mxu0 0
        %2910 = vmatprep.subr.bf16.mxu0 0
        %2911 = vmatpush2.bf16.msra.mxu0 0
        %2912 = vmatprep.mubr.bf16.mxu0 0
        %2913 = vmatmul.mubr.bf16.gmra.mxu0 %v2878
        %v2914 = vpop.f32.mrf.mxu0
        %v2915 = vadd.f32 %v2865, %v2914
        %v2916 = vpop.f32.mrf.mxu0
        %v2917 = vpop.f32.mrf.mxu0
        %v2918 = vadd.f32 %v2865, %v2917
        %v2919 = vpop.f32.mrf.mxu0
        %2920 = vdwg.mxu0
        %v2921 = vmax.f32 %v2915, 0.0
        %v2922 = vmax.f32 %v2918, 0.0
        %v2923 = vpack.c.bf16 %v2922, %v2921
        %v2924 = vld [vmem:[%s2039 + $0xf0] sm:$0xf]
        %v2925 = vld [vmem:[%s2039 + $0xf4] sm:$0xf]
        %v2926 = vld [vmem:[%s2039 + $0xf8] sm:$0xf]
        %v2927 = vld [vmem:[%s2039 + $0xfc] sm:$0xf]
        %v2932 = vunpack.c.l.b16 %v2924
        %v2933 = vunpack.c.l.b16 %v2925
        %v2934 = vunpack.c.l.b16 %v2926
        %v2935 = vunpack.c.l.b16 %v2927
        %v2936 = vpack.c.b16 %v2933, %v2932
        %v2937 = vpack.c.b16 %v2935, %v2934
        %2940 = vmatprep.subr.bf16.mxu0 0
        %2941 = vmatpush1.bf16.msra.mxu0 0
        %2942 = vmatprep.subr.bf16.mxu0 0
        %2943 = vmatpush1.bf16.msra.mxu0 0
        %2944 = vmatprep.subr.bf16.mxu0 0
        %2945 = vmatpush1.bf16.msra.mxu0 0
        %2946 = vmatprep.subr.bf16.mxu0 0
        %2947 = vmatpush1.bf16.msra.mxu0 0
        %2948 = vmatprep.subr.bf16.mxu0 0
        %2949 = vmatpush1.bf16.msra.mxu0 0
        %2950 = vmatprep.subr.bf16.mxu0 0
        %2951 = vmatpush1.bf16.msra.mxu0 0
        %2952 = vmatprep.subr.bf16.mxu0 0
        %2953 = vmatpush1.bf16.msra.mxu0 %v2937
        %2954 = vmatprep.subr.bf16.mxu0 0
        %2955 = vmatpush1.bf16.msra.mxu0 %v2936
        %2956 = vmatprep.subr.bf16.mxu0 0
        %2957 = vmatpush2.bf16.msra.mxu0 0
        %2958 = vmatprep.subr.bf16.mxu0 0
        %2959 = vmatpush2.bf16.msra.mxu0 0
        %2960 = vmatprep.subr.bf16.mxu0 0
        %2961 = vmatpush2.bf16.msra.mxu0 0
        %2962 = vmatprep.subr.bf16.mxu0 0
        %2963 = vmatpush2.bf16.msra.mxu0 0
        %2964 = vmatprep.subr.bf16.mxu0 0
        %2965 = vmatpush2.bf16.msra.mxu0 0
        %2966 = vmatprep.subr.bf16.mxu0 0
        %2967 = vmatpush2.bf16.msra.mxu0 0
        %2968 = vmatprep.subr.bf16.mxu0 0
        %2969 = vmatpush2.bf16.msra.mxu0 0
        %2970 = vmatprep.subr.bf16.mxu0 0
        %2971 = vmatpush2.bf16.msra.mxu0 0
        %2972 = vmatprep.mubr.bf16.mxu0 0
        %2973 = vmatmul.mubr.bf16.gmra.mxu0 %v2878
        %v2974 = vpop.f32.mrf.mxu0
        %v2975 = vadd.f32 %v2865, %v2974
        %v2976 = vpop.f32.mrf.mxu0
        %v2977 = vpop.f32.mrf.mxu0
        %v2978 = vadd.f32 %v2865, %v2977
        %v2979 = vpop.f32.mrf.mxu0
        %2980 = vdwg.mxu0
        %v2981 = vmax.f32 %v2975, 0.0
        %v2982 = vmax.f32 %v2978, 0.0
        %v2983 = vpack.c.bf16 %v2982, %v2981
        %v2984 = vld [vmem:[%s2039 + $0x100] sm:$0xf]
        %v2985 = vld [vmem:[%s2039 + $0x104] sm:$0xf]
        %v2986 = vld [vmem:[%s2044 + $0x6] sm:$0x1]
        %v2987 = vlaneseq
        %v2988 = vshrl.u32 %v2987, 7
        %v2989 = vsub.s32 0, %v2988
        %v2990 = vrot.slane %v2986, %v2989
        %v2993 = vunpack.c.l.b16 %v2984
        %v2994 = vunpack.c.l.b16 %v2985
        %v2995 = vpack.c.b16 %v2994, %v2993
        %v2998 = vsel %vm1642, %v2923, 0
        %v3001 = vsel %vm1642, %v2983, 0
        %3003 = vmatprep.subr.bf16.mxu0 0
        %3004 = vmatpush1.bf16.msra.mxu0 0
        %3005 = vmatprep.subr.bf16.mxu0 0
        %3006 = vmatpush1.bf16.msra.mxu0 0
        %3007 = vmatprep.subr.bf16.mxu0 0
        %3008 = vmatpush1.bf16.msra.mxu0 0
        %3009 = vmatprep.subr.bf16.mxu0 0
        %3010 = vmatpush1.bf16.msra.mxu0 0
        %3011 = vmatprep.subr.bf16.mxu0 0
        %3012 = vmatpush1.bf16.msra.mxu0 0
        %3013 = vmatprep.subr.bf16.mxu0 0
        %3014 = vmatpush1.bf16.msra.mxu0 0
        %3015 = vmatprep.subr.bf16.mxu0 0
        %3016 = vmatpush1.bf16.msra.mxu0 0
        %3017 = vmatprep.subr.bf16.mxu0 0
        %3018 = vmatpush1.bf16.msra.mxu0 %v2995
        %3019 = vmatprep.subr.bf16.mxu0 0
        %3020 = vmatpush2.bf16.msra.mxu0 0
        %3021 = vmatprep.subr.bf16.mxu0 0
        %3022 = vmatpush2.bf16.msra.mxu0 0
        %3023 = vmatprep.subr.bf16.mxu0 0
        %3024 = vmatpush2.bf16.msra.mxu0 0
        %3025 = vmatprep.subr.bf16.mxu0 0
        %3026 = vmatpush2.bf16.msra.mxu0 0
        %3027 = vmatprep.subr.bf16.mxu0 0
        %3028 = vmatpush2.bf16.msra.mxu0 0
        %3029 = vmatprep.subr.bf16.mxu0 0
        %3030 = vmatpush2.bf16.msra.mxu0 0
        %3031 = vmatprep.subr.bf16.mxu0 0
        %3032 = vmatpush2.bf16.msra.mxu0 0
        %3033 = vmatprep.subr.bf16.mxu0 0
        %3034 = vmatpush2.bf16.msra.mxu0 0
        %3035 = vmatprep.mubr.bf16.mxu0 0
        %3036 = vmatmul.mubr.bf16.gmra.mxu0 %v2998
        %v3037 = vpop.f32.mrf.mxu0
        %v3038 = vadd.f32 %v2990, %v3037
        %v3039 = vpop.f32.mrf.mxu0
        %v3040 = vpop.f32.mrf.mxu0
        %v3041 = vadd.f32 %v2990, %v3040
        %v3042 = vpop.f32.mrf.mxu0
        %3043 = vmatprep.mubr.bf16.mxu0 0
        %3044 = vmatmul.mubr.bf16.gmra.mxu0 %v3001
        %v3045 = vpop.f32.mrf.mxu0
        %v3046 = vadd.f32 %v2990, %v3045
        %v3047 = vpop.f32.mrf.mxu0
        %v3048 = vpop.f32.mrf.mxu0
        %v3049 = vadd.f32 %v2990, %v3048
        %v3050 = vpop.f32.mrf.mxu0
        %3051 = vdwg.mxu0
        %v3052 = vmax.f32 %v3038, 0.0
        %v3053 = vmax.f32 %v3041, 0.0
        %v3054 = vmax.f32 %v3046, 0.0
        %v3055 = vmax.f32 %v3049, 0.0
        %v3056 = vpack.c.bf16 %v3053, %v3052
        %v3057 = vpack.c.bf16 %v3055, %v3054
        %v3058 = vld [vmem:[%s2039 + $0x108] sm:$0xf]
        %v3059 = vld [vmem:[%s2039 + $0x10c] sm:$0xf]
        %v3062 = vunpack.c.l.b16 %v3058
        %v3063 = vunpack.c.l.b16 %v3059
        %v3064 = vpack.c.b16 %v3063, %v3062
        %3066 = vmatprep.subr.bf16.mxu0 0
        %3067 = vmatpush1.bf16.msra.mxu0 0
        %3068 = vmatprep.subr.bf16.mxu0 0
        %3069 = vmatpush1.bf16.msra.mxu0 0
        %3070 = vmatprep.subr.bf16.mxu0 0
        %3071 = vmatpush1.bf16.msra.mxu0 0
        %3072 = vmatprep.subr.bf16.mxu0 0
        %3073 = vmatpush1.bf16.msra.mxu0 0
        %3074 = vmatprep.subr.bf16.mxu0 0
        %3075 = vmatpush1.bf16.msra.mxu0 0
        %3076 = vmatprep.subr.bf16.mxu0 0
        %3077 = vmatpush1.bf16.msra.mxu0 0
        %3078 = vmatprep.subr.bf16.mxu0 0
        %3079 = vmatpush1.bf16.msra.mxu0 0
        %3080 = vmatprep.subr.bf16.mxu0 0
        %3081 = vmatpush1.bf16.msra.mxu0 %v3064
        %3082 = vmatprep.subr.bf16.mxu0 0
        %3083 = vmatpush2.bf16.msra.mxu0 0
        %3084 = vmatprep.subr.bf16.mxu0 0
        %3085 = vmatpush2.bf16.msra.mxu0 0
        %3086 = vmatprep.subr.bf16.mxu0 0
        %3087 = vmatpush2.bf16.msra.mxu0 0
        %3088 = vmatprep.subr.bf16.mxu0 0
        %3089 = vmatpush2.bf16.msra.mxu0 0
        %3090 = vmatprep.subr.bf16.mxu0 0
        %3091 = vmatpush2.bf16.msra.mxu0 0
        %3092 = vmatprep.subr.bf16.mxu0 0
        %3093 = vmatpush2.bf16.msra.mxu0 0
        %3094 = vmatprep.subr.bf16.mxu0 0
        %3095 = vmatpush2.bf16.msra.mxu0 0
        %3096 = vmatprep.subr.bf16.mxu0 0
        %3097 = vmatpush2.bf16.msra.mxu0 0
        %3098 = vmatprep.mubr.bf16.mxu0 0
        %3099 = vmatmul.mubr.bf16.gmra.mxu0 %v2998
        %v3100 = vpop.f32.mrf.mxu0
        %v3101 = vadd.f32 %v2990, %v3100
        %v3102 = vpop.f32.mrf.mxu0
        %v3103 = vpop.f32.mrf.mxu0
        %v3104 = vadd.f32 %v2990, %v3103
        %v3105 = vpop.f32.mrf.mxu0
        %3106 = vmatprep.mubr.bf16.mxu0 0
        %3107 = vmatmul.mubr.bf16.gmra.mxu0 %v3001
        %v3108 = vpop.f32.mrf.mxu0
        %v3109 = vadd.f32 %v2990, %v3108
        %v3110 = vpop.f32.mrf.mxu0
        %v3111 = vpop.f32.mrf.mxu0
        %v3112 = vadd.f32 %v2990, %v3111
        %v3113 = vpop.f32.mrf.mxu0
        %3114 = vdwg.mxu0
        %v3115 = vmax.f32 %v3101, 0.0
        %v3116 = vmax.f32 %v3104, 0.0
        %v3117 = vmax.f32 %v3109, 0.0
        %v3118 = vmax.f32 %v3112, 0.0
        %v3119 = vpack.c.bf16 %v3116, %v3115
        %v3120 = vpack.c.bf16 %v3118, %v3117
        %v3121 = vld [vmem:[%s2039 + $0x110] sm:$0xf]
        %v3122 = vld [vmem:[%s2039 + $0x114] sm:$0xf]
        %v3123 = vld [vmem:[%s2044 + $0x7] sm:$0x1]
        %v3124 = vlaneseq
        %v3125 = vshrl.u32 %v3124, 7
        %v3126 = vsub.s32 0, %v3125
        %v3127 = vrot.slane %v3123, %v3126
        %v3130 = vunpack.c.l.b16 %v3121
        %v3131 = vunpack.c.l.b16 %v3122
        %v3132 = vpack.c.b16 %v3131, %v3130
        %v3135 = vsel %vm1642, %v3056, 0
        %v3138 = vsel %vm1642, %v3057, 0
        %v3141 = vsel %vm1642, %v3119, 0
        %v3144 = vsel %vm1642, %v3120, 0
        %3146 = vmatprep.subr.bf16.mxu0 0
        %3147 = vmatpush1.bf16.msra.mxu0 0
        %3148 = vmatprep.subr.bf16.mxu0 0
        %3149 = vmatpush1.bf16.msra.mxu0 0
        %3150 = vmatprep.subr.bf16.mxu0 0
        %3151 = vmatpush1.bf16.msra.mxu0 0
        %3152 = vmatprep.subr.bf16.mxu0 0
        %3153 = vmatpush1.bf16.msra.mxu0 0
        %3154 = vmatprep.subr.bf16.mxu0 0
        %3155 = vmatpush1.bf16.msra.mxu0 0
        %3156 = vmatprep.subr.bf16.mxu0 0
        %3157 = vmatpush1.bf16.msra.mxu0 0
        %3158 = vmatprep.subr.bf16.mxu0 0
        %3159 = vmatpush1.bf16.msra.mxu0 0
        %3160 = vmatprep.subr.bf16.mxu0 0
        %3161 = vmatpush1.bf16.msra.mxu0 %v3132
        %3162 = vmatprep.subr.bf16.mxu0 0
        %3163 = vmatpush2.bf16.msra.mxu0 0
        %3164 = vmatprep.subr.bf16.mxu0 0
        %3165 = vmatpush2.bf16.msra.mxu0 0
        %3166 = vmatprep.subr.bf16.mxu0 0
        %3167 = vmatpush2.bf16.msra.mxu0 0
        %3168 = vmatprep.subr.bf16.mxu0 0
        %3169 = vmatpush2.bf16.msra.mxu0 0
        %3170 = vmatprep.subr.bf16.mxu0 0
        %3171 = vmatpush2.bf16.msra.mxu0 0
        %3172 = vmatprep.subr.bf16.mxu0 0
        %3173 = vmatpush2.bf16.msra.mxu0 0
        %3174 = vmatprep.subr.bf16.mxu0 0
        %3175 = vmatpush2.bf16.msra.mxu0 0
        %3176 = vmatprep.subr.bf16.mxu0 0
        %3177 = vmatpush2.bf16.msra.mxu0 0
        %3178 = vmatprep.mubr.bf16.mxu0 0
        %3179 = vmatmul.mubr.bf16.gmra.mxu0 %v3135
        %v3180 = vpop.f32.mrf.mxu0
        %v3181 = vadd.f32 %v3127, %v3180
        %v3182 = vpop.f32.mrf.mxu0
        %v3183 = vpop.f32.mrf.mxu0
        %v3184 = vadd.f32 %v3127, %v3183
        %v3185 = vpop.f32.mrf.mxu0
        %3186 = vmatprep.mubr.bf16.mxu0 0
        %3187 = vmatmul.mubr.bf16.gmra.mxu0 %v3138
        %v3188 = vpop.f32.mrf.mxu0
        %v3189 = vadd.f32 %v3127, %v3188
        %v3190 = vpop.f32.mrf.mxu0
        %v3191 = vpop.f32.mrf.mxu0
        %v3192 = vadd.f32 %v3127, %v3191
        %v3193 = vpop.f32.mrf.mxu0
        %3194 = vmatprep.mubr.bf16.mxu0 0
        %3195 = vmatmul.mubr.bf16.gmra.mxu0 %v3141
        %v3196 = vpop.f32.mrf.mxu0
        %v3197 = vadd.f32 %v3127, %v3196
        %v3198 = vpop.f32.mrf.mxu0
        %v3199 = vpop.f32.mrf.mxu0
        %v3200 = vadd.f32 %v3127, %v3199
        %v3201 = vpop.f32.mrf.mxu0
        %3202 = vmatprep.mubr.bf16.mxu0 0
        %3203 = vmatmul.mubr.bf16.gmra.mxu0 %v3144
        %v3204 = vpop.f32.mrf.mxu0
        %v3205 = vadd.f32 %v3127, %v3204
        %v3206 = vpop.f32.mrf.mxu0
        %v3207 = vpop.f32.mrf.mxu0
        %v3208 = vadd.f32 %v3127, %v3207
        %v3209 = vpop.f32.mrf.mxu0
        %3210 = vdwg.mxu0
        %v3211 = vmax.f32 %v3181, 0.0
        %v3212 = vmax.f32 %v3184, 0.0
        %v3213 = vmax.f32 %v3189, 0.0
        %v3214 = vmax.f32 %v3192, 0.0
        %v3215 = vmax.f32 %v3197, 0.0
        %v3216 = vmax.f32 %v3200, 0.0
        %v3217 = vmax.f32 %v3205, 0.0
        %v3218 = vmax.f32 %v3208, 0.0
        %v3219 = vpack.c.bf16 %v3212, %v3211
        %v3220 = vpack.c.bf16 %v3214, %v3213
        %v3221 = vpack.c.bf16 %v3216, %v3215
        %v3222 = vpack.c.bf16 %v3218, %v3217
        %v3223 = vld [vmem:[%s2039 + $0x118] sm:$0xf]
        %v3224 = vld [vmem:[%s2039 + $0x11c] sm:$0xf]
        %v3225 = vld [vmem:[%s2039 + $0x120] sm:$0xf]
        %v3226 = vld [vmem:[%s2039 + $0x124] sm:$0xf]
        %v3227 = vld [vmem:[%s2039 + $0x128] sm:$0xf]
        %v3228 = vld [vmem:[%s2039 + $0x12c] sm:$0xf]
        %v3229 = vld [vmem:[%s2039 + $0x130] sm:$0xf]
        %v3230 = vld [vmem:[%s2039 + $0x134] sm:$0xf]
        %v3231 = vld [vmem:[%s2039 + $0x138] sm:$0xf]
        %v3232 = vld [vmem:[%s2039 + $0x13c] sm:$0xf]
        %v3233 = vld [vmem:[%s2039 + $0x140] sm:$0xf]
        %v3234 = vld [vmem:[%s2039 + $0x144] sm:$0xf]
        %v3235 = vld [vmem:[%s2039 + $0x148] sm:$0xf]
        %v3236 = vld [vmem:[%s2039 + $0x14c] sm:$0xf]
        %v3237 = vld [vmem:[%s2044 + $0x8] sm:$0x1]
        %v3238 = vlaneseq
        %v3239 = vshrl.u32 %v3238, 7
        %v3240 = vsub.s32 0, %v3239
        %v3241 = vrot.slane %v3237, %v3240
        %v3256 = vunpack.c.l.b16 %v3223
        %v3257 = vunpack.c.l.b16 %v3224
        %v3258 = vunpack.c.l.b16 %v3225
        %v3259 = vunpack.c.l.b16 %v3226
        %v3260 = vunpack.c.l.b16 %v3227
        %v3261 = vunpack.c.l.b16 %v3228
        %v3262 = vunpack.c.l.b16 %v3229
        %v3263 = vunpack.c.l.b16 %v3230
        %v3264 = vunpack.c.l.b16 %v3231
        %v3265 = vunpack.c.l.b16 %v3232
        %v3266 = vunpack.c.l.b16 %v3233
        %v3267 = vunpack.c.l.b16 %v3234
        %v3268 = vunpack.c.l.b16 %v3235
        %v3269 = vunpack.c.l.b16 %v3236
        %v3270 = vpack.c.b16 %v3257, %v3256
        %v3271 = vpack.c.b16 %v3259, %v3258
        %v3272 = vpack.c.b16 %v3261, %v3260
        %v3273 = vpack.c.b16 %v3263, %v3262
        %v3274 = vpack.c.b16 %v3265, %v3264
        %v3275 = vpack.c.b16 %v3267, %v3266
        %v3276 = vpack.c.b16 %v3269, %v3268
        %v3285 = vsel %vm1930, %v3219, 0
        %v3288 = vsel %vm1930, %v3220, 0
        %v3291 = vsel %vm1930, %v3221, 0
        %v3294 = vsel %vm1930, %v3222, 0
        %3296 = vmatprep.subr.bf16.mxu0 0
        %3297 = vmatpush1.bf16.msra.mxu0 0
        %3298 = vmatprep.subr.bf16.mxu0 0
        %3299 = vmatpush1.bf16.msra.mxu0 %v3276
        %3300 = vmatprep.subr.bf16.mxu0 0
        %3301 = vmatpush1.bf16.msra.mxu0 %v3275
        %3302 = vmatprep.subr.bf16.mxu0 0
        %3303 = vmatpush1.bf16.msra.mxu0 %v3274
        %3304 = vmatprep.subr.bf16.mxu0 0
        %3305 = vmatpush1.bf16.msra.mxu0 %v3273
        %3306 = vmatprep.subr.bf16.mxu0 0
        %3307 = vmatpush1.bf16.msra.mxu0 %v3272
        %3308 = vmatprep.subr.bf16.mxu0 0
        %3309 = vmatpush1.bf16.msra.mxu0 %v3271
        %3310 = vmatprep.subr.bf16.mxu0 0
        %3311 = vmatpush1.bf16.msra.mxu0 %v3270
        %3312 = vmatprep.subr.bf16.mxu0 0
        %3313 = vmatpush2.bf16.msra.mxu0 0
        %3314 = vmatprep.subr.bf16.mxu0 0
        %3315 = vmatpush2.bf16.msra.mxu0 0
        %3316 = vmatprep.subr.bf16.mxu0 0
        %3317 = vmatpush2.bf16.msra.mxu0 0
        %3318 = vmatprep.subr.bf16.mxu0 0
        %3319 = vmatpush2.bf16.msra.mxu0 0
        %3320 = vmatprep.subr.bf16.mxu0 0
        %3321 = vmatpush2.bf16.msra.mxu0 0
        %3322 = vmatprep.subr.bf16.mxu0 0
        %3323 = vmatpush2.bf16.msra.mxu0 0
        %3324 = vmatprep.subr.bf16.mxu0 0
        %3325 = vmatpush2.bf16.msra.mxu0 0
        %3326 = vmatprep.subr.bf16.mxu0 0
        %3327 = vmatpush2.bf16.msra.mxu0 0
        %3328 = vmatprep.mubr.bf16.mxu0 0
        %3329 = vmatmul.mubr.bf16.gmra.mxu0 %v3285
        %v3330 = vpop.f32.mrf.mxu0
        %v3331 = vadd.f32 %v3241, %v3330
        %v3332 = vpop.f32.mrf.mxu0
        %v3333 = vpop.f32.mrf.mxu0
        %v3334 = vadd.f32 %v3241, %v3333
        %v3335 = vpop.f32.mrf.mxu0
        %3336 = vmatprep.mubr.bf16.mxu0 0
        %3337 = vmatmul.mubr.bf16.gmra.mxu0 %v3288
        %v3338 = vpop.f32.mrf.mxu0
        %v3339 = vadd.f32 %v3241, %v3338
        %v3340 = vpop.f32.mrf.mxu0
        %v3341 = vpop.f32.mrf.mxu0
        %v3342 = vadd.f32 %v3241, %v3341
        %v3343 = vpop.f32.mrf.mxu0
        %3344 = vmatprep.mubr.bf16.mxu0 0
        %3345 = vmatmul.mubr.bf16.gmra.mxu0 %v3291
        %v3346 = vpop.f32.mrf.mxu0
        %v3347 = vadd.f32 %v3241, %v3346
        %v3348 = vpop.f32.mrf.mxu0
        %v3349 = vpop.f32.mrf.mxu0
        %v3350 = vadd.f32 %v3241, %v3349
        %v3351 = vpop.f32.mrf.mxu0
        %3352 = vmatprep.mubr.bf16.mxu0 0
        %3353 = vmatmul.mubr.bf16.gmra.mxu0 %v3294
        %v3354 = vpop.f32.mrf.mxu0
        %v3355 = vadd.f32 %v3241, %v3354
        %v3356 = vpop.f32.mrf.mxu0
        %v3357 = vpop.f32.mrf.mxu0
        %v3358 = vadd.f32 %v3241, %v3357
        %v3359 = vpop.f32.mrf.mxu0
        %3360 = vdwg.mxu0
        %s3361 = scalar_lea.vmem %s421, 64
        %3362 = vst [vmem:[%s3361] sm:$0xff] %v3331
        %3363 = vst [vmem:[%s3361 + $0x8] sm:$0xff] %v3334
        %3364 = vst [vmem:[%s3361 + $0x10] sm:$0xff] %v3339
        %3365 = vst [vmem:[%s3361 + $0x18] sm:$0xff] %v3342
        %3366 = vst [vmem:[%s3361 + $0x20] sm:$0xff] %v3347
        %3367 = vst [vmem:[%s3361 + $0x28] sm:$0xff] %v3350
        %3368 = vst [vmem:[%s3361 + $0x30] sm:$0xff] %v3355
        %3369 = vst [vmem:[%s3361 + $0x38] sm:$0xff] %v3358
        %s3370 = smul.u32 2, %s23
        %p3371 = scmp.lt.s32.totalorder %s3370, 3
        %s3372 = scalar_select %p3371, %s3370, 3
        %s3373 = smul.addr %s3372, 8
        %s3374 = smul.addr %s3373, 8
        %s3375 = scalar_lea.vmem %s8, %s3374
        // Predicated region
        $region65: #{muse_generator_forward.1} parent=51 // pred_check
          %p3376 = pneg %p229
        $region66: #{muse_generator_forward.1} parent=51 // pred_check_branch
          %3378 = sbr.rel (%p3376) target = $region68
        $region67: #{muse_generator_forward.1} parent=51 // pred_region
          %s3379 = smul.u32 2, %s23
        $region68: #{muse_generator_forward.1} parent=51 // pred_fallthru
          _
      $region52: #{muse_generator_forward.1} parent=5 // pred_fallthru
        _
      %p3380 = scmp.le.s32.totalorder 2, %s18
      // Predicated region
      $region69: #{muse_generator_forward.1} parent=5 // pred_check
        %p3381 = pneg %p3380
      $region70: #{muse_generator_forward.1} parent=5 // pred_check_branch
        %3383 = sbr.rel (%p3381) target = $region72
      $region71: #{muse_generator_forward.1} parent=5 // pred_region
        %s3384 = ssub.s32 %s18, 2
        // Predicated region
        $region73: #{muse_generator_forward.1} parent=71 // pred_check
          %p3385 = pneg %p235
        $region74: #{muse_generator_forward.1} parent=71 // pred_check_branch
          %3387 = sbr.rel (%p3385) target = $region76
        $region75: #{muse_generator_forward.1} parent=71 // pred_region
          %s3388 = smul.u32 2, %s24
          %p3389 = scmp.lt.s32.totalorder %s3388, 3
          %s3390 = scalar_select %p3389, %s3388, 3
          %s3391 = smul.addr %s3390, 8
          %s3392 = smul.addr %s3391, 8
          %s3393 = scalar_lea.vmem %s8, %s3392
        $region76: #{muse_generator_forward.1} parent=71 // pred_fallthru
          _
      $region72: #{muse_generator_forward.1} parent=5 // pred_fallthru
        _
    $region6: #{muse_generator_forward.1} parent=1 // loop_footer
      %s22 = sadd.s32 1, %s18
    $region7: #{muse_generator_forward.1} parent=1 // loop_footer_branch
      %17 = sbr.rel target = $region3
    $region8: #{muse_generator_forward.1} parent=1 // loop_exit
      _
    %3394 = vsyncpa [#allocation3], 1
    %s3395 = scalar_lea.sflag [#allocation3], 1
    %3396 = vsyncpa %s3395, 1
    %3397 = vsyncpa [#allocation5], 1
    %s3398 = scalar_lea.sflag [#allocation5], 1
    %3399 = vsyncpa %s3398, 1

</llo_original>
